<compile_context>
chip_gen: v6e
topology: v6e:2x2x1
jax: 0.10.0
libtpu: 0.0.40
codegen_flags: <defaults>
</compile_context>

<pallas_src>
import functools

import jax
import jax.numpy as jnp
from jax import lax
from jax.experimental import pallas as pl
from jax.experimental.pallas import tpu as pltpu

_BN_EPS = 1e-5
_LANE = 128                      # lane-dense output-channel padding
_TM_TARGET = 512                 # rows/tile: safe for v7x 64MiB VMEM, good on v5e/v6e
_VMEM_LIMIT = 32 * 1024 * 1024   # raised scoped-VMEM limit (default is 16/32 MiB)
_VMEM = pltpu.MemorySpace.VMEM

# output phase parity (di or dj) -> the two kernel taps it uses, ordered to
# match the patch slab order (first tap = "earlier" input pixel).
_KTAPS = {0: (3, 1),   # even output row: x[j-1]*W[...,3,:], x[j]*W[...,1,:]
          1: (2, 0)}   # odd  output row: x[j]*W[...,2,:],   x[j+1]*W[...,0,:]


def _round_up(x, m):
    return -(-x // m) * m


# ---------------- Pallas kernels ----------------

def _linear_kernel(x_ref, w_ref, b_ref, o_ref):
    o_ref[...] = (jnp.dot(x_ref[...], w_ref[...],
                          preferred_element_type=jnp.float32) + b_ref[...])


def _gemm_stats_kernel(p_ref, w_ref, y_ref, s_ref):
    # bf16 x bf16 -> f32 GEMM on the MXU.
    y = jnp.dot(p_ref[...], w_ref[...], preferred_element_type=jnp.float32)
    y_ref[...] = y
    # Per-channel partial sums on the MXU (ones-row matmul) instead of a
    # VALU/XLU axis-0 reduction; row 0 of the (8, Cp) products is the sum.
    ones = jnp.ones((8, y.shape[0]), jnp.float32)
    s0 = jnp.dot(ones, y, preferred_element_type=jnp.float32)[0:1]
    s1 = jnp.dot(ones, y * y, preferred_element_type=jnp.float32)[0:1]
    s_ref[...] = jnp.concatenate([s0, s1], axis=0)


def _bn_relu_kernel(inv_count, y_ref, s_ref, g_ref, b_ref, o_ref):
    # Global (all-tile, all-phase) sums -> mean/var -> scale/shift, in f32.
    s = s_ref[...]
    mean = s[0:1, :] * inv_count
    var = jnp.maximum(s[1:2, :] * inv_count - mean * mean, 0.0)
    scale = g_ref[...] * lax.rsqrt(var + _BN_EPS)
    shift = b_ref[...] - mean * scale
    o_ref[...] = jnp.maximum(y_ref[...] * scale + shift, 0.0).astype(o_ref.dtype)


def _gemm_bias_tanh_kernel(p_ref, w_ref, b_ref, o_ref):
    y = jnp.dot(p_ref[...], w_ref[...], preferred_element_type=jnp.float32)
    o_ref[...] = jnp.tanh(y + b_ref[...])


# ---------------- pallas_call wrappers ----------------

def pallas_linear(x, w, b):
    n, m = x.shape[0], w.shape[1]
    return pl.pallas_call(
        _linear_kernel,
        out_shape=jax.ShapeDtypeStruct((n, m), jnp.float32),
        in_specs=[pl.BlockSpec(memory_space=_VMEM)] * 3,
        out_specs=pl.BlockSpec(memory_space=_VMEM),
    )(x.astype(jnp.bfloat16), w.astype(jnp.bfloat16),
      b.reshape(1, -1).astype(jnp.float32))


def pallas_gemm_stats(patches, wmat, tm):
    nph, mp, k = patches.shape
    cp = wmat.shape[2]
    n_m = mp // tm
    flops = 2 * nph * mp * k * cp + 2 * 2 * nph * n_m * 8 * tm * cp
    bytes_accessed = (patches.size * 2 + wmat.size * 2
                      + nph * mp * cp * 4 + nph * n_m * 2 * cp * 4)
    return pl.pallas_call(
        _gemm_stats_kernel,
        out_shape=(jax.ShapeDtypeStruct((nph, mp, cp), jnp.float32),
                   jax.ShapeDtypeStruct((nph, n_m, 2, cp), jnp.float32)),
        grid_spec=pltpu.PrefetchScalarGridSpec(
            num_scalar_prefetch=0,
            grid=(nph, n_m),
            in_specs=[
                pl.BlockSpec((None, tm, k), lambda p, m: (p, m, 0)),
                pl.BlockSpec((None, k, cp), lambda p, m: (p, 0, 0)),
            ],
            out_specs=(
                pl.BlockSpec((None, tm, cp), lambda p, m: (p, m, 0)),
                pl.BlockSpec((None, None, 2, cp), lambda p, m: (p, m, 0, 0)),
            )),
        compiler_params=pltpu.CompilerParams(
            dimension_semantics=("parallel", "parallel"),
            vmem_limit_bytes=_VMEM_LIMIT),
        cost_estimate=pl.CostEstimate(flops=flops, transcendentals=0,
                                      bytes_accessed=bytes_accessed),
    )(patches, wmat)


def pallas_bn_relu(y, ssum, gamma_p, beta_p, tm, count):
    nph, mp, cp = y.shape
    n_m = mp // tm
    kern = functools.partial(_bn_relu_kernel, 1.0 / float(count))
    return pl.pallas_call(
        kern,
        out_shape=jax.ShapeDtypeStruct((nph, mp, cp), jnp.bfloat16),
        grid_spec=pltpu.PrefetchScalarGridSpec(
            num_scalar_prefetch=0,
            grid=(nph, n_m),
            in_specs=[
                pl.BlockSpec((None, tm, cp), lambda p, m: (p, m, 0)),
                pl.BlockSpec((2, cp), lambda p, m: (0, 0)),
                pl.BlockSpec((1, cp), lambda p, m: (0, 0)),
                pl.BlockSpec((1, cp), lambda p, m: (0, 0)),
            ],
            out_specs=pl.BlockSpec((None, tm, cp), lambda p, m: (p, m, 0))),
        compiler_params=pltpu.CompilerParams(
            dimension_semantics=("parallel", "parallel"),
            vmem_limit_bytes=_VMEM_LIMIT),
        cost_estimate=pl.CostEstimate(
            flops=4 * nph * mp * cp, transcendentals=cp,
            bytes_accessed=nph * mp * cp * (4 + 2)),
    )(y, ssum, gamma_p, beta_p)


def pallas_gemm_bias_tanh(patches, wmat, bias_p, tm):
    nph, mp, k = patches.shape
    cp = wmat.shape[2]
    n_m = mp // tm
    return pl.pallas_call(
        _gemm_bias_tanh_kernel,
        out_shape=jax.ShapeDtypeStruct((nph, mp, cp), jnp.float32),
        grid_spec=pltpu.PrefetchScalarGridSpec(
            num_scalar_prefetch=0,
            grid=(nph, n_m),
            in_specs=[
                pl.BlockSpec((None, tm, k), lambda p, m: (p, m, 0)),
                pl.BlockSpec((None, k, cp), lambda p, m: (p, 0, 0)),
                pl.BlockSpec((1, cp), lambda p, m: (0, 0)),
            ],
            out_specs=pl.BlockSpec((None, tm, cp), lambda p, m: (p, m, 0))),
        compiler_params=pltpu.CompilerParams(
            dimension_semantics=("parallel", "parallel"),
            vmem_limit_bytes=_VMEM_LIMIT),
        cost_estimate=pl.CostEstimate(
            flops=2 * nph * mp * k * cp,
            transcendentals=nph * mp * cp,
            bytes_accessed=patches.size * 2 + wmat.size * 2 + nph * mp * cp * 4),
    )(patches, wmat, bias_p)


# -------- JAX glue: 4-phase im2col for ConvTranspose2d(k=4, s=2, p=1) --------

def _phase_patches(x):
    """NHWC x (N,H,W,Cin) -> bf16 patches (4, N*H*W, 4*Cin), phases ordered
    (di,dj) = (0,0),(0,1),(1,0),(1,1).  Each output phase only needs a 2x2
    input window, so K = 4*Cin (not 16*Cin)."""
    n, h, w, c = x.shape
    xp = jnp.pad(x, ((0, 0), (1, 1), (1, 1), (0, 0)))
    rows = {0: (xp[:, 0:h], xp[:, 1:h + 1]),        # x[j-1], x[j]
            1: (xp[:, 1:h + 1], xp[:, 2:h + 2])}    # x[j],   x[j+1]
    phases = []
    for di in (0, 1):
        for dj in (0, 1):
            slabs = []
            for r in rows[di]:
                if dj == 0:
                    slabs += [r[:, :, 0:w], r[:, :, 1:w + 1]]
                else:
                    slabs += [r[:, :, 1:w + 1], r[:, :, 2:w + 2]]
            ph = jnp.concatenate(slabs, axis=-1)     # (N, H, W, 4*Cin)
            phases.append(ph.reshape(n * h * w, 4 * c))
    return jnp.stack(phases, axis=0).astype(jnp.bfloat16)


def _phase_weight_matrix(w, cout_pad):
    """ConvTranspose2d weight (Cin, Cout, 4, 4) -> bf16 (4, 4*Cin, Cout_pad)
    per-phase GEMM matrices matching _phase_patches' K layout; Cout is padded
    to a lane-dense multiple of 128."""
    cout = w.shape[1]
    mats = []
    for di in (0, 1):
        for dj in (0, 1):
            rows = [w[:, :, kh, kw] for kh in _KTAPS[di] for kw in _KTAPS[dj]]
            mats.append(jnp.concatenate(rows, axis=0))        # (4*Cin, Cout)
    wm = jnp.stack(mats, axis=0)                              # (4, 4*Cin, Cout)
    wm = jnp.pad(wm, ((0, 0), (0, 0), (0, cout_pad - cout)))
    return wm.astype(jnp.bfloat16)


def _choose_tm(m_half):
    return m_half if m_half <= _TM_TARGET else _TM_TARGET


def _pad_rows(patches, tm):
    m = patches.shape[1]
    mp = _round_up(m, tm)
    if mp != m:
        patches = jnp.pad(patches, ((0, 0), (0, mp - m), (0, 0)))
    return patches


def _assemble_phases(yp, n, h, w, m_half, cout):
    """(4, Mp, Cp) phase-separated output -> NHWC (N, 2H, 2W, Cout)."""
    y = yp[:, :m_half, :cout].reshape(2, 2, n, h, w, cout)    # (di,dj,N,H,W,C)
    y = y.transpose(2, 3, 0, 4, 1, 5)                         # (N,H,di,W,dj,C)
    return y.reshape(n, 2 * h, 2 * w, cout)


# ---------------- Generator layers ----------------

def _convT_bn_relu(x, w, gamma, beta):
    # TODO(synk): build the 4-phase patches inside the GEMM kernel from a
    # halo-windowed NHWC block (memory_space=pl.ANY + manual DMA) instead of
    # materializing the 4x patch tensor in HBM.
    n, h, wd, _ = x.shape
    cout = w.shape[1]
    cp = _round_up(cout, _LANE)
    patches = _phase_patches(x)
    m_half = patches.shape[1]
    tm = _choose_tm(m_half)
    patches = _pad_rows(patches, tm)
    wmat = _phase_weight_matrix(w, cp)
    y, part = pallas_gemm_stats(patches, wmat, tm)
    ssum = jnp.sum(part, axis=(0, 1))          # tiny (2, Cp) cross-tile combine
    g = jnp.pad(gamma, (0, cp - cout)).reshape(1, cp).astype(jnp.float32)
    b = jnp.pad(beta, (0, cp - cout)).reshape(1, cp).astype(jnp.float32)
    ynorm = pallas_bn_relu(y, ssum, g, b, tm, 4 * m_half)
    return _assemble_phases(ynorm, n, h, wd, m_half, cout)


def _convT_bias_tanh(x, w, bias):
    n, h, wd, _ = x.shape
    cout = w.shape[1]
    cp = _round_up(cout, _LANE)
    patches = _phase_patches(x)
    m_half = patches.shape[1]
    tm = _choose_tm(m_half)
    patches = _pad_rows(patches, tm)
    wmat = _phase_weight_matrix(w, cp)
    b = jnp.pad(bias, (0, cp - cout)).reshape(1, cp).astype(jnp.float32)
    y = pallas_gemm_bias_tanh(patches, wmat, b, tm)
    return _assemble_phases(y, n, h, wd, m_half, cout)


# ---------------- Generator: params + forward ----------------

def init_generator_params(key, latent_dim, conv_dim):
    c = conv_dim
    ks = jax.random.split(key, 6)
    p = {}
    p["fc_w"] = 0.02 * jax.random.normal(ks[0], (latent_dim, c * 8 * 2 * 2),
                                         jnp.float32)
    p["fc_b"] = jnp.zeros((c * 8 * 2 * 2,), jnp.float32)
    chans = [c * 8, c * 4, c * 2, c, 3]
    for i in range(4):
        p[f"w{i}"] = 0.02 * jax.random.normal(
            ks[i + 1], (chans[i], chans[i + 1], 4, 4), jnp.float32)
    for i in range(3):
        p[f"gamma{i}"] = jnp.ones((chans[i + 1],), jnp.float32)
        p[f"beta{i}"] = jnp.zeros((chans[i + 1],), jnp.float32)
    p["b3"] = jnp.zeros((3,), jnp.float32)
    return p


def generator_forward(params, z, conv_dim):
    c = conv_dim
    n = z.shape[0]
    h = pallas_linear(z, params["fc_w"], params["fc_b"])       # (N, c*8*2*2)
    # PyTorch ReshapeLayer gives NCHW; convert to NHWC once and stay NHWC.
    x = h.reshape(n, c * 8, 2, 2).transpose(0, 2, 3, 1).astype(jnp.bfloat16)
    for i in range(3):                                         # convT+BN+ReLU x3
        x = _convT_bn_relu(x, params[f"w{i}"],
                           params[f"gamma{i}"], params[f"beta{i}"])
    y = _convT_bias_tanh(x, params["w3"], params["b3"])        # (N, 32, 32, 3)
    return y.transpose(0, 3, 1, 2)                             # NCHW only once, at the end


# ---------------- Pure-JAX reference (correctness check) ----------------

def _convT_ref(x, w):
    n, cin, h, ww = x.shape
    cout = w.shape[1]
    out = jnp.zeros((n, cout, 2 * h + 3, 2 * ww + 3), jnp.float32)
    for kh in range(4):
        for kw in range(4):
            contrib = jnp.einsum('ncij,cd->ndij', x, w[:, :, kh, kw])
            out = out.at[:, :, kh:kh + 2 * h:2, kw:kw + 2 * ww:2].add(contrib)
    return out[:, :, 1:2 * h + 1, 1:2 * ww + 1]


def _reference_forward(params, z, conv_dim):
    c = conv_dim
    h = z @ params["fc_w"] + params["fc_b"]
    x = h.reshape(-1, c * 8, 2, 2)
    for i in range(3):
        y = _convT_ref(x, params[f"w{i}"])
        mean = y.mean(axis=(0, 2, 3), keepdims=True)
        var = ((y - mean) ** 2).mean(axis=(0, 2, 3), keepdims=True)
        y = (y - mean) / jnp.sqrt(var + _BN_EPS)
        y = (y * params[f"gamma{i}"].reshape(1, -1, 1, 1)
             + params[f"beta{i}"].reshape(1, -1, 1, 1))
        x = jnp.maximum(y, 0.0)
    y = _convT_ref(x, params["w3"]) + params["b3"].reshape(1, -1, 1, 1)
    return jnp.tanh(y)


if __name__ == "__main__":
    latent_dim, conv_dim, batch = 32, 4, 2
    key = jax.random.PRNGKey(0)
    k_param, k_z = jax.random.split(key)
    params = init_generator_params(k_param, latent_dim, conv_dim)
    z = jax.random.normal(k_z, (batch, latent_dim), jnp.float32)

    fwd = jax.jit(functools.partial(generator_forward, conv_dim=conv_dim))
    out = jax.block_until_ready(fwd(params, z))
    assert out.shape == (batch, 3, 32, 32), out.shape

    ref = _reference_forward(params, z, conv_dim)
    max_err = float(jnp.max(jnp.abs(out.astype(jnp.float32) - ref)))
    # bf16 MXU inputs (f32 accumulation) through 5 GEMMs + 3 BatchNorms vs an
    # f32 reference: observed error is O(1e-3); 2e-2 still catches any
    # structural (tap-mapping / BN-stat) bug, whose error would be O(1e-1).
    assert max_err < 2e-2, f"mismatch vs reference: {max_err}"
    print("KERNEL_OK")
</pallas_src>

<mosaic_0001>
module attributes {stable_mosaic.version = 11 : i64} {
  func.func @_linear_kernel(%arg0: memref<2x32xbf16, #tpu.memory_space<vmem>>, %arg1: memref<32x128xbf16, #tpu.memory_space<vmem>>, %arg2: memref<1x128xf32, #tpu.memory_space<vmem>>, %arg3: memref<2x128xf32, #tpu.memory_space<vmem>>) attributes {dimension_semantics = [], scalar_prefetch = 0 : i64, scratch_operands = 0 : i64, tpu.core_type = #tpu.core_type<tc>} {
    %c0 = arith.constant 0 : index
    %c0_0 = arith.constant 0 : index
    %0 = vector.load %arg0[%c0, %c0_0] : memref<2x32xbf16, #tpu.memory_space<vmem>>, vector<2x32xbf16>
    %c0_1 = arith.constant 0 : index
    %c0_2 = arith.constant 0 : index
    %1 = vector.load %arg1[%c0_1, %c0_2] : memref<32x128xbf16, #tpu.memory_space<vmem>>, vector<32x128xbf16>
    %cst = arith.constant dense<0.000000e+00> : vector<2x128xf32>
    %2 = tpu.matmul %0, %1, %cst {dimension_numbers = #tpu.dot_dimension_numbers<[1], [0], [0], [1], [0, 0, 1, 1], [], []>} : vector<2x32xbf16>, vector<32x128xbf16>, vector<2x128xf32> -> vector<2x128xf32>
    %c0_3 = arith.constant 0 : index
    %c0_4 = arith.constant 0 : index
    %3 = vector.load %arg2[%c0_3, %c0_4] : memref<1x128xf32, #tpu.memory_space<vmem>>, vector<1x128xf32>
    %4 = vector.broadcast %3 : vector<1x128xf32> to vector<2x128xf32>
    %5 = arith.addf %2, %4 : vector<2x128xf32>
    %c0_5 = arith.constant 0 : index
    %c0_6 = arith.constant 0 : index
    %6 = vector.load %arg3[%c0_5, %c0_6] : memref<2x128xf32, #tpu.memory_space<vmem>>, vector<2x128xf32>
    tpu.vector_store %arg3[%c0_5, %c0_6], %5 {strides = array<i32>} : memref<2x128xf32, #tpu.memory_space<vmem>>, vector<2x128xf32>,
    return
  }
}

module attributes {stable_mosaic.version = 11 : i64} {
  func.func @_gemm_stats_kernel(%arg0: i32, %arg1: i32, %arg2: memref<1x8x128xbf16, #tpu.memory_space<vmem>>, %arg3: memref<1x128x128xbf16, #tpu.memory_space<vmem>>, %arg4: memref<1x8x128xf32, #tpu.memory_space<vmem>>, %arg5: memref<1x1x2x128xf32, #tpu.memory_space<vmem>>) attributes {dimension_semantics = [#tpu.dimension_semantics<parallel>, #tpu.dimension_semantics<parallel>], iteration_bounds = array<i64: 4, 1>, scalar_prefetch = 0 : i64, scratch_operands = 0 : i64, tpu.core_type = #tpu.core_type<tc>, window_params = [{transform_indices = @transform_0, window_bounds = array<i64: 1, 8, 128>}, {transform_indices = @transform_1, window_bounds = array<i64: 1, 128, 128>}, {transform_indices = @transform_2, window_bounds = array<i64: 1, 8, 128>}, {transform_indices = @transform_3, window_bounds = array<i64: 1, 1, 2, 128>}]} {
    %c0 = arith.constant 0 : index
    %c0_0 = arith.constant 0 : index
    %c0_1 = arith.constant 0 : index
    %0 = vector.load %arg2[%c0, %c0_0, %c0_1] : memref<1x8x128xbf16, #tpu.memory_space<vmem>>, vector<1x8x128xbf16>
    %1 = vector.shape_cast %0 : vector<1x8x128xbf16> to vector<8x128xbf16>
    %c0_2 = arith.constant 0 : index
    %c0_3 = arith.constant 0 : index
    %c0_4 = arith.constant 0 : index
    %2 = vector.load %arg3[%c0_2, %c0_3, %c0_4] : memref<1x128x128xbf16, #tpu.memory_space<vmem>>, vector<1x128x128xbf16>
    %3 = vector.shape_cast %2 : vector<1x128x128xbf16> to vector<128x128xbf16>
    %cst = arith.constant dense<0.000000e+00> : vector<8x128xf32>
    %4 = tpu.matmul %1, %3, %cst {dimension_numbers = #tpu.dot_dimension_numbers<[1], [0], [0], [1], [0, 0, 1, 1], [], []>} : vector<8x128xbf16>, vector<128x128xbf16>, vector<8x128xf32> -> vector<8x128xf32>
    %c0_5 = arith.constant 0 : index
    %c0_6 = arith.constant 0 : index
    %c0_7 = arith.constant 0 : index
    %5 = vector.load %arg4[%c0_5, %c0_6, %c0_7] : memref<1x8x128xf32, #tpu.memory_space<vmem>>, vector<1x8x128xf32>
    %6 = vector.shape_cast %5 : vector<1x8x128xf32> to vector<8x128xf32>
    %7 = vector.shape_cast %4 : vector<8x128xf32> to vector<1x8x128xf32>
    tpu.vector_store %arg4[%c0_5, %c0_6, %c0_7], %7 {strides = array<i32>} : memref<1x8x128xf32, #tpu.memory_space<vmem>>, vector<1x8x128xf32>,
    %cst_8 = arith.constant 1.000000e+00 : f32
    %8 = vector.broadcast %cst_8 : f32 to vector<8x8xf32>
    %cst_9 = arith.constant dense<0.000000e+00> : vector<8x128xf32>
    %9 = tpu.matmul %8, %4, %cst_9 {dimension_numbers = #tpu.dot_dimension_numbers<[1], [0], [0], [1], [0, 0, 1, 1], [], []>} : vector<8x8xf32>, vector<8x128xf32>, vector<8x128xf32> -> vector<8x128xf32>
    %10 = vector.extract_strided_slice %9 {offsets = [0, 0], sizes = [1, 128], strides = [1, 1]} : vector<8x128xf32> to vector<1x128xf32>
    %11 = arith.mulf %4, %4 : vector<8x128xf32>
    %cst_10 = arith.constant dense<0.000000e+00> : vector<8x128xf32>
    %12 = tpu.matmul %8, %11, %cst_10 {dimension_numbers = #tpu.dot_dimension_numbers<[1], [0], [0], [1], [0, 0, 1, 1], [], []>} : vector<8x8xf32>, vector<8x128xf32>, vector<8x128xf32> -> vector<8x128xf32>
    %13 = vector.extract_strided_slice %12 {offsets = [0, 0], sizes = [1, 128], strides = [1, 1]} : vector<8x128xf32> to vector<1x128xf32>
    %14 = tpu.concatenate %10, %13 in 0 : vector<1x128xf32>, vector<1x128xf32> -> vector<2x128xf32>
    %c0_11 = arith.constant 0 : index
    %c0_12 = arith.constant 0 : index
    %c0_13 = arith.constant 0 : index
    %c0_14 = arith.constant 0 : index
    %15 = vector.load %arg5[%c0_11, %c0_12, %c0_13, %c0_14] : memref<1x1x2x128xf32, #tpu.memory_space<vmem>>, vector<1x1x2x128xf32>
    %16 = vector.shape_cast %15 : vector<1x1x2x128xf32> to vector<2x128xf32>
    %17 = vector.shape_cast %14 : vector<2x128xf32> to vector<1x1x2x128xf32>
    tpu.vector_store %arg5[%c0_11, %c0_12, %c0_13, %c0_14], %17 {strides = array<i32>} : memref<1x1x2x128xf32, #tpu.memory_space<vmem>>, vector<1x1x2x128xf32>,
    return
  }
  func.func @transform_0(%arg0: i32, %arg1: i32) -> (i32, i32, i32) {
    %c0_i32 = arith.constant 0 : i32
    %c0_i32_0 = arith.constant 0 : i32
    return %arg0, %arg1, %c0_i32 : i32, i32, i32
  }
  func.func @transform_1(%arg0: i32, %arg1: i32) -> (i32, i32, i32) {
    %c0_i32 = arith.constant 0 : i32
    %c0_i32_0 = arith.constant 0 : i32
    %c0_i32_1 = arith.constant 0 : i32
    return %arg0, %c0_i32, %c0_i32_0 : i32, i32, i32
  }
  func.func @transform_2(%arg0: i32, %arg1: i32) -> (i32, i32, i32) {
    %c0_i32 = arith.constant 0 : i32
    %c0_i32_0 = arith.constant 0 : i32
    return %arg0, %arg1, %c0_i32 : i32, i32, i32
  }
  func.func @transform_3(%arg0: i32, %arg1: i32) -> (i32, i32, i32, i32) {
    %c0_i32 = arith.constant 0 : i32
    %c0_i32_0 = arith.constant 0 : i32
    %c0_i32_1 = arith.constant 0 : i32
    return %arg0, %arg1, %c0_i32, %c0_i32_0 : i32, i32, i32, i32
  }
}

module attributes {stable_mosaic.version = 11 : i64} {
  func.func @_bn_relu_kernel(%arg0: i32, %arg1: i32, %arg2: memref<1x8x128xf32, #tpu.memory_space<vmem>>, %arg3: memref<2x128xf32, #tpu.memory_space<vmem>>, %arg4: memref<1x128xf32, #tpu.memory_space<vmem>>, %arg5: memref<1x128xf32, #tpu.memory_space<vmem>>, %arg6: memref<1x8x128xbf16, #tpu.memory_space<vmem>>) attributes {dimension_semantics = [#tpu.dimension_semantics<parallel>, #tpu.dimension_semantics<parallel>], iteration_bounds = array<i64: 4, 1>, scalar_prefetch = 0 : i64, scratch_operands = 0 : i64, tpu.core_type = #tpu.core_type<tc>, window_params = [{transform_indices = @transform_0, window_bounds = array<i64: 1, 8, 128>}, {pipeline_mode = #tpu.pipeline_mode<synchronous>, transform_indices = @transform_1, window_bounds = array<i64: 2, 128>}, {pipeline_mode = #tpu.pipeline_mode<synchronous>, transform_indices = @transform_2, window_bounds = array<i64: 1, 128>}, {pipeline_mode = #tpu.pipeline_mode<synchronous>, transform_indices = @transform_3, window_bounds = array<i64: 1, 128>}, {transform_indices = @transform_4, window_bounds = array<i64: 1, 8, 128>}]} {
    %c0 = arith.constant 0 : index
    %c0_0 = arith.constant 0 : index
    %0 = vector.load %arg3[%c0, %c0_0] : memref<2x128xf32, #tpu.memory_space<vmem>>, vector<2x128xf32>
    %1 = vector.extract_strided_slice %0 {offsets = [0, 0], sizes = [1, 128], strides = [1, 1]} : vector<2x128xf32> to vector<1x128xf32>
    %cst = arith.constant 3.125000e-02 : f32
    %2 = vector.broadcast %cst : f32 to vector<1x128xf32>
    %3 = arith.mulf %1, %2 : vector<1x128xf32>
    %4 = vector.extract_strided_slice %0 {offsets = [1, 0], sizes = [1, 128], strides = [1, 1]} : vector<2x128xf32> to vector<1x128xf32>
    %cst_1 = arith.constant 3.125000e-02 : f32
    %5 = vector.broadcast %cst_1 : f32 to vector<1x128xf32>
    %6 = arith.mulf %4, %5 : vector<1x128xf32>
    %7 = arith.mulf %3, %3 : vector<1x128xf32>
    %8 = arith.subf %6, %7 : vector<1x128xf32>
    %cst_2 = arith.constant 0.000000e+00 : f32
    %9 = vector.broadcast %cst_2 : f32 to vector<1x128xf32>
    %10 = arith.maximumf %8, %9 : vector<1x128xf32>
    %c0_3 = arith.constant 0 : index
    %c0_4 = arith.constant 0 : index
    %11 = vector.load %arg4[%c0_3, %c0_4] : memref<1x128xf32, #tpu.memory_space<vmem>>, vector<1x128xf32>
    %cst_5 = arith.constant 9.99999974E-6 : f32
    %12 = vector.broadcast %cst_5 : f32 to vector<1x128xf32>
    %13 = arith.addf %10, %12 : vector<1x128xf32>
    %14 = math.rsqrt %13 : vector<1x128xf32>
    %15 = arith.mulf %11, %14 : vector<1x128xf32>
    %c0_6 = arith.constant 0 : index
    %c0_7 = arith.constant 0 : index
    %16 = vector.load %arg5[%c0_6, %c0_7] : memref<1x128xf32, #tpu.memory_space<vmem>>, vector<1x128xf32>
    %17 = arith.mulf %3, %15 : vector<1x128xf32>
    %18 = arith.subf %16, %17 : vector<1x128xf32>
    %c0_8 = arith.constant 0 : index
    %c0_9 = arith.constant 0 : index
    %c0_10 = arith.constant 0 : index
    %19 = vector.load %arg2[%c0_8, %c0_9, %c0_10] : memref<1x8x128xf32, #tpu.memory_space<vmem>>, vector<1x8x128xf32>
    %20 = vector.shape_cast %19 : vector<1x8x128xf32> to vector<8x128xf32>
    %21 = vector.broadcast %15 : vector<1x128xf32> to vector<8x128xf32>
    %22 = arith.mulf %20, %21 : vector<8x128xf32>
    %23 = vector.broadcast %18 : vector<1x128xf32> to vector<8x128xf32>
    %24 = arith.addf %22, %23 : vector<8x128xf32>
    %cst_11 = arith.constant 0.000000e+00 : f32
    %25 = vector.broadcast %cst_11 : f32 to vector<8x128xf32>
    %26 = arith.maximumf %24, %25 : vector<8x128xf32>
    %27 = arith.truncf %26 : vector<8x128xf32> to vector<8x128xbf16>
    %c0_12 = arith.constant 0 : index
    %c0_13 = arith.constant 0 : index
    %c0_14 = arith.constant 0 : index
    %28 = vector.load %arg6[%c0_12, %c0_13, %c0_14] : memref<1x8x128xbf16, #tpu.memory_space<vmem>>, vector<1x8x128xbf16>
    %29 = vector.shape_cast %28 : vector<1x8x128xbf16> to vector<8x128xbf16>
    %30 = vector.shape_cast %27 : vector<8x128xbf16> to vector<1x8x128xbf16>
    tpu.vector_store %arg6[%c0_12, %c0_13, %c0_14], %30 {strides = array<i32>} : memref<1x8x128xbf16, #tpu.memory_space<vmem>>, vector<1x8x128xbf16>,
    return
  }
  func.func @transform_0(%arg0: i32, %arg1: i32) -> (i32, i32, i32) {
    %c0_i32 = arith.constant 0 : i32
    %c0_i32_0 = arith.constant 0 : i32
    return %arg0, %arg1, %c0_i32 : i32, i32, i32
  }
  func.func @transform_1(%arg0: i32, %arg1: i32) -> (i32, i32) {
    %c0_i32 = arith.constant 0 : i32
    %c0_i32_0 = arith.constant 0 : i32
    %c0_i32_1 = arith.constant 0 : i32
    return %c0_i32, %c0_i32_0 : i32, i32
  }
  func.func @transform_2(%arg0: i32, %arg1: i32) -> (i32, i32) {
    %c0_i32 = arith.constant 0 : i32
    %c0_i32_0 = arith.constant 0 : i32
    %c0_i32_1 = arith.constant 0 : i32
    return %c0_i32, %c0_i32_0 : i32, i32
  }
  func.func @transform_3(%arg0: i32, %arg1: i32) -> (i32, i32) {
    %c0_i32 = arith.constant 0 : i32
    %c0_i32_0 = arith.constant 0 : i32
    %c0_i32_1 = arith.constant 0 : i32
    return %c0_i32, %c0_i32_0 : i32, i32
  }
  func.func @transform_4(%arg0: i32, %arg1: i32) -> (i32, i32, i32) {
    %c0_i32 = arith.constant 0 : i32
    %c0_i32_0 = arith.constant 0 : i32
    return %arg0, %arg1, %c0_i32 : i32, i32, i32
  }
}

module attributes {stable_mosaic.version = 11 : i64} {
  func.func @_gemm_stats_kernel(%arg0: i32, %arg1: i32, %arg2: memref<1x32x64xbf16, #tpu.memory_space<vmem>>, %arg3: memref<1x64x128xbf16, #tpu.memory_space<vmem>>, %arg4: memref<1x32x128xf32, #tpu.memory_space<vmem>>, %arg5: memref<1x1x2x128xf32, #tpu.memory_space<vmem>>) attributes {dimension_semantics = [#tpu.dimension_semantics<parallel>, #tpu.dimension_semantics<parallel>], iteration_bounds = array<i64: 4, 1>, scalar_prefetch = 0 : i64, scratch_operands = 0 : i64, tpu.core_type = #tpu.core_type<tc>, window_params = [{transform_indices = @transform_0, window_bounds = array<i64: 1, 32, 64>}, {transform_indices = @transform_1, window_bounds = array<i64: 1, 64, 128>}, {transform_indices = @transform_2, window_bounds = array<i64: 1, 32, 128>}, {transform_indices = @transform_3, window_bounds = array<i64: 1, 1, 2, 128>}]} {
    %c0 = arith.constant 0 : index
    %c0_0 = arith.constant 0 : index
    %c0_1 = arith.constant 0 : index
    %0 = vector.load %arg2[%c0, %c0_0, %c0_1] : memref<1x32x64xbf16, #tpu.memory_space<vmem>>, vector<1x32x64xbf16>
    %1 = vector.shape_cast %0 : vector<1x32x64xbf16> to vector<32x64xbf16>
    %c0_2 = arith.constant 0 : index
    %c0_3 = arith.constant 0 : index
    %c0_4 = arith.constant 0 : index
    %2 = vector.load %arg3[%c0_2, %c0_3, %c0_4] : memref<1x64x128xbf16, #tpu.memory_space<vmem>>, vector<1x64x128xbf16>
    %3 = vector.shape_cast %2 : vector<1x64x128xbf16> to vector<64x128xbf16>
    %cst = arith.constant dense<0.000000e+00> : vector<32x128xf32>
    %4 = tpu.matmul %1, %3, %cst {dimension_numbers = #tpu.dot_dimension_numbers<[1], [0], [0], [1], [0, 0, 1, 1], [], []>} : vector<32x64xbf16>, vector<64x128xbf16>, vector<32x128xf32> -> vector<32x128xf32>
    %c0_5 = arith.constant 0 : index
    %c0_6 = arith.constant 0 : index
    %c0_7 = arith.constant 0 : index
    %5 = vector.load %arg4[%c0_5, %c0_6, %c0_7] : memref<1x32x128xf32, #tpu.memory_space<vmem>>, vector<1x32x128xf32>
    %6 = vector.shape_cast %5 : vector<1x32x128xf32> to vector<32x128xf32>
    %7 = vector.shape_cast %4 : vector<32x128xf32> to vector<1x32x128xf32>
    tpu.vector_store %arg4[%c0_5, %c0_6, %c0_7], %7 {strides = array<i32>} : memref<1x32x128xf32, #tpu.memory_space<vmem>>, vector<1x32x128xf32>,
    %cst_8 = arith.constant 1.000000e+00 : f32
    %8 = vector.broadcast %cst_8 : f32 to vector<8x32xf32>
    %cst_9 = arith.constant dense<0.000000e+00> : vector<8x128xf32>
    %9 = tpu.matmul %8, %4, %cst_9 {dimension_numbers = #tpu.dot_dimension_numbers<[1], [0], [0], [1], [0, 0, 1, 1], [], []>} : vector<8x32xf32>, vector<32x128xf32>, vector<8x128xf32> -> vector<8x128xf32>
    %10 = vector.extract_strided_slice %9 {offsets = [0, 0], sizes = [1, 128], strides = [1, 1]} : vector<8x128xf32> to vector<1x128xf32>
    %11 = arith.mulf %4, %4 : vector<32x128xf32>
    %cst_10 = arith.constant dense<0.000000e+00> : vector<8x128xf32>
    %12 = tpu.matmul %8, %11, %cst_10 {dimension_numbers = #tpu.dot_dimension_numbers<[1], [0], [0], [1], [0, 0, 1, 1], [], []>} : vector<8x32xf32>, vector<32x128xf32>, vector<8x128xf32> -> vector<8x128xf32>
    %13 = vector.extract_strided_slice %12 {offsets = [0, 0], sizes = [1, 128], strides = [1, 1]} : vector<8x128xf32> to vector<1x128xf32>
    %14 = tpu.concatenate %10, %13 in 0 : vector<1x128xf32>, vector<1x128xf32> -> vector<2x128xf32>
    %c0_11 = arith.constant 0 : index
    %c0_12 = arith.constant 0 : index
    %c0_13 = arith.constant 0 : index
    %c0_14 = arith.constant 0 : index
    %15 = vector.load %arg5[%c0_11, %c0_12, %c0_13, %c0_14] : memref<1x1x2x128xf32, #tpu.memory_space<vmem>>, vector<1x1x2x128xf32>
    %16 = vector.shape_cast %15 : vector<1x1x2x128xf32> to vector<2x128xf32>
    %17 = vector.shape_cast %14 : vector<2x128xf32> to vector<1x1x2x128xf32>
    tpu.vector_store %arg5[%c0_11, %c0_12, %c0_13, %c0_14], %17 {strides = array<i32>} : memref<1x1x2x128xf32, #tpu.memory_space<vmem>>, vector<1x1x2x128xf32>,
    return
  }
  func.func @transform_0(%arg0: i32, %arg1: i32) -> (i32, i32, i32) {
    %c0_i32 = arith.constant 0 : i32
    %c0_i32_0 = arith.constant 0 : i32
    return %arg0, %arg1, %c0_i32 : i32, i32, i32
  }
  func.func @transform_1(%arg0: i32, %arg1: i32) -> (i32, i32, i32) {
    %c0_i32 = arith.constant 0 : i32
    %c0_i32_0 = arith.constant 0 : i32
    %c0_i32_1 = arith.constant 0 : i32
    return %arg0, %c0_i32, %c0_i32_0 : i32, i32, i32
  }
  func.func @transform_2(%arg0: i32, %arg1: i32) -> (i32, i32, i32) {
    %c0_i32 = arith.constant 0 : i32
    %c0_i32_0 = arith.constant 0 : i32
    return %arg0, %arg1, %c0_i32 : i32, i32, i32
  }
  func.func @transform_3(%arg0: i32, %arg1: i32) -> (i32, i32, i32, i32) {
    %c0_i32 = arith.constant 0 : i32
    %c0_i32_0 = arith.constant 0 : i32
    %c0_i32_1 = arith.constant 0 : i32
    return %arg0, %arg1, %c0_i32, %c0_i32_0 : i32, i32, i32, i32
  }
}

module attributes {stable_mosaic.version = 11 : i64} {
  func.func @_bn_relu_kernel(%arg0: i32, %arg1: i32, %arg2: memref<1x32x128xf32, #tpu.memory_space<vmem>>, %arg3: memref<2x128xf32, #tpu.memory_space<vmem>>, %arg4: memref<1x128xf32, #tpu.memory_space<vmem>>, %arg5: memref<1x128xf32, #tpu.memory_space<vmem>>, %arg6: memref<1x32x128xbf16, #tpu.memory_space<vmem>>) attributes {dimension_semantics = [#tpu.dimension_semantics<parallel>, #tpu.dimension_semantics<parallel>], iteration_bounds = array<i64: 4, 1>, scalar_prefetch = 0 : i64, scratch_operands = 0 : i64, tpu.core_type = #tpu.core_type<tc>, window_params = [{transform_indices = @transform_0, window_bounds = array<i64: 1, 32, 128>}, {pipeline_mode = #tpu.pipeline_mode<synchronous>, transform_indices = @transform_1, window_bounds = array<i64: 2, 128>}, {pipeline_mode = #tpu.pipeline_mode<synchronous>, transform_indices = @transform_2, window_bounds = array<i64: 1, 128>}, {pipeline_mode = #tpu.pipeline_mode<synchronous>, transform_indices = @transform_3, window_bounds = array<i64: 1, 128>}, {transform_indices = @transform_4, window_bounds = array<i64: 1, 32, 128>}]} {
    %c0 = arith.constant 0 : index
    %c0_0 = arith.constant 0 : index
    %0 = vector.load %arg3[%c0, %c0_0] : memref<2x128xf32, #tpu.memory_space<vmem>>, vector<2x128xf32>
    %1 = vector.extract_strided_slice %0 {offsets = [0, 0], sizes = [1, 128], strides = [1, 1]} : vector<2x128xf32> to vector<1x128xf32>
    %cst = arith.constant 7.812500e-03 : f32
    %2 = vector.broadcast %cst : f32 to vector<1x128xf32>
    %3 = arith.mulf %1, %2 : vector<1x128xf32>
    %4 = vector.extract_strided_slice %0 {offsets = [1, 0], sizes = [1, 128], strides = [1, 1]} : vector<2x128xf32> to vector<1x128xf32>
    %cst_1 = arith.constant 7.812500e-03 : f32
    %5 = vector.broadcast %cst_1 : f32 to vector<1x128xf32>
    %6 = arith.mulf %4, %5 : vector<1x128xf32>
    %7 = arith.mulf %3, %3 : vector<1x128xf32>
    %8 = arith.subf %6, %7 : vector<1x128xf32>
    %cst_2 = arith.constant 0.000000e+00 : f32
    %9 = vector.broadcast %cst_2 : f32 to vector<1x128xf32>
    %10 = arith.maximumf %8, %9 : vector<1x128xf32>
    %c0_3 = arith.constant 0 : index
    %c0_4 = arith.constant 0 : index
    %11 = vector.load %arg4[%c0_3, %c0_4] : memref<1x128xf32, #tpu.memory_space<vmem>>, vector<1x128xf32>
    %cst_5 = arith.constant 9.99999974E-6 : f32
    %12 = vector.broadcast %cst_5 : f32 to vector<1x128xf32>
    %13 = arith.addf %10, %12 : vector<1x128xf32>
    %14 = math.rsqrt %13 : vector<1x128xf32>
    %15 = arith.mulf %11, %14 : vector<1x128xf32>
    %c0_6 = arith.constant 0 : index
    %c0_7 = arith.constant 0 : index
    %16 = vector.load %arg5[%c0_6, %c0_7] : memref<1x128xf32, #tpu.memory_space<vmem>>, vector<1x128xf32>
    %17 = arith.mulf %3, %15 : vector<1x128xf32>
    %18 = arith.subf %16, %17 : vector<1x128xf32>
    %c0_8 = arith.constant 0 : index
    %c0_9 = arith.constant 0 : index
    %c0_10 = arith.constant 0 : index
    %19 = vector.load %arg2[%c0_8, %c0_9, %c0_10] : memref<1x32x128xf32, #tpu.memory_space<vmem>>, vector<1x32x128xf32>
    %20 = vector.shape_cast %19 : vector<1x32x128xf32> to vector<32x128xf32>
    %21 = vector.broadcast %15 : vector<1x128xf32> to vector<32x128xf32>
    %22 = arith.mulf %20, %21 : vector<32x128xf32>
    %23 = vector.broadcast %18 : vector<1x128xf32> to vector<32x128xf32>
    %24 = arith.addf %22, %23 : vector<32x128xf32>
    %cst_11 = arith.constant 0.000000e+00 : f32
    %25 = vector.broadcast %cst_11 : f32 to vector<32x128xf32>
    %26 = arith.maximumf %24, %25 : vector<32x128xf32>
    %27 = arith.truncf %26 : vector<32x128xf32> to vector<32x128xbf16>
    %c0_12 = arith.constant 0 : index
    %c0_13 = arith.constant 0 : index
    %c0_14 = arith.constant 0 : index
    %28 = vector.load %arg6[%c0_12, %c0_13, %c0_14] : memref<1x32x128xbf16, #tpu.memory_space<vmem>>, vector<1x32x128xbf16>
    %29 = vector.shape_cast %28 : vector<1x32x128xbf16> to vector<32x128xbf16>
    %30 = vector.shape_cast %27 : vector<32x128xbf16> to vector<1x32x128xbf16>
    tpu.vector_store %arg6[%c0_12, %c0_13, %c0_14], %30 {strides = array<i32>} : memref<1x32x128xbf16, #tpu.memory_space<vmem>>, vector<1x32x128xbf16>,
    return
  }
  func.func @transform_0(%arg0: i32, %arg1: i32) -> (i32, i32, i32) {
    %c0_i32 = arith.constant 0 : i32
    %c0_i32_0 = arith.constant 0 : i32
    return %arg0, %arg1, %c0_i32 : i32, i32, i32
  }
  func.func @transform_1(%arg0: i32, %arg1: i32) -> (i32, i32) {
    %c0_i32 = arith.constant 0 : i32
    %c0_i32_0 = arith.constant 0 : i32
    %c0_i32_1 = arith.constant 0 : i32
    return %c0_i32, %c0_i32_0 : i32, i32
  }
  func.func @transform_2(%arg0: i32, %arg1: i32) -> (i32, i32) {
    %c0_i32 = arith.constant 0 : i32
    %c0_i32_0 = arith.constant 0 : i32
    %c0_i32_1 = arith.constant 0 : i32
    return %c0_i32, %c0_i32_0 : i32, i32
  }
  func.func @transform_3(%arg0: i32, %arg1: i32) -> (i32, i32) {
    %c0_i32 = arith.constant 0 : i32
    %c0_i32_0 = arith.constant 0 : i32
    %c0_i32_1 = arith.constant 0 : i32
    return %c0_i32, %c0_i32_0 : i32, i32
  }
  func.func @transform_4(%arg0: i32, %arg1: i32) -> (i32, i32, i32) {
    %c0_i32 = arith.constant 0 : i32
    %c0_i32_0 = arith.constant 0 : i32
    return %arg0, %arg1, %c0_i32 : i32, i32, i32
  }
}

module attributes {stable_mosaic.version = 11 : i64} {
  func.func @_gemm_stats_kernel(%arg0: i32, %arg1: i32, %arg2: memref<1x128x32xbf16, #tpu.memory_space<vmem>>, %arg3: memref<1x32x128xbf16, #tpu.memory_space<vmem>>, %arg4: memref<1x128x128xf32, #tpu.memory_space<vmem>>, %arg5: memref<1x1x2x128xf32, #tpu.memory_space<vmem>>) attributes {dimension_semantics = [#tpu.dimension_semantics<parallel>, #tpu.dimension_semantics<parallel>], iteration_bounds = array<i64: 4, 1>, scalar_prefetch = 0 : i64, scratch_operands = 0 : i64, tpu.core_type = #tpu.core_type<tc>, window_params = [{transform_indices = @transform_0, window_bounds = array<i64: 1, 128, 32>}, {transform_indices = @transform_1, window_bounds = array<i64: 1, 32, 128>}, {transform_indices = @transform_2, window_bounds = array<i64: 1, 128, 128>}, {transform_indices = @transform_3, window_bounds = array<i64: 1, 1, 2, 128>}]} {
    %c0 = arith.constant 0 : index
    %c0_0 = arith.constant 0 : index
    %c0_1 = arith.constant 0 : index
    %0 = vector.load %arg2[%c0, %c0_0, %c0_1] : memref<1x128x32xbf16, #tpu.memory_space<vmem>>, vector<1x128x32xbf16>
    %1 = vector.shape_cast %0 : vector<1x128x32xbf16> to vector<128x32xbf16>
    %c0_2 = arith.constant 0 : index
    %c0_3 = arith.constant 0 : index
    %c0_4 = arith.constant 0 : index
    %2 = vector.load %arg3[%c0_2, %c0_3, %c0_4] : memref<1x32x128xbf16, #tpu.memory_space<vmem>>, vector<1x32x128xbf16>
    %3 = vector.shape_cast %2 : vector<1x32x128xbf16> to vector<32x128xbf16>
    %cst = arith.constant dense<0.000000e+00> : vector<128x128xf32>
    %4 = tpu.matmul %1, %3, %cst {dimension_numbers = #tpu.dot_dimension_numbers<[1], [0], [0], [1], [0, 0, 1, 1], [], []>} : vector<128x32xbf16>, vector<32x128xbf16>, vector<128x128xf32> -> vector<128x128xf32>
    %c0_5 = arith.constant 0 : index
    %c0_6 = arith.constant 0 : index
    %c0_7 = arith.constant 0 : index
    %5 = vector.load %arg4[%c0_5, %c0_6, %c0_7] : memref<1x128x128xf32, #tpu.memory_space<vmem>>, vector<1x128x128xf32>
    %6 = vector.shape_cast %5 : vector<1x128x128xf32> to vector<128x128xf32>
    %7 = vector.shape_cast %4 : vector<128x128xf32> to vector<1x128x128xf32>
    tpu.vector_store %arg4[%c0_5, %c0_6, %c0_7], %7 {strides = array<i32>} : memref<1x128x128xf32, #tpu.memory_space<vmem>>, vector<1x128x128xf32>,
    %cst_8 = arith.constant 1.000000e+00 : f32
    %8 = vector.broadcast %cst_8 : f32 to vector<8x128xf32>
    %cst_9 = arith.constant dense<0.000000e+00> : vector<8x128xf32>
    %9 = tpu.matmul %8, %4, %cst_9 {dimension_numbers = #tpu.dot_dimension_numbers<[1], [0], [0], [1], [0, 0, 1, 1], [], []>} : vector<8x128xf32>, vector<128x128xf32>, vector<8x128xf32> -> vector<8x128xf32>
    %10 = vector.extract_strided_slice %9 {offsets = [0, 0], sizes = [1, 128], strides = [1, 1]} : vector<8x128xf32> to vector<1x128xf32>
    %11 = arith.mulf %4, %4 : vector<128x128xf32>
    %cst_10 = arith.constant dense<0.000000e+00> : vector<8x128xf32>
    %12 = tpu.matmul %8, %11, %cst_10 {dimension_numbers = #tpu.dot_dimension_numbers<[1], [0], [0], [1], [0, 0, 1, 1], [], []>} : vector<8x128xf32>, vector<128x128xf32>, vector<8x128xf32> -> vector<8x128xf32>
    %13 = vector.extract_strided_slice %12 {offsets = [0, 0], sizes = [1, 128], strides = [1, 1]} : vector<8x128xf32> to vector<1x128xf32>
    %14 = tpu.concatenate %10, %13 in 0 : vector<1x128xf32>, vector<1x128xf32> -> vector<2x128xf32>
    %c0_11 = arith.constant 0 : index
    %c0_12 = arith.constant 0 : index
    %c0_13 = arith.constant 0 : index
    %c0_14 = arith.constant 0 : index
    %15 = vector.load %arg5[%c0_11, %c0_12, %c0_13, %c0_14] : memref<1x1x2x128xf32, #tpu.memory_space<vmem>>, vector<1x1x2x128xf32>
    %16 = vector.shape_cast %15 : vector<1x1x2x128xf32> to vector<2x128xf32>
    %17 = vector.shape_cast %14 : vector<2x128xf32> to vector<1x1x2x128xf32>
    tpu.vector_store %arg5[%c0_11, %c0_12, %c0_13, %c0_14], %17 {strides = array<i32>} : memref<1x1x2x128xf32, #tpu.memory_space<vmem>>, vector<1x1x2x128xf32>,
    return
  }
  func.func @transform_0(%arg0: i32, %arg1: i32) -> (i32, i32, i32) {
    %c0_i32 = arith.constant 0 : i32
    %c0_i32_0 = arith.constant 0 : i32
    return %arg0, %arg1, %c0_i32 : i32, i32, i32
  }
  func.func @transform_1(%arg0: i32, %arg1: i32) -> (i32, i32, i32) {
    %c0_i32 = arith.constant 0 : i32
    %c0_i32_0 = arith.constant 0 : i32
    %c0_i32_1 = arith.constant 0 : i32
    return %arg0, %c0_i32, %c0_i32_0 : i32, i32, i32
  }
  func.func @transform_2(%arg0: i32, %arg1: i32) -> (i32, i32, i32) {
    %c0_i32 = arith.constant 0 : i32
    %c0_i32_0 = arith.constant 0 : i32
    return %arg0, %arg1, %c0_i32 : i32, i32, i32
  }
  func.func @transform_3(%arg0: i32, %arg1: i32) -> (i32, i32, i32, i32) {
    %c0_i32 = arith.constant 0 : i32
    %c0_i32_0 = arith.constant 0 : i32
    %c0_i32_1 = arith.constant 0 : i32
    return %arg0, %arg1, %c0_i32, %c0_i32_0 : i32, i32, i32, i32
  }
}

module attributes {stable_mosaic.version = 11 : i64} {
  func.func @_bn_relu_kernel(%arg0: i32, %arg1: i32, %arg2: memref<1x128x128xf32, #tpu.memory_space<vmem>>, %arg3: memref<2x128xf32, #tpu.memory_space<vmem>>, %arg4: memref<1x128xf32, #tpu.memory_space<vmem>>, %arg5: memref<1x128xf32, #tpu.memory_space<vmem>>, %arg6: memref<1x128x128xbf16, #tpu.memory_space<vmem>>) attributes {dimension_semantics = [#tpu.dimension_semantics<parallel>, #tpu.dimension_semantics<parallel>], iteration_bounds = array<i64: 4, 1>, scalar_prefetch = 0 : i64, scratch_operands = 0 : i64, tpu.core_type = #tpu.core_type<tc>, window_params = [{transform_indices = @transform_0, window_bounds = array<i64: 1, 128, 128>}, {pipeline_mode = #tpu.pipeline_mode<synchronous>, transform_indices = @transform_1, window_bounds = array<i64: 2, 128>}, {pipeline_mode = #tpu.pipeline_mode<synchronous>, transform_indices = @transform_2, window_bounds = array<i64: 1, 128>}, {pipeline_mode = #tpu.pipeline_mode<synchronous>, transform_indices = @transform_3, window_bounds = array<i64: 1, 128>}, {transform_indices = @transform_4, window_bounds = array<i64: 1, 128, 128>}]} {
    %c0 = arith.constant 0 : index
    %c0_0 = arith.constant 0 : index
    %0 = vector.load %arg3[%c0, %c0_0] : memref<2x128xf32, #tpu.memory_space<vmem>>, vector<2x128xf32>
    %1 = vector.extract_strided_slice %0 {offsets = [0, 0], sizes = [1, 128], strides = [1, 1]} : vector<2x128xf32> to vector<1x128xf32>
    %cst = arith.constant 0.001953125 : f32
    %2 = vector.broadcast %cst : f32 to vector<1x128xf32>
    %3 = arith.mulf %1, %2 : vector<1x128xf32>
    %4 = vector.extract_strided_slice %0 {offsets = [1, 0], sizes = [1, 128], strides = [1, 1]} : vector<2x128xf32> to vector<1x128xf32>
    %cst_1 = arith.constant 0.001953125 : f32
    %5 = vector.broadcast %cst_1 : f32 to vector<1x128xf32>
    %6 = arith.mulf %4, %5 : vector<1x128xf32>
    %7 = arith.mulf %3, %3 : vector<1x128xf32>
    %8 = arith.subf %6, %7 : vector<1x128xf32>
    %cst_2 = arith.constant 0.000000e+00 : f32
    %9 = vector.broadcast %cst_2 : f32 to vector<1x128xf32>
    %10 = arith.maximumf %8, %9 : vector<1x128xf32>
    %c0_3 = arith.constant 0 : index
    %c0_4 = arith.constant 0 : index
    %11 = vector.load %arg4[%c0_3, %c0_4] : memref<1x128xf32, #tpu.memory_space<vmem>>, vector<1x128xf32>
    %cst_5 = arith.constant 9.99999974E-6 : f32
    %12 = vector.broadcast %cst_5 : f32 to vector<1x128xf32>
    %13 = arith.addf %10, %12 : vector<1x128xf32>
    %14 = math.rsqrt %13 : vector<1x128xf32>
    %15 = arith.mulf %11, %14 : vector<1x128xf32>
    %c0_6 = arith.constant 0 : index
    %c0_7 = arith.constant 0 : index
    %16 = vector.load %arg5[%c0_6, %c0_7] : memref<1x128xf32, #tpu.memory_space<vmem>>, vector<1x128xf32>
    %17 = arith.mulf %3, %15 : vector<1x128xf32>
    %18 = arith.subf %16, %17 : vector<1x128xf32>
    %c0_8 = arith.constant 0 : index
    %c0_9 = arith.constant 0 : index
    %c0_10 = arith.constant 0 : index
    %19 = vector.load %arg2[%c0_8, %c0_9, %c0_10] : memref<1x128x128xf32, #tpu.memory_space<vmem>>, vector<1x128x128xf32>
    %20 = vector.shape_cast %19 : vector<1x128x128xf32> to vector<128x128xf32>
    %21 = vector.broadcast %15 : vector<1x128xf32> to vector<128x128xf32>
    %22 = arith.mulf %20, %21 : vector<128x128xf32>
    %23 = vector.broadcast %18 : vector<1x128xf32> to vector<128x128xf32>
    %24 = arith.addf %22, %23 : vector<128x128xf32>
    %cst_11 = arith.constant 0.000000e+00 : f32
    %25 = vector.broadcast %cst_11 : f32 to vector<128x128xf32>
    %26 = arith.maximumf %24, %25 : vector<128x128xf32>
    %27 = arith.truncf %26 : vector<128x128xf32> to vector<128x128xbf16>
    %c0_12 = arith.constant 0 : index
    %c0_13 = arith.constant 0 : index
    %c0_14 = arith.constant 0 : index
    %28 = vector.load %arg6[%c0_12, %c0_13, %c0_14] : memref<1x128x128xbf16, #tpu.memory_space<vmem>>, vector<1x128x128xbf16>
    %29 = vector.shape_cast %28 : vector<1x128x128xbf16> to vector<128x128xbf16>
    %30 = vector.shape_cast %27 : vector<128x128xbf16> to vector<1x128x128xbf16>
    tpu.vector_store %arg6[%c0_12, %c0_13, %c0_14], %30 {strides = array<i32>} : memref<1x128x128xbf16, #tpu.memory_space<vmem>>, vector<1x128x128xbf16>,
    return
  }
  func.func @transform_0(%arg0: i32, %arg1: i32) -> (i32, i32, i32) {
    %c0_i32 = arith.constant 0 : i32
    %c0_i32_0 = arith.constant 0 : i32
    return %arg0, %arg1, %c0_i32 : i32, i32, i32
  }
  func.func @transform_1(%arg0: i32, %arg1: i32) -> (i32, i32) {
    %c0_i32 = arith.constant 0 : i32
    %c0_i32_0 = arith.constant 0 : i32
    %c0_i32_1 = arith.constant 0 : i32
    return %c0_i32, %c0_i32_0 : i32, i32
  }
  func.func @transform_2(%arg0: i32, %arg1: i32) -> (i32, i32) {
    %c0_i32 = arith.constant 0 : i32
    %c0_i32_0 = arith.constant 0 : i32
    %c0_i32_1 = arith.constant 0 : i32
    return %c0_i32, %c0_i32_0 : i32, i32
  }
  func.func @transform_3(%arg0: i32, %arg1: i32) -> (i32, i32) {
    %c0_i32 = arith.constant 0 : i32
    %c0_i32_0 = arith.constant 0 : i32
    %c0_i32_1 = arith.constant 0 : i32
    return %c0_i32, %c0_i32_0 : i32, i32
  }
  func.func @transform_4(%arg0: i32, %arg1: i32) -> (i32, i32, i32) {
    %c0_i32 = arith.constant 0 : i32
    %c0_i32_0 = arith.constant 0 : i32
    return %arg0, %arg1, %c0_i32 : i32, i32, i32
  }
}

module attributes {stable_mosaic.version = 11 : i64} {
  func.func @_gemm_bias_tanh_kernel(%arg0: i32, %arg1: i32, %arg2: memref<1x512x16xbf16, #tpu.memory_space<vmem>>, %arg3: memref<1x16x128xbf16, #tpu.memory_space<vmem>>, %arg4: memref<1x128xf32, #tpu.memory_space<vmem>>, %arg5: memref<1x512x128xf32, #tpu.memory_space<vmem>>) attributes {dimension_semantics = [#tpu.dimension_semantics<parallel>, #tpu.dimension_semantics<parallel>], iteration_bounds = array<i64: 4, 1>, scalar_prefetch = 0 : i64, scratch_operands = 0 : i64, tpu.core_type = #tpu.core_type<tc>, window_params = [{transform_indices = @transform_0, window_bounds = array<i64: 1, 512, 16>}, {transform_indices = @transform_1, window_bounds = array<i64: 1, 16, 128>}, {pipeline_mode = #tpu.pipeline_mode<synchronous>, transform_indices = @transform_2, window_bounds = array<i64: 1, 128>}, {transform_indices = @transform_3, window_bounds = array<i64: 1, 512, 128>}]} {
    %c0 = arith.constant 0 : index
    %c0_0 = arith.constant 0 : index
    %c0_1 = arith.constant 0 : index
    %0 = vector.load %arg2[%c0, %c0_0, %c0_1] : memref<1x512x16xbf16, #tpu.memory_space<vmem>>, vector<1x512x16xbf16>
    %1 = vector.shape_cast %0 : vector<1x512x16xbf16> to vector<512x16xbf16>
    %c0_2 = arith.constant 0 : index
    %c0_3 = arith.constant 0 : index
    %c0_4 = arith.constant 0 : index
    %2 = vector.load %arg3[%c0_2, %c0_3, %c0_4] : memref<1x16x128xbf16, #tpu.memory_space<vmem>>, vector<1x16x128xbf16>
    %3 = vector.shape_cast %2 : vector<1x16x128xbf16> to vector<16x128xbf16>
    %cst = arith.constant dense<0.000000e+00> : vector<512x128xf32>
    %4 = tpu.matmul %1, %3, %cst {dimension_numbers = #tpu.dot_dimension_numbers<[1], [0], [0], [1], [0, 0, 1, 1], [], []>} : vector<512x16xbf16>, vector<16x128xbf16>, vector<512x128xf32> -> vector<512x128xf32>
    %c0_5 = arith.constant 0 : index
    %c0_6 = arith.constant 0 : index
    %5 = vector.load %arg4[%c0_5, %c0_6] : memref<1x128xf32, #tpu.memory_space<vmem>>, vector<1x128xf32>
    %6 = vector.broadcast %5 : vector<1x128xf32> to vector<512x128xf32>
    %7 = arith.addf %4, %6 : vector<512x128xf32>
    %8 = math.tanh %7 : vector<512x128xf32>
    %c0_7 = arith.constant 0 : index
    %c0_8 = arith.constant 0 : index
    %c0_9 = arith.constant 0 : index
    %9 = vector.load %arg5[%c0_7, %c0_8, %c0_9] : memref<1x512x128xf32, #tpu.memory_space<vmem>>, vector<1x512x128xf32>
    %10 = vector.shape_cast %9 : vector<1x512x128xf32> to vector<512x128xf32>
    %11 = vector.shape_cast %8 : vector<512x128xf32> to vector<1x512x128xf32>
    tpu.vector_store %arg5[%c0_7, %c0_8, %c0_9], %11 {strides = array<i32>} : memref<1x512x128xf32, #tpu.memory_space<vmem>>, vector<1x512x128xf32>,
    return
  }
  func.func @transform_0(%arg0: i32, %arg1: i32) -> (i32, i32, i32) {
    %c0_i32 = arith.constant 0 : i32
    %c0_i32_0 = arith.constant 0 : i32
    return %arg0, %arg1, %c0_i32 : i32, i32, i32
  }
  func.func @transform_1(%arg0: i32, %arg1: i32) -> (i32, i32, i32) {
    %c0_i32 = arith.constant 0 : i32
    %c0_i32_0 = arith.constant 0 : i32
    %c0_i32_1 = arith.constant 0 : i32
    return %arg0, %c0_i32, %c0_i32_0 : i32, i32, i32
  }
  func.func @transform_2(%arg0: i32, %arg1: i32) -> (i32, i32) {
    %c0_i32 = arith.constant 0 : i32
    %c0_i32_0 = arith.constant 0 : i32
    %c0_i32_1 = arith.constant 0 : i32
    return %c0_i32, %c0_i32_0 : i32, i32
  }
  func.func @transform_3(%arg0: i32, %arg1: i32) -> (i32, i32, i32) {
    %c0_i32 = arith.constant 0 : i32
    %c0_i32_0 = arith.constant 0 : i32
    return %arg0, %arg1, %c0_i32 : i32, i32, i32
  }
}

</mosaic_0001>

<llo_original>
// kernel: generator_forward.8
$region0: #{generator_forward.8}
  #allocation0 [shape = 'u32[]', space=smem, size = 0x4, offset = 0x4, fixed_abs, tag = 'smem constant byte address 0x4 - core index']
  #allocation1 [shape = 'u32[144,128]{1,0:T(1,128)}', space=vmem, size = 0x12000, scoped, tag = 'internal scratch']
  %s0 = inlined_call_operand.vmem [shape: bf16[2,32], index: 0, kind: input, shape index: {}]
  %s1 = inlined_call_operand.vmem [shape: bf16[32,128], index: 1, kind: input, shape index: {}]
  %s2 = inlined_call_operand.hbm [shape: f32[1,128], index: 2, kind: input, shape index: {}]
  %s3 = inlined_call_operand.vmem [shape: f32[2,128], index: 3, kind: output, shape index: {}]
  %s4 = sld [smem:[#allocation0]]
  $region26: #{generator_forward.8} parent=0
    _
  %s6 = ssub.s32 1, %s4
  %s7 = scalar_select 0, %s6, %s4
  $region1: #{generator_forward.8} parent=0
    #allocation2 [shape = 'u8[512]{0}', space=vmem, size = 0x400, scoped, tag = 'input window, operand 2, single buffered']
    #allocation3 [shape = 's32[1]{0}', space=sflag, size = 0x4, scoped, tag = 'scoped memory for generator_forward.8']
    %8 = vsyncpa [#allocation3], 0
    // Predicated region
    $region2: #{generator_forward.8} parent=1 // pred_check
      _
    $region3: #{generator_forward.8} parent=1 // pred_check_branch
      %10 = sbr.rel (0) target = $region5
    $region4: #{generator_forward.8} parent=1 // pred_region
      _
    $region5: #{generator_forward.8} parent=1 // pred_fallthru
      _
    // Predicated region
    $region6: #{generator_forward.8} parent=1 // pred_check
      _
    $region7: #{generator_forward.8} parent=1 // pred_check_branch
      %12 = sbr.rel (0) target = $region9
    $region8: #{generator_forward.8} parent=1 // pred_region
      _
    $region9: #{generator_forward.8} parent=1 // pred_fallthru
      _
    // Predicated region
    $region10: #{generator_forward.8} parent=1 // pred_check
      _
    $region11: #{generator_forward.8} parent=1 // pred_check_branch
      %14 = sbr.rel (0) target = $region13
    $region12: #{generator_forward.8} parent=1 // pred_region
      %s16 = ssub.s32 16, 16
      %17 = vsyncadd [#allocation3], %s16
      %s19 = sshll.u32 [#allocation2], 4
      %s20 = int_to_ptr.vmem [resolvable:$true] %s19
      %22 = dma.hbm_to_vmem [thread:$0]  %s2, 16, %s20, [#allocation3]
    $region13: #{generator_forward.8} parent=1 // pred_fallthru
      _
    // Predicated region
    $region14: #{generator_forward.8} parent=1 // pred_check
      _
    $region15: #{generator_forward.8} parent=1 // pred_check_branch
      %24 = sbr.rel (0) target = $region17
    $region16: #{generator_forward.8} parent=1 // pred_region
      %25 = dma.done [#allocation3], 16
    $region17: #{generator_forward.8} parent=1 // pred_fallthru
      _
    %v27 = vld [vmem:[%s0] sm:$0x1]
    %v28 = vld [vmem:[%s1] sm:$0xf]
    %v29 = vld [vmem:[%s1 + $0x4] sm:$0xf]
    %v30 = vld [vmem:[%s1 + $0x8] sm:$0xf]
    %v31 = vld [vmem:[%s1 + $0xc] sm:$0xf]
    %v32 = vld [vmem:[#allocation2] sm:$0x1]
    %v34 = vlaneseq
    %v35 = vshrl.u32 %v34, 7
    %v36 = vsub.s32 0, %v35
    %v37 = vrot.slane %v32, %v36
    %v43 = vunpack.c.l.b16 %v28
    %v44 = vunpack.c.l.b16 %v29
    %v45 = vunpack.c.l.b16 %v30
    %v46 = vunpack.c.l.b16 %v31
    %v47 = vpack.c.b16 %v44, %v43
    %v48 = vpack.c.b16 %v46, %v45
    %vm51 = vcmask 261120
    %v53 = vsel %vm51, %v27, 0
    %55 = vmatprep.subr.bf16.mxu0 0
    %56 = vmatpush1.bf16.msra.mxu0 0
    %57 = vmatprep.subr.bf16.mxu0 0
    %58 = vmatpush1.bf16.msra.mxu0 0
    %59 = vmatprep.subr.bf16.mxu0 0
    %60 = vmatpush1.bf16.msra.mxu0 0
    %61 = vmatprep.subr.bf16.mxu0 0
    %62 = vmatpush1.bf16.msra.mxu0 0
    %63 = vmatprep.subr.bf16.mxu0 0
    %64 = vmatpush1.bf16.msra.mxu0 0
    %65 = vmatprep.subr.bf16.mxu0 0
    %66 = vmatpush1.bf16.msra.mxu0 0
    %67 = vmatprep.subr.bf16.mxu0 0
    %68 = vmatpush1.bf16.msra.mxu0 %v48
    %69 = vmatprep.subr.bf16.mxu0 0
    %70 = vmatpush1.bf16.msra.mxu0 %v47
    %71 = vmatprep.subr.bf16.mxu0 0
    %72 = vmatpush2.bf16.msra.mxu0 0
    %73 = vmatprep.subr.bf16.mxu0 0
    %74 = vmatpush2.bf16.msra.mxu0 0
    %75 = vmatprep.subr.bf16.mxu0 0
    %76 = vmatpush2.bf16.msra.mxu0 0
    %77 = vmatprep.subr.bf16.mxu0 0
    %78 = vmatpush2.bf16.msra.mxu0 0
    %79 = vmatprep.subr.bf16.mxu0 0
    %80 = vmatpush2.bf16.msra.mxu0 0
    %81 = vmatprep.subr.bf16.mxu0 0
    %82 = vmatpush2.bf16.msra.mxu0 0
    %83 = vmatprep.subr.bf16.mxu0 0
    %84 = vmatpush2.bf16.msra.mxu0 0
    %85 = vmatprep.subr.bf16.mxu0 0
    %86 = vmatpush2.bf16.msra.mxu0 0
    %87 = vmatprep.mubr.bf16.mxu0 0
    %88 = vmatmul.mubr.bf16.gmra.mxu0 %v53
    %v89 = vpop.f32.mrf.mxu0
    %v90 = vadd.f32 %v37, %v89
    %v91 = vpop.f32.mrf.mxu0
    %v92 = vpop.f32.mrf.mxu0
    %v93 = vpop.f32.mrf.mxu0
    %94 = vdwg.mxu0
    %95 = vst [vmem:[%s3] sm:$0x3] %v90
    // Predicated region
    $region18: #{generator_forward.8} parent=1 // pred_check
      _
    $region19: #{generator_forward.8} parent=1 // pred_check_branch
      %97 = sbr.rel (0) target = $region21
    $region20: #{generator_forward.8} parent=1 // pred_region
      _
    $region21: #{generator_forward.8} parent=1 // pred_fallthru
      _
    // Predicated region
    $region22: #{generator_forward.8} parent=1 // pred_check
      _
    $region23: #{generator_forward.8} parent=1 // pred_check_branch
      %99 = sbr.rel (0) target = $region25
    $region24: #{generator_forward.8} parent=1 // pred_region
      _
    $region25: #{generator_forward.8} parent=1 // pred_fallthru
      _
    %100 = vsyncpa [#allocation3], 1

// kernel: generator_forward.9
$region0: #{generator_forward.9}
  #allocation0 [shape = 'u32[]', space=smem, size = 0x4, offset = 0x4, fixed_abs, tag = 'smem constant byte address 0x4 - core index']
  #allocation1 [shape = 'u32[144,128]{1,0:T(1,128)}', space=vmem, size = 0x12000, scoped, tag = 'internal scratch']
  %s0 = inlined_call_operand.vmem [shape: bf16[4,8,128], index: 0, kind: input, shape index: {}]
  %s1 = inlined_call_operand.vmem [shape: bf16[4,128,128], index: 1, kind: input, shape index: {}]
  %s2 = inlined_call_operand.vmem [shape: f32[4,8,128], index: 2, kind: output, shape index: {0}]
  %s3 = inlined_call_operand.vmem [shape: f32[4,1,2,128], index: 3, kind: output, shape index: {1}]
  %4 = xla_tuple %s2, %s3
  %s5 = sld [smem:[#allocation0]]
  $region49: #{generator_forward.9} parent=0
    _
  %s7 = ssub.s32 1, %s5
  %s8 = scalar_select 0, %s7, %s5
  loop: start=0, step=1, limit=6
  $region2: #{generator_forward.9} parent=0 // loop_pre_header
    _
  $region3: #{generator_forward.9} parent=0 // loop_header
    %s10 = sphi 0, %s14
    %p11 = scmp.ge.s32.totalorder %s10, 6
    %s17 = sphi 0, %s29
    %s18 = sphi 0, %s25
    %s19 = sphi 0, %s17
    %s20 = sphi 0, %s18
    %s21 = sphi 0, %s19
    %s22 = sphi 0, %s20
    %s34 = sphi 0, %s36
    %s37 = sphi 0, %s34
    %s38 = sphi 0, %s37
    %s54 = sphi 0, %s38
    %s60 = sphi 0, %s62
    %s63 = sphi 0, %s60
    %s64 = sphi 0, %s63
    %s80 = sphi 0, %s64
    %s88 = sphi 0, %s90
    %s91 = sphi 0, %s88
    %s92 = sphi 0, %s91
    %s108 = sphi 0, %s92
    %s116 = sphi 0, %s118
    %s119 = sphi 0, %s116
    %s120 = sphi 0, %s119
    %s136 = sphi 0, %s120
  $region4: #{generator_forward.9} parent=0 // loop_header_branch
    %13 = sbr.rel (%p11) target = $region8
  $region5: #{generator_forward.9} parent=0 // loop_body
    %s15 = ssub.s32 %s10, 1
    %s16 = ssub.s32 %s10, 2
    %s23 = sadd.s32 1, %s18
    %p24 = scmp.ge.s32.totalorder %s23, 1
    %s25 = scalar_select %p24, 0, %s23
    %s26 = sadd.s32 1, %s17
    %s27 = scalar_select %p24, %s26, %s17
    %p28 = scmp.ge.s32.totalorder %s27, 4
    %s29 = scalar_select %p28, 0, %s27
    %s30 = ssub.s32 %s17, %s29
    %s31 = ssub.s32 %s18, %s25
    %s32 = sor.u32 %s30, %s31
    %p33 = scmp.eq.s32.totalorder %s32, 0
    %s35 = sadd.s32 %s34, 1
    %s36 = scalar_select %p33, %s34, %s35
    %p39 = pneg %p33
    %p40 = scmp.eq.s32.totalorder %s10, 3
    %p41 = por %p39, %p40
    %p42 = scmp.ne.s32.totalorder %s34, %s37
    %p43 = scmp.eq.s32.totalorder %s10, 0
    %p44 = por %p42, %p43
    %p45 = scmp.ne.s32.totalorder %s34, %s37
    %p46 = scmp.eq.s32.totalorder %s15, 3
    %p47 = por %p45, %p46
    %p48 = scmp.ne.s32.totalorder %s37, %s38
    %p49 = scmp.eq.s32.totalorder %s15, 0
    %p50 = por %p48, %p49
    %p51 = scmp.ne.s32.totalorder %s37, %s38
    %p52 = scmp.eq.s32.totalorder %s16, 3
    %p53 = por %p51, %p52
    %p55 = scmp.ne.s32.totalorder %s38, %s54
    %p56 = scmp.eq.s32.totalorder %s16, 0
    %p57 = por %p55, %p56
    %s58 = ssub.s32 %s17, %s29
    %p59 = scmp.eq.s32.totalorder %s58, 0
    %s61 = sadd.s32 %s60, 1
    %s62 = scalar_select %p59, %s60, %s61
    %p65 = pneg %p59
    %p66 = scmp.eq.s32.totalorder %s10, 3
    %p67 = por %p65, %p66
    %p68 = scmp.ne.s32.totalorder %s60, %s63
    %p69 = scmp.eq.s32.totalorder %s10, 0
    %p70 = por %p68, %p69
    %p71 = scmp.ne.s32.totalorder %s60, %s63
    %p72 = scmp.eq.s32.totalorder %s15, 3
    %p73 = por %p71, %p72
    %p74 = scmp.ne.s32.totalorder %s63, %s64
    %p75 = scmp.eq.s32.totalorder %s15, 0
    %p76 = por %p74, %p75
    %p77 = scmp.ne.s32.totalorder %s63, %s64
    %p78 = scmp.eq.s32.totalorder %s16, 3
    %p79 = por %p77, %p78
    %p81 = scmp.ne.s32.totalorder %s64, %s80
    %p82 = scmp.eq.s32.totalorder %s16, 0
    %p83 = por %p81, %p82
    %s84 = ssub.s32 %s17, %s29
    %s85 = ssub.s32 %s18, %s25
    %s86 = sor.u32 %s84, %s85
    %p87 = scmp.eq.s32.totalorder %s86, 0
    %s89 = sadd.s32 %s88, 1
    %s90 = scalar_select %p87, %s88, %s89
    %p93 = pneg %p87
    %p94 = scmp.eq.s32.totalorder %s10, 3
    %p95 = por %p93, %p94
    %p96 = scmp.ne.s32.totalorder %s88, %s91
    %p97 = scmp.eq.s32.totalorder %s10, 0
    %p98 = por %p96, %p97
    %p99 = scmp.ne.s32.totalorder %s88, %s91
    %p100 = scmp.eq.s32.totalorder %s15, 3
    %p101 = por %p99, %p100
    %p102 = scmp.ne.s32.totalorder %s91, %s92
    %p103 = scmp.eq.s32.totalorder %s15, 0
    %p104 = por %p102, %p103
    %p105 = scmp.ne.s32.totalorder %s91, %s92
    %p106 = scmp.eq.s32.totalorder %s16, 3
    %p107 = por %p105, %p106
    %p109 = scmp.ne.s32.totalorder %s92, %s108
    %p110 = scmp.eq.s32.totalorder %s16, 0
    %p111 = por %p109, %p110
    %s112 = ssub.s32 %s17, %s29
    %s113 = ssub.s32 %s18, %s25
    %s114 = sor.u32 %s112, %s113
    %p115 = scmp.eq.s32.totalorder %s114, 0
    %s117 = sadd.s32 %s116, 1
    %s118 = scalar_select %p115, %s116, %s117
    %p121 = pneg %p115
    %p122 = scmp.eq.s32.totalorder %s10, 3
    %p123 = por %p121, %p122
    %p124 = scmp.ne.s32.totalorder %s116, %s119
    %p125 = scmp.eq.s32.totalorder %s10, 0
    %p126 = por %p124, %p125
    %p127 = scmp.ne.s32.totalorder %s116, %s119
    %p128 = scmp.eq.s32.totalorder %s15, 3
    %p129 = por %p127, %p128
    %p130 = scmp.ne.s32.totalorder %s119, %s120
    %p131 = scmp.eq.s32.totalorder %s15, 0
    %p132 = por %p130, %p131
    %p133 = scmp.ne.s32.totalorder %s119, %s120
    %p134 = scmp.eq.s32.totalorder %s16, 3
    %p135 = por %p133, %p134
    %p137 = scmp.ne.s32.totalorder %s120, %s136
    %p138 = scmp.eq.s32.totalorder %s16, 0
    %p139 = por %p137, %p138
    %p140 = scmp.le.s32.totalorder 1, %s10
    %p141 = scmp.lt.s32.totalorder %s10, 5
    %p142 = pnand %p140, %p141
    %p143 = pneg %p142
    // Predicated region
    $region9: #{generator_forward.9} parent=5 // pred_check
      _
    $region10: #{generator_forward.9} parent=5 // pred_check_branch
      %145 = sbr.rel (%p142) target = $region12
    $region11: #{generator_forward.9} parent=5 // pred_region
      %s146 = ssub.s32 %s10, 1
    $region12: #{generator_forward.9} parent=5 // pred_fallthru
      _
    %p147 = scmp.lt.s32.totalorder %s10, 4
    // Predicated region
    $region13: #{generator_forward.9} parent=5 // pred_check
      %p148 = pneg %p147
    $region14: #{generator_forward.9} parent=5 // pred_check_branch
      %150 = sbr.rel (%p148) target = $region16
    $region15: #{generator_forward.9} parent=5 // pred_region
      // Predicated region
      $region17: #{generator_forward.9} parent=15 // pred_check
        %p151 = pneg %p44
      $region18: #{generator_forward.9} parent=15 // pred_check_branch
        %153 = sbr.rel (%p151) target = $region20
      $region19: #{generator_forward.9} parent=15 // pred_region
        %p154 = scmp.lt.s32.totalorder %s17, 3
        %s155 = scalar_select %p154, %s17, 3
        %p156 = scmp.lt.s32.totalorder %s18, 0
        %s157 = scalar_select %p156, %s18, 0
        %s158 = sadd.s32 %s157, %s155
        %s159 = smul.addr %s158, 4
        %s160 = scalar_lea.vmem %s0, %s159
      $region20: #{generator_forward.9} parent=15 // pred_fallthru
        _
      // Predicated region
      $region21: #{generator_forward.9} parent=15 // pred_check
        %p161 = pneg %p70
      $region22: #{generator_forward.9} parent=15 // pred_check_branch
        %163 = sbr.rel (%p161) target = $region24
      $region23: #{generator_forward.9} parent=15 // pred_region
        %p164 = scmp.lt.s32.totalorder %s17, 3
        %s165 = scalar_select %p164, %s17, 3
        %s166 = smul.addr %s165, 16
        %s167 = smul.addr %s166, 4
        %s168 = scalar_lea.vmem %s1, %s167
      $region24: #{generator_forward.9} parent=15 // pred_fallthru
        _
    $region16: #{generator_forward.9} parent=5 // pred_fallthru
      _
    %p169 = scmp.le.s32.totalorder 1, %s10
    %p170 = scmp.lt.s32.totalorder %s10, 5
    %p171 = pnand %p169, %p170
    %p172 = pneg %p171
    // Predicated region
    $region25: #{generator_forward.9} parent=5 // pred_check
      _
    $region26: #{generator_forward.9} parent=5 // pred_check_branch
      %174 = sbr.rel (%p171) target = $region28
    $region27: #{generator_forward.9} parent=5 // pred_region
      %s175 = ssub.s32 %s10, 1
      %p176 = scmp.lt.s32.totalorder %s19, 3
      %s177 = scalar_select %p176, %s19, 3
      %p178 = scmp.lt.s32.totalorder %s20, 0
      %s179 = scalar_select %p178, %s20, 0
      %s180 = sadd.s32 %s179, %s177
      %s181 = smul.addr %s180, 4
      %s182 = scalar_lea.vmem %s0, %s181
      %p183 = pneg %p50
      %p184 = pneg %p47
      %p185 = scmp.lt.s32.totalorder %s19, 3
      %s186 = scalar_select %p185, %s19, 3
      %s187 = smul.addr %s186, 16
      %s188 = smul.addr %s187, 4
      %s189 = scalar_lea.vmem %s1, %s188
      %p190 = pneg %p76
      %p191 = pneg %p73
      %p192 = pneg %p104
      %p193 = pneg %p101
      %p194 = scmp.lt.s32.totalorder %s19, 3
      %s195 = scalar_select %p194, %s19, 3
      %p196 = scmp.lt.s32.totalorder %s20, 0
      %s197 = scalar_select %p196, %s20, 0
      %s198 = sadd.s32 %s197, %s195
      %s199 = smul.addr %s198, 8
      %s200 = scalar_lea.vmem %s2, %s199
      %p201 = pneg %p132
      %p202 = pneg %p129
      %p203 = scmp.lt.s32.totalorder %s19, 3
      %s204 = scalar_select %p203, %s19, 3
      %p205 = scmp.lt.s32.totalorder %s20, 0
      %s206 = scalar_select %p205, %s20, 0
      %s207 = sadd.s32 %s206, %s204
      %s208 = smul.addr %s207, 2
      %s209 = scalar_lea.vmem %s3, %s208
      %p210 = scmp.lt.s32.totalorder %s19, 3
      %s211 = scalar_select %p210, %s19, 3
      %p212 = scmp.lt.s32.totalorder %s20, 0
      %s213 = scalar_select %p212, %s20, 0
      %s214 = sadd.s32 %s213, %s211
      %s215 = smul.addr %s214, 4
      %s216 = scalar_lea.vmem %s0, %s215
      %p217 = scmp.lt.s32.totalorder %s19, 3
      %s218 = scalar_select %p217, %s19, 3
      %s219 = smul.addr %s218, 16
      %s220 = smul.addr %s219, 4
      %s221 = scalar_lea.vmem %s1, %s220
      %p222 = scmp.lt.s32.totalorder %s19, 3
      %s223 = scalar_select %p222, %s19, 3
      %p224 = scmp.lt.s32.totalorder %s20, 0
      %s225 = scalar_select %p224, %s20, 0
      %s226 = sadd.s32 %s225, %s223
      %s227 = smul.addr %s226, 8
      %s228 = scalar_lea.vmem %s2, %s227
      %p229 = scmp.lt.s32.totalorder %s19, 3
      %s230 = scalar_select %p229, %s19, 3
      %p231 = scmp.lt.s32.totalorder %s20, 0
      %s232 = scalar_select %p231, %s20, 0
      %s233 = sadd.s32 %s232, %s230
      %s234 = smul.addr %s233, 2
      %s235 = scalar_lea.vmem %s3, %s234
      %v237 = vld [vmem:[%s216] sm:$0xf]
      %v238 = vld [vmem:[%s221] sm:$0xf]
      %v239 = vld [vmem:[%s221 + $0x4] sm:$0xf]
      %v240 = vld [vmem:[%s221 + $0x8] sm:$0xf]
      %v241 = vld [vmem:[%s221 + $0xc] sm:$0xf]
      %v242 = vld [vmem:[%s221 + $0x10] sm:$0xf]
      %v243 = vld [vmem:[%s221 + $0x14] sm:$0xf]
      %v244 = vld [vmem:[%s221 + $0x18] sm:$0xf]
      %v245 = vld [vmem:[%s221 + $0x1c] sm:$0xf]
      %v246 = vld [vmem:[%s221 + $0x20] sm:$0xf]
      %v247 = vld [vmem:[%s221 + $0x24] sm:$0xf]
      %v248 = vld [vmem:[%s221 + $0x28] sm:$0xf]
      %v249 = vld [vmem:[%s221 + $0x2c] sm:$0xf]
      %v250 = vld [vmem:[%s221 + $0x30] sm:$0xf]
      %v251 = vld [vmem:[%s221 + $0x34] sm:$0xf]
      %v252 = vld [vmem:[%s221 + $0x38] sm:$0xf]
      %v253 = vld [vmem:[%s221 + $0x3c] sm:$0xf]
      %v270 = vunpack.c.l.b16 %v238
      %v271 = vunpack.c.l.b16 %v239
      %v272 = vunpack.c.l.b16 %v240
      %v273 = vunpack.c.l.b16 %v241
      %v274 = vunpack.c.l.b16 %v242
      %v275 = vunpack.c.l.b16 %v243
      %v276 = vunpack.c.l.b16 %v244
      %v277 = vunpack.c.l.b16 %v245
      %v278 = vunpack.c.l.b16 %v246
      %v279 = vunpack.c.l.b16 %v247
      %v280 = vunpack.c.l.b16 %v248
      %v281 = vunpack.c.l.b16 %v249
      %v282 = vunpack.c.l.b16 %v250
      %v283 = vunpack.c.l.b16 %v251
      %v284 = vunpack.c.l.b16 %v252
      %v285 = vunpack.c.l.b16 %v253
      %v286 = vpack.c.b16 %v271, %v270
      %v287 = vpack.c.b16 %v273, %v272
      %v288 = vpack.c.b16 %v275, %v274
      %v289 = vpack.c.b16 %v277, %v276
      %v290 = vpack.c.b16 %v279, %v278
      %v291 = vpack.c.b16 %v281, %v280
      %v292 = vpack.c.b16 %v283, %v282
      %v293 = vpack.c.b16 %v285, %v284
      %302 = vmatprep.subr.bf16.mxu0 0
      %303 = vmatpush1.bf16.msra.mxu0 %v293
      %304 = vmatprep.subr.bf16.mxu0 0
      %305 = vmatpush1.bf16.msra.mxu0 %v292
      %306 = vmatprep.subr.bf16.mxu0 0
      %307 = vmatpush1.bf16.msra.mxu0 %v291
      %308 = vmatprep.subr.bf16.mxu0 0
      %309 = vmatpush1.bf16.msra.mxu0 %v290
      %310 = vmatprep.subr.bf16.mxu0 0
      %311 = vmatpush1.bf16.msra.mxu0 %v289
      %312 = vmatprep.subr.bf16.mxu0 0
      %313 = vmatpush1.bf16.msra.mxu0 %v288
      %314 = vmatprep.subr.bf16.mxu0 0
      %315 = vmatpush1.bf16.msra.mxu0 %v287
      %316 = vmatprep.subr.bf16.mxu0 0
      %317 = vmatpush1.bf16.msra.mxu0 %v286
      %318 = vmatprep.subr.bf16.mxu0 0
      %319 = vmatpush2.bf16.msra.mxu0 0
      %320 = vmatprep.subr.bf16.mxu0 0
      %321 = vmatpush2.bf16.msra.mxu0 0
      %322 = vmatprep.subr.bf16.mxu0 0
      %323 = vmatpush2.bf16.msra.mxu0 0
      %324 = vmatprep.subr.bf16.mxu0 0
      %325 = vmatpush2.bf16.msra.mxu0 0
      %326 = vmatprep.subr.bf16.mxu0 0
      %327 = vmatpush2.bf16.msra.mxu0 0
      %328 = vmatprep.subr.bf16.mxu0 0
      %329 = vmatpush2.bf16.msra.mxu0 0
      %330 = vmatprep.subr.bf16.mxu0 0
      %331 = vmatpush2.bf16.msra.mxu0 0
      %332 = vmatprep.subr.bf16.mxu0 0
      %333 = vmatpush2.bf16.msra.mxu0 0
      %334 = vmatprep.mubr.bf16.mxu0 0
      %335 = vmatmul.mubr.bf16.gmra.mxu0 %v237
      %v336 = vpop.f32.mrf.mxu0
      %v337 = vadd.f32 0.0, %v336
      %v338 = vpop.f32.mrf.mxu0
      %v339 = vpop.f32.mrf.mxu0
      %v340 = vpop.f32.mrf.mxu0
      %341 = vdwg.mxu0
      %342 = vst [vmem:[%s228] sm:$0xff] %v337
      %vm343 = vcmask 64512
      %v345 = vsel %vm343, 1.0, 0
      %347 = vmatprep.subr.mxu0 0.0
      %348 = vmatpush1.msra.mxu0 0.0
      %349 = vmatprep.subr.mxu0 0.0
      %350 = vmatpush1.msra.mxu0 0.0
      %351 = vmatprep.subr.mxu0 0.0
      %352 = vmatpush1.msra.mxu0 0.0
      %353 = vmatprep.subr.mxu0 0.0
      %354 = vmatpush1.msra.mxu0 0.0
      %355 = vmatprep.subr.mxu0 0.0
      %356 = vmatpush1.msra.mxu0 0.0
      %357 = vmatprep.subr.mxu0 0.0
      %358 = vmatpush1.msra.mxu0 0.0
      %359 = vmatprep.subr.mxu0 0.0
      %360 = vmatpush1.msra.mxu0 0.0
      %361 = vmatprep.subr.mxu0 0.0
      %362 = vmatpush1.msra.mxu0 0.0
      %363 = vmatprep.subr.mxu0 0.0
      %364 = vmatpush1.msra.mxu0 0.0
      %365 = vmatprep.subr.mxu0 0.0
      %366 = vmatpush1.msra.mxu0 0.0
      %367 = vmatprep.subr.mxu0 0.0
      %368 = vmatpush1.msra.mxu0 0.0
      %369 = vmatprep.subr.mxu0 0.0
      %370 = vmatpush1.msra.mxu0 0.0
      %371 = vmatprep.subr.mxu0 0.0
      %372 = vmatpush1.msra.mxu0 0.0
      %373 = vmatprep.subr.mxu0 0.0
      %374 = vmatpush1.msra.mxu0 0.0
      %375 = vmatprep.subr.mxu0 0.0
      %376 = vmatpush1.msra.mxu0 0.0
      %377 = vmatprep.subr.mxu0 0.0
      %378 = vmatpush1.msra.mxu0 %v337
      %379 = vmatprep.subr.mxu0 0.0
      %380 = vmatpush2.msra.mxu0 0.0
      %381 = vmatprep.subr.mxu0 0.0
      %382 = vmatpush2.msra.mxu0 0.0
      %383 = vmatprep.subr.mxu0 0.0
      %384 = vmatpush2.msra.mxu0 0.0
      %385 = vmatprep.subr.mxu0 0.0
      %386 = vmatpush2.msra.mxu0 0.0
      %387 = vmatprep.subr.mxu0 0.0
      %388 = vmatpush2.msra.mxu0 0.0
      %389 = vmatprep.subr.mxu0 0.0
      %390 = vmatpush2.msra.mxu0 0.0
      %391 = vmatprep.subr.mxu0 0.0
      %392 = vmatpush2.msra.mxu0 0.0
      %393 = vmatprep.subr.mxu0 0.0
      %394 = vmatpush2.msra.mxu0 0.0
      %395 = vmatprep.subr.mxu0 0.0
      %396 = vmatpush2.msra.mxu0 0.0
      %397 = vmatprep.subr.mxu0 0.0
      %398 = vmatpush2.msra.mxu0 0.0
      %399 = vmatprep.subr.mxu0 0.0
      %400 = vmatpush2.msra.mxu0 0.0
      %401 = vmatprep.subr.mxu0 0.0
      %402 = vmatpush2.msra.mxu0 0.0
      %403 = vmatprep.subr.mxu0 0.0
      %404 = vmatpush2.msra.mxu0 0.0
      %405 = vmatprep.subr.mxu0 0.0
      %406 = vmatpush2.msra.mxu0 0.0
      %407 = vmatprep.subr.mxu0 0.0
      %408 = vmatpush2.msra.mxu0 0.0
      %409 = vmatprep.subr.mxu0 0.0
      %410 = vmatpush2.msra.mxu0 0.0
      %411 = vmatprep.mubr.f32.mxu0 0.0
      %412 = vmatmul.mubr.f32.gmra.mxu0 %v345
      %v413 = vpop.f32.mrf.mxu0
      %v414 = vadd.f32 0.0, %v413
      %v415 = vpop.f32.mrf.mxu0
      %416 = vdwg.mxu0
      %v417 = vmul.f32 %v337, %v337
      %418 = vmatprep.subr.mxu0 0.0
      %419 = vmatpush1.msra.mxu0 0.0
      %420 = vmatprep.subr.mxu0 0.0
      %421 = vmatpush1.msra.mxu0 0.0
      %422 = vmatprep.subr.mxu0 0.0
      %423 = vmatpush1.msra.mxu0 0.0
      %424 = vmatprep.subr.mxu0 0.0
      %425 = vmatpush1.msra.mxu0 0.0
      %426 = vmatprep.subr.mxu0 0.0
      %427 = vmatpush1.msra.mxu0 0.0
      %428 = vmatprep.subr.mxu0 0.0
      %429 = vmatpush1.msra.mxu0 0.0
      %430 = vmatprep.subr.mxu0 0.0
      %431 = vmatpush1.msra.mxu0 0.0
      %432 = vmatprep.subr.mxu0 0.0
      %433 = vmatpush1.msra.mxu0 0.0
      %434 = vmatprep.subr.mxu0 0.0
      %435 = vmatpush1.msra.mxu0 0.0
      %436 = vmatprep.subr.mxu0 0.0
      %437 = vmatpush1.msra.mxu0 0.0
      %438 = vmatprep.subr.mxu0 0.0
      %439 = vmatpush1.msra.mxu0 0.0
      %440 = vmatprep.subr.mxu0 0.0
      %441 = vmatpush1.msra.mxu0 0.0
      %442 = vmatprep.subr.mxu0 0.0
      %443 = vmatpush1.msra.mxu0 0.0
      %444 = vmatprep.subr.mxu0 0.0
      %445 = vmatpush1.msra.mxu0 0.0
      %446 = vmatprep.subr.mxu0 0.0
      %447 = vmatpush1.msra.mxu0 0.0
      %448 = vmatprep.subr.mxu0 0.0
      %449 = vmatpush1.msra.mxu0 %v417
      %450 = vmatprep.subr.mxu0 0.0
      %451 = vmatpush2.msra.mxu0 0.0
      %452 = vmatprep.subr.mxu0 0.0
      %453 = vmatpush2.msra.mxu0 0.0
      %454 = vmatprep.subr.mxu0 0.0
      %455 = vmatpush2.msra.mxu0 0.0
      %456 = vmatprep.subr.mxu0 0.0
      %457 = vmatpush2.msra.mxu0 0.0
      %458 = vmatprep.subr.mxu0 0.0
      %459 = vmatpush2.msra.mxu0 0.0
      %460 = vmatprep.subr.mxu0 0.0
      %461 = vmatpush2.msra.mxu0 0.0
      %462 = vmatprep.subr.mxu0 0.0
      %463 = vmatpush2.msra.mxu0 0.0
      %464 = vmatprep.subr.mxu0 0.0
      %465 = vmatpush2.msra.mxu0 0.0
      %466 = vmatprep.subr.mxu0 0.0
      %467 = vmatpush2.msra.mxu0 0.0
      %468 = vmatprep.subr.mxu0 0.0
      %469 = vmatpush2.msra.mxu0 0.0
      %470 = vmatprep.subr.mxu0 0.0
      %471 = vmatpush2.msra.mxu0 0.0
      %472 = vmatprep.subr.mxu0 0.0
      %473 = vmatpush2.msra.mxu0 0.0
      %474 = vmatprep.subr.mxu0 0.0
      %475 = vmatpush2.msra.mxu0 0.0
      %476 = vmatprep.subr.mxu0 0.0
      %477 = vmatpush2.msra.mxu0 0.0
      %478 = vmatprep.subr.mxu0 0.0
      %479 = vmatpush2.msra.mxu0 0.0
      %480 = vmatprep.subr.mxu0 0.0
      %481 = vmatpush2.msra.mxu0 0.0
      %482 = vmatprep.mubr.f32.mxu0 0.0
      %483 = vmatmul.mubr.f32.gmra.mxu0 %v345
      %v484 = vpop.f32.mrf.mxu0
      %v485 = vadd.f32 0.0, %v484
      %v486 = vpop.f32.mrf.mxu0
      %487 = vdwg.mxu0
      %v489 = vrot.slane %v485, 7
      %vm491 = vcmask 1040384
      %v492 = vsel %vm491, %v414, %v489
      %493 = vst [vmem:[%s235] sm:$0x3] %v492
      %p494 = scmp.lt.s32.totalorder %s19, 3
      %s495 = scalar_select %p494, %s19, 3
      %p496 = scmp.lt.s32.totalorder %s20, 0
      %s497 = scalar_select %p496, %s20, 0
      %s498 = sadd.s32 %s497, %s495
      %s499 = smul.addr %s498, 8
      %s500 = scalar_lea.vmem %s2, %s499
      %p501 = scmp.lt.s32.totalorder %s19, 3
      %s502 = scalar_select %p501, %s19, 3
      %p503 = scmp.lt.s32.totalorder %s20, 0
      %s504 = scalar_select %p503, %s20, 0
      %s505 = sadd.s32 %s504, %s502
      %s506 = smul.addr %s505, 2
      %s507 = scalar_lea.vmem %s3, %s506
      // Predicated region
      $region29: #{generator_forward.9} parent=27 // pred_check
        %p508 = pneg %p101
      $region30: #{generator_forward.9} parent=27 // pred_check_branch
        %510 = sbr.rel (%p508) target = $region32
      $region31: #{generator_forward.9} parent=27 // pred_region
        _
      $region32: #{generator_forward.9} parent=27 // pred_fallthru
        _
      // Predicated region
      $region33: #{generator_forward.9} parent=27 // pred_check
        %p511 = pneg %p129
      $region34: #{generator_forward.9} parent=27 // pred_check_branch
        %513 = sbr.rel (%p511) target = $region36
      $region35: #{generator_forward.9} parent=27 // pred_region
        _
      $region36: #{generator_forward.9} parent=27 // pred_fallthru
        _
    $region28: #{generator_forward.9} parent=5 // pred_fallthru
      _
    %p514 = scmp.le.s32.totalorder 2, %s10
    // Predicated region
    $region37: #{generator_forward.9} parent=5 // pred_check
      %p515 = pneg %p514
    $region38: #{generator_forward.9} parent=5 // pred_check_branch
      %517 = sbr.rel (%p515) target = $region40
    $region39: #{generator_forward.9} parent=5 // pred_region
      %s518 = ssub.s32 %s10, 2
      // Predicated region
      $region41: #{generator_forward.9} parent=39 // pred_check
        %p519 = pneg %p107
      $region42: #{generator_forward.9} parent=39 // pred_check_branch
        %521 = sbr.rel (%p519) target = $region44
      $region43: #{generator_forward.9} parent=39 // pred_region
        %p522 = scmp.lt.s32.totalorder %s21, 3
        %s523 = scalar_select %p522, %s21, 3
        %p524 = scmp.lt.s32.totalorder %s22, 0
        %s525 = scalar_select %p524, %s22, 0
        %s526 = sadd.s32 %s525, %s523
        %s527 = smul.addr %s526, 8
        %s528 = scalar_lea.vmem %s2, %s527
      $region44: #{generator_forward.9} parent=39 // pred_fallthru
        _
      // Predicated region
      $region45: #{generator_forward.9} parent=39 // pred_check
        %p529 = pneg %p135
      $region46: #{generator_forward.9} parent=39 // pred_check_branch
        %531 = sbr.rel (%p529) target = $region48
      $region47: #{generator_forward.9} parent=39 // pred_region
        %p532 = scmp.lt.s32.totalorder %s21, 3
        %s533 = scalar_select %p532, %s21, 3
        %p534 = scmp.lt.s32.totalorder %s22, 0
        %s535 = scalar_select %p534, %s22, 0
        %s536 = sadd.s32 %s535, %s533
        %s537 = smul.addr %s536, 2
        %s538 = scalar_lea.vmem %s3, %s537
      $region48: #{generator_forward.9} parent=39 // pred_fallthru
        _
    $region40: #{generator_forward.9} parent=5 // pred_fallthru
      _
  $region6: #{generator_forward.9} parent=0 // loop_footer
    %s14 = sadd.s32 1, %s10
  $region7: #{generator_forward.9} parent=0 // loop_footer_branch
    %9 = sbr.rel target = $region3
  $region8: #{generator_forward.9} parent=0 // loop_exit
    _

// kernel: generator_forward.10
$region0: #{generator_forward.10}
  #allocation0 [shape = 'u32[]', space=smem, size = 0x4, offset = 0x4, fixed_abs, tag = 'smem constant byte address 0x4 - core index']
  #allocation1 [shape = 'u32[144,128]{1,0:T(1,128)}', space=vmem, size = 0x12000, scoped, tag = 'internal scratch']
  %s0 = inlined_call_operand.vmem [shape: f32[4,8,128], index: 0, kind: input, shape index: {}]
  %s1 = inlined_call_operand.vmem [shape: f32[2,128], index: 1, kind: input, shape index: {}]
  %s2 = inlined_call_operand.vmem [shape: f32[1,128], index: 2, kind: input, shape index: {}]
  %s3 = inlined_call_operand.vmem [shape: f32[1,128], index: 3, kind: input, shape index: {}]
  %s4 = inlined_call_operand.vmem [shape: bf16[4,8,128], index: 4, kind: output, shape index: {}]
  %s5 = sld [smem:[#allocation0]]
  $region49: #{generator_forward.10} parent=0
    _
  %s7 = ssub.s32 1, %s5
  %s8 = scalar_select 0, %s7, %s5
  loop: start=0, step=1, limit=6
  $region2: #{generator_forward.10} parent=0 // loop_pre_header
    _
  $region3: #{generator_forward.10} parent=0 // loop_header
    %s10 = sphi 0, %s14
    %p11 = scmp.ge.s32.totalorder %s10, 6
    %s17 = sphi 0, %s29
    %s18 = sphi 0, %s25
    %s19 = sphi 0, %s17
    %s20 = sphi 0, %s18
    %s21 = sphi 0, %s19
    %s22 = sphi 0, %s20
    %s34 = sphi 0, %s36
    %s37 = sphi 0, %s34
    %s38 = sphi 0, %s37
    %s54 = sphi 0, %s38
    %s58 = sphi 0, %s58
    %s60 = sphi 0, %s58
    %s61 = sphi 0, %s60
    %s75 = sphi 0, %s61
    %s79 = sphi 0, %s79
    %s81 = sphi 0, %s79
    %s82 = sphi 0, %s81
    %s96 = sphi 0, %s82
    %s100 = sphi 0, %s100
    %s102 = sphi 0, %s100
    %s103 = sphi 0, %s102
    %s117 = sphi 0, %s103
    %s125 = sphi 0, %s127
    %s128 = sphi 0, %s125
    %s129 = sphi 0, %s128
    %s145 = sphi 0, %s129
  $region4: #{generator_forward.10} parent=0 // loop_header_branch
    %13 = sbr.rel (%p11) target = $region8
  $region5: #{generator_forward.10} parent=0 // loop_body
    %s15 = ssub.s32 %s10, 1
    %s16 = ssub.s32 %s10, 2
    %s23 = sadd.s32 1, %s18
    %p24 = scmp.ge.s32.totalorder %s23, 1
    %s25 = scalar_select %p24, 0, %s23
    %s26 = sadd.s32 1, %s17
    %s27 = scalar_select %p24, %s26, %s17
    %p28 = scmp.ge.s32.totalorder %s27, 4
    %s29 = scalar_select %p28, 0, %s27
    %s30 = ssub.s32 %s17, %s29
    %s31 = ssub.s32 %s18, %s25
    %s32 = sor.u32 %s30, %s31
    %p33 = scmp.eq.s32.totalorder %s32, 0
    %s35 = sadd.s32 %s34, 1
    %s36 = scalar_select %p33, %s34, %s35
    %p39 = pneg %p33
    %p40 = scmp.eq.s32.totalorder %s10, 3
    %p41 = por %p39, %p40
    %p42 = scmp.ne.s32.totalorder %s34, %s37
    %p43 = scmp.eq.s32.totalorder %s10, 0
    %p44 = por %p42, %p43
    %p45 = scmp.ne.s32.totalorder %s34, %s37
    %p46 = scmp.eq.s32.totalorder %s15, 3
    %p47 = por %p45, %p46
    %p48 = scmp.ne.s32.totalorder %s37, %s38
    %p49 = scmp.eq.s32.totalorder %s15, 0
    %p50 = por %p48, %p49
    %p51 = scmp.ne.s32.totalorder %s37, %s38
    %p52 = scmp.eq.s32.totalorder %s16, 3
    %p53 = por %p51, %p52
    %p55 = scmp.ne.s32.totalorder %s38, %s54
    %p56 = scmp.eq.s32.totalorder %s16, 0
    %p57 = por %p55, %p56
    %s59 = sadd.s32 %s58, 1
    %p62 = scmp.eq.s32.totalorder %s10, 3
    %p63 = scmp.ne.s32.totalorder %s58, %s60
    %p64 = scmp.eq.s32.totalorder %s10, 0
    %p65 = por %p63, %p64
    %p66 = scmp.ne.s32.totalorder %s58, %s60
    %p67 = scmp.eq.s32.totalorder %s15, 3
    %p68 = por %p66, %p67
    %p69 = scmp.ne.s32.totalorder %s60, %s61
    %p70 = scmp.eq.s32.totalorder %s15, 0
    %p71 = por %p69, %p70
    %p72 = scmp.ne.s32.totalorder %s60, %s61
    %p73 = scmp.eq.s32.totalorder %s16, 3
    %p74 = por %p72, %p73
    %p76 = scmp.ne.s32.totalorder %s61, %s75
    %p77 = scmp.eq.s32.totalorder %s16, 0
    %p78 = por %p76, %p77
    %s80 = sadd.s32 %s79, 1
    %p83 = scmp.eq.s32.totalorder %s10, 3
    %p84 = scmp.ne.s32.totalorder %s79, %s81
    %p85 = scmp.eq.s32.totalorder %s10, 0
    %p86 = por %p84, %p85
    %p87 = scmp.ne.s32.totalorder %s79, %s81
    %p88 = scmp.eq.s32.totalorder %s15, 3
    %p89 = por %p87, %p88
    %p90 = scmp.ne.s32.totalorder %s81, %s82
    %p91 = scmp.eq.s32.totalorder %s15, 0
    %p92 = por %p90, %p91
    %p93 = scmp.ne.s32.totalorder %s81, %s82
    %p94 = scmp.eq.s32.totalorder %s16, 3
    %p95 = por %p93, %p94
    %p97 = scmp.ne.s32.totalorder %s82, %s96
    %p98 = scmp.eq.s32.totalorder %s16, 0
    %p99 = por %p97, %p98
    %s101 = sadd.s32 %s100, 1
    %p104 = scmp.eq.s32.totalorder %s10, 3
    %p105 = scmp.ne.s32.totalorder %s100, %s102
    %p106 = scmp.eq.s32.totalorder %s10, 0
    %p107 = por %p105, %p106
    %p108 = scmp.ne.s32.totalorder %s100, %s102
    %p109 = scmp.eq.s32.totalorder %s15, 3
    %p110 = por %p108, %p109
    %p111 = scmp.ne.s32.totalorder %s102, %s103
    %p112 = scmp.eq.s32.totalorder %s15, 0
    %p113 = por %p111, %p112
    %p114 = scmp.ne.s32.totalorder %s102, %s103
    %p115 = scmp.eq.s32.totalorder %s16, 3
    %p116 = por %p114, %p115
    %p118 = scmp.ne.s32.totalorder %s103, %s117
    %p119 = scmp.eq.s32.totalorder %s16, 0
    %p120 = por %p118, %p119
    %s121 = ssub.s32 %s17, %s29
    %s122 = ssub.s32 %s18, %s25
    %s123 = sor.u32 %s121, %s122
    %p124 = scmp.eq.s32.totalorder %s123, 0
    %s126 = sadd.s32 %s125, 1
    %s127 = scalar_select %p124, %s125, %s126
    %p130 = pneg %p124
    %p131 = scmp.eq.s32.totalorder %s10, 3
    %p132 = por %p130, %p131
    %p133 = scmp.ne.s32.totalorder %s125, %s128
    %p134 = scmp.eq.s32.totalorder %s10, 0
    %p135 = por %p133, %p134
    %p136 = scmp.ne.s32.totalorder %s125, %s128
    %p137 = scmp.eq.s32.totalorder %s15, 3
    %p138 = por %p136, %p137
    %p139 = scmp.ne.s32.totalorder %s128, %s129
    %p140 = scmp.eq.s32.totalorder %s15, 0
    %p141 = por %p139, %p140
    %p142 = scmp.ne.s32.totalorder %s128, %s129
    %p143 = scmp.eq.s32.totalorder %s16, 3
    %p144 = por %p142, %p143
    %p146 = scmp.ne.s32.totalorder %s129, %s145
    %p147 = scmp.eq.s32.totalorder %s16, 0
    %p148 = por %p146, %p147
    %p149 = scmp.le.s32.totalorder 1, %s10
    %p150 = scmp.lt.s32.totalorder %s10, 5
    %p151 = pnand %p149, %p150
    %p152 = pneg %p151
    // Predicated region
    $region9: #{generator_forward.10} parent=5 // pred_check
      _
    $region10: #{generator_forward.10} parent=5 // pred_check_branch
      %154 = sbr.rel (%p151) target = $region12
    $region11: #{generator_forward.10} parent=5 // pred_region
      %s155 = ssub.s32 %s10, 1
      // Predicated region
      $region13: #{generator_forward.10} parent=11 // pred_check
        %p156 = pneg %p71
      $region14: #{generator_forward.10} parent=11 // pred_check_branch
        %158 = sbr.rel (%p156) target = $region16
      $region15: #{generator_forward.10} parent=11 // pred_region
        _
      $region16: #{generator_forward.10} parent=11 // pred_fallthru
        _
      // Predicated region
      $region17: #{generator_forward.10} parent=11 // pred_check
        %p159 = pneg %p92
      $region18: #{generator_forward.10} parent=11 // pred_check_branch
        %161 = sbr.rel (%p159) target = $region20
      $region19: #{generator_forward.10} parent=11 // pred_region
        _
      $region20: #{generator_forward.10} parent=11 // pred_fallthru
        _
      // Predicated region
      $region21: #{generator_forward.10} parent=11 // pred_check
        %p162 = pneg %p113
      $region22: #{generator_forward.10} parent=11 // pred_check_branch
        %164 = sbr.rel (%p162) target = $region24
      $region23: #{generator_forward.10} parent=11 // pred_region
        _
      $region24: #{generator_forward.10} parent=11 // pred_fallthru
        _
    $region12: #{generator_forward.10} parent=5 // pred_fallthru
      _
    %p165 = scmp.lt.s32.totalorder %s10, 4
    // Predicated region
    $region25: #{generator_forward.10} parent=5 // pred_check
      %p166 = pneg %p165
    $region26: #{generator_forward.10} parent=5 // pred_check_branch
      %168 = sbr.rel (%p166) target = $region28
    $region27: #{generator_forward.10} parent=5 // pred_region
      // Predicated region
      $region29: #{generator_forward.10} parent=27 // pred_check
        %p169 = pneg %p44
      $region30: #{generator_forward.10} parent=27 // pred_check_branch
        %171 = sbr.rel (%p169) target = $region32
      $region31: #{generator_forward.10} parent=27 // pred_region
        %p172 = scmp.lt.s32.totalorder %s17, 3
        %s173 = scalar_select %p172, %s17, 3
        %p174 = scmp.lt.s32.totalorder %s18, 0
        %s175 = scalar_select %p174, %s18, 0
        %s176 = sadd.s32 %s175, %s173
        %s177 = smul.addr %s176, 8
        %s178 = scalar_lea.vmem %s0, %s177
      $region32: #{generator_forward.10} parent=27 // pred_fallthru
        _
    $region28: #{generator_forward.10} parent=5 // pred_fallthru
      _
    %p179 = scmp.le.s32.totalorder 1, %s10
    %p180 = scmp.lt.s32.totalorder %s10, 5
    %p181 = pnand %p179, %p180
    %p182 = pneg %p181
    // Predicated region
    $region33: #{generator_forward.10} parent=5 // pred_check
      _
    $region34: #{generator_forward.10} parent=5 // pred_check_branch
      %184 = sbr.rel (%p181) target = $region36
    $region35: #{generator_forward.10} parent=5 // pred_region
      %s185 = ssub.s32 %s10, 1
      %p186 = scmp.lt.s32.totalorder %s19, 3
      %s187 = scalar_select %p186, %s19, 3
      %p188 = scmp.lt.s32.totalorder %s20, 0
      %s189 = scalar_select %p188, %s20, 0
      %s190 = sadd.s32 %s189, %s187
      %s191 = smul.addr %s190, 8
      %s192 = scalar_lea.vmem %s0, %s191
      %p193 = pneg %p50
      %p194 = pneg %p47
      %p195 = pneg %p71
      %p196 = pneg %p68
      %p197 = pneg %p92
      %p198 = pneg %p89
      %p199 = pneg %p113
      %p200 = pneg %p110
      %p201 = pneg %p141
      %p202 = pneg %p138
      %p203 = scmp.lt.s32.totalorder %s19, 3
      %s204 = scalar_select %p203, %s19, 3
      %p205 = scmp.lt.s32.totalorder %s20, 0
      %s206 = scalar_select %p205, %s20, 0
      %s207 = sadd.s32 %s206, %s204
      %s208 = smul.addr %s207, 4
      %s209 = scalar_lea.vmem %s4, %s208
      %p210 = scmp.lt.s32.totalorder %s19, 3
      %s211 = scalar_select %p210, %s19, 3
      %p212 = scmp.lt.s32.totalorder %s20, 0
      %s213 = scalar_select %p212, %s20, 0
      %s214 = sadd.s32 %s213, %s211
      %s215 = smul.addr %s214, 8
      %s216 = scalar_lea.vmem %s0, %s215
      %p217 = scmp.lt.s32.totalorder %s19, 3
      %s218 = scalar_select %p217, %s19, 3
      %p219 = scmp.lt.s32.totalorder %s20, 0
      %s220 = scalar_select %p219, %s20, 0
      %s221 = sadd.s32 %s220, %s218
      %s222 = smul.addr %s221, 4
      %s223 = scalar_lea.vmem %s4, %s222
      %v224 = vld [vmem:[%s1] sm:$0x3]
      %v225 = vmul.f32 %v224, 0.03125
      %v226 = vmul.f32 %v225, %v225
      %v228 = vrot.slane %v226, 7
      %v230 = vsub.f32 %v225, %v228
      %v231 = vmax.f32 %v230, 0.0
      %v232 = vld [vmem:[%s2] sm:$0x1]
      %v233 = vadd.f32 %v231, 1e-05
      %v234 = vrsqrt.pop %v233
      %v237 = vunpack.c.l.s4 1966171168
      %v238 = vunpack.c.0.s8 %v237
      %v239 = vlaneseq
      %v240 = vshrl.u32 %v239, 7
      %v241 = vsub.s32 %v238, %v240
      %v242 = vrot.slane %v234, %v241
      %v243 = vcombine.high %v242, %v242
      %v245 = vunpack.c.l.s4 1966171168
      %v246 = vunpack.c.0.s8 %v245
      %v247 = vlaneseq
      %v248 = vshrl.u32 %v247, 7
      %v249 = vsub.s32 %v246, %v248
      %v250 = vrot.slane %v243, %v249
      %v252 = vmul.f32 %v232, %v250
      %v253 = vld [vmem:[%s3] sm:$0x1]
      %v254 = vmul.f32 %v225, %v252
      %v255 = vsub.f32 %v253, %v254
      %v256 = vld [vmem:[%s216] sm:$0xff]
      %v258 = vlaneseq
      %v259 = vshrl.u32 %v258, 7
      %v260 = vsub.s32 0, %v259
      %v261 = vrot.slane %v252, %v260
      %v263 = vmul.f32 %v256, %v261
      %v265 = vlaneseq
      %v266 = vshrl.u32 %v265, 7
      %v267 = vsub.s32 0, %v266
      %v268 = vrot.slane %v255, %v267
      %v270 = vadd.f32 %v263, %v268
      %v271 = vmax.f32 %v270, 0.0
      %v272 = vpack.c.bf16 %v271, %v271
      %273 = vst [vmem:[%s223] sm:$0xf] %v272
      %p274 = scmp.lt.s32.totalorder %s19, 3
      %s275 = scalar_select %p274, %s19, 3
      %p276 = scmp.lt.s32.totalorder %s20, 0
      %s277 = scalar_select %p276, %s20, 0
      %s278 = sadd.s32 %s277, %s275
      %s279 = smul.addr %s278, 4
      %s280 = scalar_lea.vmem %s4, %s279
      // Predicated region
      $region37: #{generator_forward.10} parent=35 // pred_check
        %p281 = pneg %p138
      $region38: #{generator_forward.10} parent=35 // pred_check_branch
        %283 = sbr.rel (%p281) target = $region40
      $region39: #{generator_forward.10} parent=35 // pred_region
        _
      $region40: #{generator_forward.10} parent=35 // pred_fallthru
        _
    $region36: #{generator_forward.10} parent=5 // pred_fallthru
      _
    %p284 = scmp.le.s32.totalorder 2, %s10
    // Predicated region
    $region41: #{generator_forward.10} parent=5 // pred_check
      %p285 = pneg %p284
    $region42: #{generator_forward.10} parent=5 // pred_check_branch
      %287 = sbr.rel (%p285) target = $region44
    $region43: #{generator_forward.10} parent=5 // pred_region
      %s288 = ssub.s32 %s10, 2
      // Predicated region
      $region45: #{generator_forward.10} parent=43 // pred_check
        %p289 = pneg %p144
      $region46: #{generator_forward.10} parent=43 // pred_check_branch
        %291 = sbr.rel (%p289) target = $region48
      $region47: #{generator_forward.10} parent=43 // pred_region
        %p292 = scmp.lt.s32.totalorder %s21, 3
        %s293 = scalar_select %p292, %s21, 3
        %p294 = scmp.lt.s32.totalorder %s22, 0
        %s295 = scalar_select %p294, %s22, 0
        %s296 = sadd.s32 %s295, %s293
        %s297 = smul.addr %s296, 4
        %s298 = scalar_lea.vmem %s4, %s297
      $region48: #{generator_forward.10} parent=43 // pred_fallthru
        _
    $region44: #{generator_forward.10} parent=5 // pred_fallthru
      _
  $region6: #{generator_forward.10} parent=0 // loop_footer
    %s14 = sadd.s32 1, %s10
  $region7: #{generator_forward.10} parent=0 // loop_footer_branch
    %9 = sbr.rel target = $region3
  $region8: #{generator_forward.10} parent=0 // loop_exit
    _

// kernel: generator_forward.11
$region0: #{generator_forward.11}
  #allocation0 [shape = 'u32[]', space=smem, size = 0x4, offset = 0x4, fixed_abs, tag = 'smem constant byte address 0x4 - core index']
  #allocation1 [shape = 'u32[144,128]{1,0:T(1,128)}', space=vmem, size = 0x12000, scoped, tag = 'internal scratch']
  %s0 = inlined_call_operand.vmem [shape: bf16[4,32,64], index: 0, kind: input, shape index: {}]
  %s1 = inlined_call_operand.vmem [shape: bf16[4,64,128], index: 1, kind: input, shape index: {}]
  %s2 = inlined_call_operand.vmem [shape: f32[4,32,128], index: 2, kind: output, shape index: {0}]
  %s3 = inlined_call_operand.vmem [shape: f32[4,1,2,128], index: 3, kind: output, shape index: {1}]
  %4 = xla_tuple %s2, %s3
  %s5 = sld [smem:[#allocation0]]
  $region49: #{generator_forward.11} parent=0
    _
  %s7 = ssub.s32 1, %s5
  %s8 = scalar_select 0, %s7, %s5
  loop: start=0, step=1, limit=6
  $region2: #{generator_forward.11} parent=0 // loop_pre_header
    _
  $region3: #{generator_forward.11} parent=0 // loop_header
    %s10 = sphi 0, %s14
    %p11 = scmp.ge.s32.totalorder %s10, 6
    %s17 = sphi 0, %s29
    %s18 = sphi 0, %s25
    %s19 = sphi 0, %s17
    %s20 = sphi 0, %s18
    %s21 = sphi 0, %s19
    %s22 = sphi 0, %s20
    %s34 = sphi 0, %s36
    %s37 = sphi 0, %s34
    %s38 = sphi 0, %s37
    %s54 = sphi 0, %s38
    %s60 = sphi 0, %s62
    %s63 = sphi 0, %s60
    %s64 = sphi 0, %s63
    %s80 = sphi 0, %s64
    %s88 = sphi 0, %s90
    %s91 = sphi 0, %s88
    %s92 = sphi 0, %s91
    %s108 = sphi 0, %s92
    %s116 = sphi 0, %s118
    %s119 = sphi 0, %s116
    %s120 = sphi 0, %s119
    %s136 = sphi 0, %s120
  $region4: #{generator_forward.11} parent=0 // loop_header_branch
    %13 = sbr.rel (%p11) target = $region8
  $region5: #{generator_forward.11} parent=0 // loop_body
    %s15 = ssub.s32 %s10, 1
    %s16 = ssub.s32 %s10, 2
    %s23 = sadd.s32 1, %s18
    %p24 = scmp.ge.s32.totalorder %s23, 1
    %s25 = scalar_select %p24, 0, %s23
    %s26 = sadd.s32 1, %s17
    %s27 = scalar_select %p24, %s26, %s17
    %p28 = scmp.ge.s32.totalorder %s27, 4
    %s29 = scalar_select %p28, 0, %s27
    %s30 = ssub.s32 %s17, %s29
    %s31 = ssub.s32 %s18, %s25
    %s32 = sor.u32 %s30, %s31
    %p33 = scmp.eq.s32.totalorder %s32, 0
    %s35 = sadd.s32 %s34, 1
    %s36 = scalar_select %p33, %s34, %s35
    %p39 = pneg %p33
    %p40 = scmp.eq.s32.totalorder %s10, 3
    %p41 = por %p39, %p40
    %p42 = scmp.ne.s32.totalorder %s34, %s37
    %p43 = scmp.eq.s32.totalorder %s10, 0
    %p44 = por %p42, %p43
    %p45 = scmp.ne.s32.totalorder %s34, %s37
    %p46 = scmp.eq.s32.totalorder %s15, 3
    %p47 = por %p45, %p46
    %p48 = scmp.ne.s32.totalorder %s37, %s38
    %p49 = scmp.eq.s32.totalorder %s15, 0
    %p50 = por %p48, %p49
    %p51 = scmp.ne.s32.totalorder %s37, %s38
    %p52 = scmp.eq.s32.totalorder %s16, 3
    %p53 = por %p51, %p52
    %p55 = scmp.ne.s32.totalorder %s38, %s54
    %p56 = scmp.eq.s32.totalorder %s16, 0
    %p57 = por %p55, %p56
    %s58 = ssub.s32 %s17, %s29
    %p59 = scmp.eq.s32.totalorder %s58, 0
    %s61 = sadd.s32 %s60, 1
    %s62 = scalar_select %p59, %s60, %s61
    %p65 = pneg %p59
    %p66 = scmp.eq.s32.totalorder %s10, 3
    %p67 = por %p65, %p66
    %p68 = scmp.ne.s32.totalorder %s60, %s63
    %p69 = scmp.eq.s32.totalorder %s10, 0
    %p70 = por %p68, %p69
    %p71 = scmp.ne.s32.totalorder %s60, %s63
    %p72 = scmp.eq.s32.totalorder %s15, 3
    %p73 = por %p71, %p72
    %p74 = scmp.ne.s32.totalorder %s63, %s64
    %p75 = scmp.eq.s32.totalorder %s15, 0
    %p76 = por %p74, %p75
    %p77 = scmp.ne.s32.totalorder %s63, %s64
    %p78 = scmp.eq.s32.totalorder %s16, 3
    %p79 = por %p77, %p78
    %p81 = scmp.ne.s32.totalorder %s64, %s80
    %p82 = scmp.eq.s32.totalorder %s16, 0
    %p83 = por %p81, %p82
    %s84 = ssub.s32 %s17, %s29
    %s85 = ssub.s32 %s18, %s25
    %s86 = sor.u32 %s84, %s85
    %p87 = scmp.eq.s32.totalorder %s86, 0
    %s89 = sadd.s32 %s88, 1
    %s90 = scalar_select %p87, %s88, %s89
    %p93 = pneg %p87
    %p94 = scmp.eq.s32.totalorder %s10, 3
    %p95 = por %p93, %p94
    %p96 = scmp.ne.s32.totalorder %s88, %s91
    %p97 = scmp.eq.s32.totalorder %s10, 0
    %p98 = por %p96, %p97
    %p99 = scmp.ne.s32.totalorder %s88, %s91
    %p100 = scmp.eq.s32.totalorder %s15, 3
    %p101 = por %p99, %p100
    %p102 = scmp.ne.s32.totalorder %s91, %s92
    %p103 = scmp.eq.s32.totalorder %s15, 0
    %p104 = por %p102, %p103
    %p105 = scmp.ne.s32.totalorder %s91, %s92
    %p106 = scmp.eq.s32.totalorder %s16, 3
    %p107 = por %p105, %p106
    %p109 = scmp.ne.s32.totalorder %s92, %s108
    %p110 = scmp.eq.s32.totalorder %s16, 0
    %p111 = por %p109, %p110
    %s112 = ssub.s32 %s17, %s29
    %s113 = ssub.s32 %s18, %s25
    %s114 = sor.u32 %s112, %s113
    %p115 = scmp.eq.s32.totalorder %s114, 0
    %s117 = sadd.s32 %s116, 1
    %s118 = scalar_select %p115, %s116, %s117
    %p121 = pneg %p115
    %p122 = scmp.eq.s32.totalorder %s10, 3
    %p123 = por %p121, %p122
    %p124 = scmp.ne.s32.totalorder %s116, %s119
    %p125 = scmp.eq.s32.totalorder %s10, 0
    %p126 = por %p124, %p125
    %p127 = scmp.ne.s32.totalorder %s116, %s119
    %p128 = scmp.eq.s32.totalorder %s15, 3
    %p129 = por %p127, %p128
    %p130 = scmp.ne.s32.totalorder %s119, %s120
    %p131 = scmp.eq.s32.totalorder %s15, 0
    %p132 = por %p130, %p131
    %p133 = scmp.ne.s32.totalorder %s119, %s120
    %p134 = scmp.eq.s32.totalorder %s16, 3
    %p135 = por %p133, %p134
    %p137 = scmp.ne.s32.totalorder %s120, %s136
    %p138 = scmp.eq.s32.totalorder %s16, 0
    %p139 = por %p137, %p138
    %p140 = scmp.le.s32.totalorder 1, %s10
    %p141 = scmp.lt.s32.totalorder %s10, 5
    %p142 = pnand %p140, %p141
    %p143 = pneg %p142
    // Predicated region
    $region9: #{generator_forward.11} parent=5 // pred_check
      _
    $region10: #{generator_forward.11} parent=5 // pred_check_branch
      %145 = sbr.rel (%p142) target = $region12
    $region11: #{generator_forward.11} parent=5 // pred_region
      %s146 = ssub.s32 %s10, 1
    $region12: #{generator_forward.11} parent=5 // pred_fallthru
      _
    %p147 = scmp.lt.s32.totalorder %s10, 4
    // Predicated region
    $region13: #{generator_forward.11} parent=5 // pred_check
      %p148 = pneg %p147
    $region14: #{generator_forward.11} parent=5 // pred_check_branch
      %150 = sbr.rel (%p148) target = $region16
    $region15: #{generator_forward.11} parent=5 // pred_region
      // Predicated region
      $region17: #{generator_forward.11} parent=15 // pred_check
        %p151 = pneg %p44
      $region18: #{generator_forward.11} parent=15 // pred_check_branch
        %153 = sbr.rel (%p151) target = $region20
      $region19: #{generator_forward.11} parent=15 // pred_region
        %s154 = smul.u32 4, %s18
        %p155 = scmp.lt.s32.totalorder %s17, 3
        %s156 = scalar_select %p155, %s17, 3
        %p157 = scmp.lt.s32.totalorder %s154, 3
        %s158 = scalar_select %p157, %s154, 3
        %s159 = smul.addr %s156, 4
        %s160 = sadd.s32 %s158, %s159
        %s161 = smul.addr %s160, 4
        %s162 = scalar_lea.vmem %s0, %s161
        %s163 = smul.u32 4, %s18
      $region20: #{generator_forward.11} parent=15 // pred_fallthru
        _
      // Predicated region
      $region21: #{generator_forward.11} parent=15 // pred_check
        %p164 = pneg %p70
      $region22: #{generator_forward.11} parent=15 // pred_check_branch
        %166 = sbr.rel (%p164) target = $region24
      $region23: #{generator_forward.11} parent=15 // pred_region
        %p167 = scmp.lt.s32.totalorder %s17, 3
        %s168 = scalar_select %p167, %s17, 3
        %s169 = smul.addr %s168, 8
        %s170 = smul.addr %s169, 4
        %s171 = scalar_lea.vmem %s1, %s170
      $region24: #{generator_forward.11} parent=15 // pred_fallthru
        _
    $region16: #{generator_forward.11} parent=5 // pred_fallthru
      _
    %p172 = scmp.le.s32.totalorder 1, %s10
    %p173 = scmp.lt.s32.totalorder %s10, 5
    %p174 = pnand %p172, %p173
    %p175 = pneg %p174
    // Predicated region
    $region25: #{generator_forward.11} parent=5 // pred_check
      _
    $region26: #{generator_forward.11} parent=5 // pred_check_branch
      %177 = sbr.rel (%p174) target = $region28
    $region27: #{generator_forward.11} parent=5 // pred_region
      %s178 = ssub.s32 %s10, 1
      %s179 = smul.u32 4, %s20
      %p180 = scmp.lt.s32.totalorder %s19, 3
      %s181 = scalar_select %p180, %s19, 3
      %p182 = scmp.lt.s32.totalorder %s179, 3
      %s183 = scalar_select %p182, %s179, 3
      %s184 = smul.addr %s181, 4
      %s185 = sadd.s32 %s183, %s184
      %s186 = smul.addr %s185, 4
      %s187 = scalar_lea.vmem %s0, %s186
      %p188 = pneg %p50
      %p189 = pneg %p47
      %p190 = scmp.lt.s32.totalorder %s19, 3
      %s191 = scalar_select %p190, %s19, 3
      %s192 = smul.addr %s191, 8
      %s193 = smul.addr %s192, 4
      %s194 = scalar_lea.vmem %s1, %s193
      %p195 = pneg %p76
      %p196 = pneg %p73
      %p197 = pneg %p104
      %p198 = pneg %p101
      %s199 = smul.u32 4, %s20
      %p200 = scmp.lt.s32.totalorder %s19, 3
      %s201 = scalar_select %p200, %s19, 3
      %p202 = scmp.lt.s32.totalorder %s199, 3
      %s203 = scalar_select %p202, %s199, 3
      %s204 = smul.addr %s201, 4
      %s205 = sadd.s32 %s203, %s204
      %s206 = smul.addr %s205, 8
      %s207 = scalar_lea.vmem %s2, %s206
      %p208 = pneg %p132
      %p209 = pneg %p129
      %p210 = scmp.lt.s32.totalorder %s19, 3
      %s211 = scalar_select %p210, %s19, 3
      %p212 = scmp.lt.s32.totalorder %s20, 0
      %s213 = scalar_select %p212, %s20, 0
      %s214 = sadd.s32 %s213, %s211
      %s215 = smul.addr %s214, 2
      %s216 = scalar_lea.vmem %s3, %s215
      %s217 = smul.u32 4, %s20
      %p218 = scmp.lt.s32.totalorder %s19, 3
      %s219 = scalar_select %p218, %s19, 3
      %p220 = scmp.lt.s32.totalorder %s217, 3
      %s221 = scalar_select %p220, %s217, 3
      %s222 = smul.addr %s219, 4
      %s223 = sadd.s32 %s221, %s222
      %s224 = smul.addr %s223, 4
      %s225 = scalar_lea.vmem %s0, %s224
      %s226 = smul.u32 4, %s20
      %p227 = scmp.lt.s32.totalorder %s19, 3
      %s228 = scalar_select %p227, %s19, 3
      %s229 = smul.addr %s228, 8
      %s230 = smul.addr %s229, 4
      %s231 = scalar_lea.vmem %s1, %s230
      %s232 = smul.u32 4, %s20
      %p233 = scmp.lt.s32.totalorder %s19, 3
      %s234 = scalar_select %p233, %s19, 3
      %p235 = scmp.lt.s32.totalorder %s232, 3
      %s236 = scalar_select %p235, %s232, 3
      %s237 = smul.addr %s234, 4
      %s238 = sadd.s32 %s236, %s237
      %s239 = smul.addr %s238, 8
      %s240 = scalar_lea.vmem %s2, %s239
      %s241 = smul.u32 4, %s20
      %p242 = scmp.lt.s32.totalorder %s19, 3
      %s243 = scalar_select %p242, %s19, 3
      %p244 = scmp.lt.s32.totalorder %s20, 0
      %s245 = scalar_select %p244, %s20, 0
      %s246 = sadd.s32 %s245, %s243
      %s247 = smul.addr %s246, 2
      %s248 = scalar_lea.vmem %s3, %s247
      %v250 = vld [vmem:[%s225] sm:$0xf]
      %v251 = vld [vmem:[%s225 + $0x4] sm:$0xf]
      %v252 = vld [vmem:[%s225 + $0x8] sm:$0xf]
      %v253 = vld [vmem:[%s225 + $0xc] sm:$0xf]
      %v254 = vld [vmem:[%s231] sm:$0xf]
      %v255 = vld [vmem:[%s231 + $0x4] sm:$0xf]
      %v256 = vld [vmem:[%s231 + $0x8] sm:$0xf]
      %v257 = vld [vmem:[%s231 + $0xc] sm:$0xf]
      %v258 = vld [vmem:[%s231 + $0x10] sm:$0xf]
      %v259 = vld [vmem:[%s231 + $0x14] sm:$0xf]
      %v260 = vld [vmem:[%s231 + $0x18] sm:$0xf]
      %v261 = vld [vmem:[%s231 + $0x1c] sm:$0xf]
      %v266 = vunpack.c.l.b16 %v250
      %v267 = vunpack.c.l.b16 %v251
      %v268 = vunpack.c.l.b16 %v252
      %v269 = vunpack.c.l.b16 %v253
      %v270 = vpack.c.b16 %v267, %v266
      %v271 = vpack.c.b16 %v269, %v268
      %v280 = vunpack.c.l.b16 %v254
      %v281 = vunpack.c.l.b16 %v255
      %v282 = vunpack.c.l.b16 %v256
      %v283 = vunpack.c.l.b16 %v257
      %v284 = vunpack.c.l.b16 %v258
      %v285 = vunpack.c.l.b16 %v259
      %v286 = vunpack.c.l.b16 %v260
      %v287 = vunpack.c.l.b16 %v261
      %v288 = vpack.c.b16 %v281, %v280
      %v289 = vpack.c.b16 %v283, %v282
      %v290 = vpack.c.b16 %v285, %v284
      %v291 = vpack.c.b16 %v287, %v286
      %vm296 = vcmask 523264
      %v298 = vsel %vm296, %v270, 0
      %v301 = vsel %vm296, %v271, 0
      %303 = vmatprep.subr.bf16.mxu0 0
      %304 = vmatpush1.bf16.msra.mxu0 0
      %305 = vmatprep.subr.bf16.mxu0 0
      %306 = vmatpush1.bf16.msra.mxu0 0
      %307 = vmatprep.subr.bf16.mxu0 0
      %308 = vmatpush1.bf16.msra.mxu0 0
      %309 = vmatprep.subr.bf16.mxu0 0
      %310 = vmatpush1.bf16.msra.mxu0 0
      %311 = vmatprep.subr.bf16.mxu0 0
      %312 = vmatpush1.bf16.msra.mxu0 %v291
      %313 = vmatprep.subr.bf16.mxu0 0
      %314 = vmatpush1.bf16.msra.mxu0 %v290
      %315 = vmatprep.subr.bf16.mxu0 0
      %316 = vmatpush1.bf16.msra.mxu0 %v289
      %317 = vmatprep.subr.bf16.mxu0 0
      %318 = vmatpush1.bf16.msra.mxu0 %v288
      %319 = vmatprep.subr.bf16.mxu0 0
      %320 = vmatpush2.bf16.msra.mxu0 0
      %321 = vmatprep.subr.bf16.mxu0 0
      %322 = vmatpush2.bf16.msra.mxu0 0
      %323 = vmatprep.subr.bf16.mxu0 0
      %324 = vmatpush2.bf16.msra.mxu0 0
      %325 = vmatprep.subr.bf16.mxu0 0
      %326 = vmatpush2.bf16.msra.mxu0 0
      %327 = vmatprep.subr.bf16.mxu0 0
      %328 = vmatpush2.bf16.msra.mxu0 0
      %329 = vmatprep.subr.bf16.mxu0 0
      %330 = vmatpush2.bf16.msra.mxu0 0
      %331 = vmatprep.subr.bf16.mxu0 0
      %332 = vmatpush2.bf16.msra.mxu0 0
      %333 = vmatprep.subr.bf16.mxu0 0
      %334 = vmatpush2.bf16.msra.mxu0 0
      %335 = vmatprep.mubr.bf16.mxu0 0
      %336 = vmatmul.mubr.bf16.gmra.mxu0 %v298
      %v337 = vpop.f32.mrf.mxu0
      %v338 = vadd.f32 0.0, %v337
      %v339 = vpop.f32.mrf.mxu0
      %v340 = vpop.f32.mrf.mxu0
      %v341 = vadd.f32 0.0, %v340
      %v342 = vpop.f32.mrf.mxu0
      %343 = vmatprep.mubr.bf16.mxu0 0
      %344 = vmatmul.mubr.bf16.gmra.mxu0 %v301
      %v345 = vpop.f32.mrf.mxu0
      %v346 = vadd.f32 0.0, %v345
      %v347 = vpop.f32.mrf.mxu0
      %v348 = vpop.f32.mrf.mxu0
      %v349 = vadd.f32 0.0, %v348
      %v350 = vpop.f32.mrf.mxu0
      %351 = vdwg.mxu0
      %352 = vst [vmem:[%s240] sm:$0xff] %v338
      %353 = vst [vmem:[%s240 + $0x8] sm:$0xff] %v341
      %354 = vst [vmem:[%s240 + $0x10] sm:$0xff] %v346
      %355 = vst [vmem:[%s240 + $0x18] sm:$0xff] %v349
      %vm356 = vcmask 261120
      %v358 = vsel %vm356, 1.0, 0
      %360 = vmatprep.subr.mxu0 0.0
      %361 = vmatpush1.msra.mxu0 0.0
      %362 = vmatprep.subr.mxu0 0.0
      %363 = vmatpush1.msra.mxu0 0.0
      %364 = vmatprep.subr.mxu0 0.0
      %365 = vmatpush1.msra.mxu0 0.0
      %366 = vmatprep.subr.mxu0 0.0
      %367 = vmatpush1.msra.mxu0 0.0
      %368 = vmatprep.subr.mxu0 0.0
      %369 = vmatpush1.msra.mxu0 0.0
      %370 = vmatprep.subr.mxu0 0.0
      %371 = vmatpush1.msra.mxu0 0.0
      %372 = vmatprep.subr.mxu0 0.0
      %373 = vmatpush1.msra.mxu0 0.0
      %374 = vmatprep.subr.mxu0 0.0
      %375 = vmatpush1.msra.mxu0 0.0
      %376 = vmatprep.subr.mxu0 0.0
      %377 = vmatpush1.msra.mxu0 0.0
      %378 = vmatprep.subr.mxu0 0.0
      %379 = vmatpush1.msra.mxu0 0.0
      %380 = vmatprep.subr.mxu0 0.0
      %381 = vmatpush1.msra.mxu0 0.0
      %382 = vmatprep.subr.mxu0 0.0
      %383 = vmatpush1.msra.mxu0 0.0
      %384 = vmatprep.subr.mxu0 0.0
      %385 = vmatpush1.msra.mxu0 %v349
      %386 = vmatprep.subr.mxu0 0.0
      %387 = vmatpush1.msra.mxu0 %v346
      %388 = vmatprep.subr.mxu0 0.0
      %389 = vmatpush1.msra.mxu0 %v341
      %390 = vmatprep.subr.mxu0 0.0
      %391 = vmatpush1.msra.mxu0 %v338
      %392 = vmatprep.subr.mxu0 0.0
      %393 = vmatpush2.msra.mxu0 0.0
      %394 = vmatprep.subr.mxu0 0.0
      %395 = vmatpush2.msra.mxu0 0.0
      %396 = vmatprep.subr.mxu0 0.0
      %397 = vmatpush2.msra.mxu0 0.0
      %398 = vmatprep.subr.mxu0 0.0
      %399 = vmatpush2.msra.mxu0 0.0
      %400 = vmatprep.subr.mxu0 0.0
      %401 = vmatpush2.msra.mxu0 0.0
      %402 = vmatprep.subr.mxu0 0.0
      %403 = vmatpush2.msra.mxu0 0.0
      %404 = vmatprep.subr.mxu0 0.0
      %405 = vmatpush2.msra.mxu0 0.0
      %406 = vmatprep.subr.mxu0 0.0
      %407 = vmatpush2.msra.mxu0 0.0
      %408 = vmatprep.subr.mxu0 0.0
      %409 = vmatpush2.msra.mxu0 0.0
      %410 = vmatprep.subr.mxu0 0.0
      %411 = vmatpush2.msra.mxu0 0.0
      %412 = vmatprep.subr.mxu0 0.0
      %413 = vmatpush2.msra.mxu0 0.0
      %414 = vmatprep.subr.mxu0 0.0
      %415 = vmatpush2.msra.mxu0 0.0
      %416 = vmatprep.subr.mxu0 0.0
      %417 = vmatpush2.msra.mxu0 0.0
      %418 = vmatprep.subr.mxu0 0.0
      %419 = vmatpush2.msra.mxu0 0.0
      %420 = vmatprep.subr.mxu0 0.0
      %421 = vmatpush2.msra.mxu0 0.0
      %422 = vmatprep.subr.mxu0 0.0
      %423 = vmatpush2.msra.mxu0 0.0
      %424 = vmatprep.mubr.f32.mxu0 0.0
      %425 = vmatmul.mubr.f32.gmra.mxu0 %v358
      %v426 = vpop.f32.mrf.mxu0
      %v427 = vadd.f32 0.0, %v426
      %v428 = vpop.f32.mrf.mxu0
      %429 = vdwg.mxu0
      %v430 = vmul.f32 %v338, %v338
      %v431 = vmul.f32 %v341, %v341
      %v432 = vmul.f32 %v346, %v346
      %v433 = vmul.f32 %v349, %v349
      %434 = vmatprep.subr.mxu0 0.0
      %435 = vmatpush1.msra.mxu0 0.0
      %436 = vmatprep.subr.mxu0 0.0
      %437 = vmatpush1.msra.mxu0 0.0
      %438 = vmatprep.subr.mxu0 0.0
      %439 = vmatpush1.msra.mxu0 0.0
      %440 = vmatprep.subr.mxu0 0.0
      %441 = vmatpush1.msra.mxu0 0.0
      %442 = vmatprep.subr.mxu0 0.0
      %443 = vmatpush1.msra.mxu0 0.0
      %444 = vmatprep.subr.mxu0 0.0
      %445 = vmatpush1.msra.mxu0 0.0
      %446 = vmatprep.subr.mxu0 0.0
      %447 = vmatpush1.msra.mxu0 0.0
      %448 = vmatprep.subr.mxu0 0.0
      %449 = vmatpush1.msra.mxu0 0.0
      %450 = vmatprep.subr.mxu0 0.0
      %451 = vmatpush1.msra.mxu0 0.0
      %452 = vmatprep.subr.mxu0 0.0
      %453 = vmatpush1.msra.mxu0 0.0
      %454 = vmatprep.subr.mxu0 0.0
      %455 = vmatpush1.msra.mxu0 0.0
      %456 = vmatprep.subr.mxu0 0.0
      %457 = vmatpush1.msra.mxu0 0.0
      %458 = vmatprep.subr.mxu0 0.0
      %459 = vmatpush1.msra.mxu0 %v433
      %460 = vmatprep.subr.mxu0 0.0
      %461 = vmatpush1.msra.mxu0 %v432
      %462 = vmatprep.subr.mxu0 0.0
      %463 = vmatpush1.msra.mxu0 %v431
      %464 = vmatprep.subr.mxu0 0.0
      %465 = vmatpush1.msra.mxu0 %v430
      %466 = vmatprep.subr.mxu0 0.0
      %467 = vmatpush2.msra.mxu0 0.0
      %468 = vmatprep.subr.mxu0 0.0
      %469 = vmatpush2.msra.mxu0 0.0
      %470 = vmatprep.subr.mxu0 0.0
      %471 = vmatpush2.msra.mxu0 0.0
      %472 = vmatprep.subr.mxu0 0.0
      %473 = vmatpush2.msra.mxu0 0.0
      %474 = vmatprep.subr.mxu0 0.0
      %475 = vmatpush2.msra.mxu0 0.0
      %476 = vmatprep.subr.mxu0 0.0
      %477 = vmatpush2.msra.mxu0 0.0
      %478 = vmatprep.subr.mxu0 0.0
      %479 = vmatpush2.msra.mxu0 0.0
      %480 = vmatprep.subr.mxu0 0.0
      %481 = vmatpush2.msra.mxu0 0.0
      %482 = vmatprep.subr.mxu0 0.0
      %483 = vmatpush2.msra.mxu0 0.0
      %484 = vmatprep.subr.mxu0 0.0
      %485 = vmatpush2.msra.mxu0 0.0
      %486 = vmatprep.subr.mxu0 0.0
      %487 = vmatpush2.msra.mxu0 0.0
      %488 = vmatprep.subr.mxu0 0.0
      %489 = vmatpush2.msra.mxu0 0.0
      %490 = vmatprep.subr.mxu0 0.0
      %491 = vmatpush2.msra.mxu0 0.0
      %492 = vmatprep.subr.mxu0 0.0
      %493 = vmatpush2.msra.mxu0 0.0
      %494 = vmatprep.subr.mxu0 0.0
      %495 = vmatpush2.msra.mxu0 0.0
      %496 = vmatprep.subr.mxu0 0.0
      %497 = vmatpush2.msra.mxu0 0.0
      %498 = vmatprep.mubr.f32.mxu0 0.0
      %499 = vmatmul.mubr.f32.gmra.mxu0 %v358
      %v500 = vpop.f32.mrf.mxu0
      %v501 = vadd.f32 0.0, %v500
      %v502 = vpop.f32.mrf.mxu0
      %503 = vdwg.mxu0
      %v505 = vrot.slane %v501, 7
      %vm507 = vcmask 1040384
      %v508 = vsel %vm507, %v427, %v505
      %509 = vst [vmem:[%s248] sm:$0x3] %v508
      %s510 = smul.u32 4, %s20
      %p511 = scmp.lt.s32.totalorder %s19, 3
      %s512 = scalar_select %p511, %s19, 3
      %p513 = scmp.lt.s32.totalorder %s510, 3
      %s514 = scalar_select %p513, %s510, 3
      %s515 = smul.addr %s512, 4
      %s516 = sadd.s32 %s514, %s515
      %s517 = smul.addr %s516, 8
      %s518 = scalar_lea.vmem %s2, %s517
      %p519 = scmp.lt.s32.totalorder %s19, 3
      %s520 = scalar_select %p519, %s19, 3
      %p521 = scmp.lt.s32.totalorder %s20, 0
      %s522 = scalar_select %p521, %s20, 0
      %s523 = sadd.s32 %s522, %s520
      %s524 = smul.addr %s523, 2
      %s525 = scalar_lea.vmem %s3, %s524
      // Predicated region
      $region29: #{generator_forward.11} parent=27 // pred_check
        %p526 = pneg %p101
      $region30: #{generator_forward.11} parent=27 // pred_check_branch
        %528 = sbr.rel (%p526) target = $region32
      $region31: #{generator_forward.11} parent=27 // pred_region
        %s529 = smul.u32 4, %s20
      $region32: #{generator_forward.11} parent=27 // pred_fallthru
        _
      // Predicated region
      $region33: #{generator_forward.11} parent=27 // pred_check
        %p530 = pneg %p129
      $region34: #{generator_forward.11} parent=27 // pred_check_branch
        %532 = sbr.rel (%p530) target = $region36
      $region35: #{generator_forward.11} parent=27 // pred_region
        _
      $region36: #{generator_forward.11} parent=27 // pred_fallthru
        _
    $region28: #{generator_forward.11} parent=5 // pred_fallthru
      _
    %p533 = scmp.le.s32.totalorder 2, %s10
    // Predicated region
    $region37: #{generator_forward.11} parent=5 // pred_check
      %p534 = pneg %p533
    $region38: #{generator_forward.11} parent=5 // pred_check_branch
      %536 = sbr.rel (%p534) target = $region40
    $region39: #{generator_forward.11} parent=5 // pred_region
      %s537 = ssub.s32 %s10, 2
      // Predicated region
      $region41: #{generator_forward.11} parent=39 // pred_check
        %p538 = pneg %p107
      $region42: #{generator_forward.11} parent=39 // pred_check_branch
        %540 = sbr.rel (%p538) target = $region44
      $region43: #{generator_forward.11} parent=39 // pred_region
        %s541 = smul.u32 4, %s22
        %p542 = scmp.lt.s32.totalorder %s21, 3
        %s543 = scalar_select %p542, %s21, 3
        %p544 = scmp.lt.s32.totalorder %s541, 3
        %s545 = scalar_select %p544, %s541, 3
        %s546 = smul.addr %s543, 4
        %s547 = sadd.s32 %s545, %s546
        %s548 = smul.addr %s547, 8
        %s549 = scalar_lea.vmem %s2, %s548
      $region44: #{generator_forward.11} parent=39 // pred_fallthru
        _
      // Predicated region
      $region45: #{generator_forward.11} parent=39 // pred_check
        %p550 = pneg %p135
      $region46: #{generator_forward.11} parent=39 // pred_check_branch
        %552 = sbr.rel (%p550) target = $region48
      $region47: #{generator_forward.11} parent=39 // pred_region
        %p553 = scmp.lt.s32.totalorder %s21, 3
        %s554 = scalar_select %p553, %s21, 3
        %p555 = scmp.lt.s32.totalorder %s22, 0
        %s556 = scalar_select %p555, %s22, 0
        %s557 = sadd.s32 %s556, %s554
        %s558 = smul.addr %s557, 2
        %s559 = scalar_lea.vmem %s3, %s558
      $region48: #{generator_forward.11} parent=39 // pred_fallthru
        _
    $region40: #{generator_forward.11} parent=5 // pred_fallthru
      _
  $region6: #{generator_forward.11} parent=0 // loop_footer
    %s14 = sadd.s32 1, %s10
  $region7: #{generator_forward.11} parent=0 // loop_footer_branch
    %9 = sbr.rel target = $region3
  $region8: #{generator_forward.11} parent=0 // loop_exit
    _

// kernel: generator_forward.12
$region0: #{generator_forward.12}
  #allocation0 [shape = 'u32[]', space=smem, size = 0x4, offset = 0x4, fixed_abs, tag = 'smem constant byte address 0x4 - core index']
  #allocation1 [shape = 'u32[144,128]{1,0:T(1,128)}', space=vmem, size = 0x12000, scoped, tag = 'internal scratch']
  %s0 = inlined_call_operand.vmem [shape: f32[4,32,128], index: 0, kind: input, shape index: {}]
  %s1 = inlined_call_operand.vmem [shape: f32[2,128], index: 1, kind: input, shape index: {}]
  %s2 = inlined_call_operand.vmem [shape: f32[1,128], index: 2, kind: input, shape index: {}]
  %s3 = inlined_call_operand.vmem [shape: f32[1,128], index: 3, kind: input, shape index: {}]
  %s4 = inlined_call_operand.vmem [shape: bf16[4,32,128], index: 4, kind: output, shape index: {}]
  %s5 = sld [smem:[#allocation0]]
  $region49: #{generator_forward.12} parent=0
    _
  %s7 = ssub.s32 1, %s5
  %s8 = scalar_select 0, %s7, %s5
  loop: start=0, step=1, limit=6
  $region2: #{generator_forward.12} parent=0 // loop_pre_header
    _
  $region3: #{generator_forward.12} parent=0 // loop_header
    %s10 = sphi 0, %s14
    %p11 = scmp.ge.s32.totalorder %s10, 6
    %s17 = sphi 0, %s29
    %s18 = sphi 0, %s25
    %s19 = sphi 0, %s17
    %s20 = sphi 0, %s18
    %s21 = sphi 0, %s19
    %s22 = sphi 0, %s20
    %s34 = sphi 0, %s36
    %s37 = sphi 0, %s34
    %s38 = sphi 0, %s37
    %s54 = sphi 0, %s38
    %s58 = sphi 0, %s58
    %s60 = sphi 0, %s58
    %s61 = sphi 0, %s60
    %s75 = sphi 0, %s61
    %s79 = sphi 0, %s79
    %s81 = sphi 0, %s79
    %s82 = sphi 0, %s81
    %s96 = sphi 0, %s82
    %s100 = sphi 0, %s100
    %s102 = sphi 0, %s100
    %s103 = sphi 0, %s102
    %s117 = sphi 0, %s103
    %s125 = sphi 0, %s127
    %s128 = sphi 0, %s125
    %s129 = sphi 0, %s128
    %s145 = sphi 0, %s129
  $region4: #{generator_forward.12} parent=0 // loop_header_branch
    %13 = sbr.rel (%p11) target = $region8
  $region5: #{generator_forward.12} parent=0 // loop_body
    %s15 = ssub.s32 %s10, 1
    %s16 = ssub.s32 %s10, 2
    %s23 = sadd.s32 1, %s18
    %p24 = scmp.ge.s32.totalorder %s23, 1
    %s25 = scalar_select %p24, 0, %s23
    %s26 = sadd.s32 1, %s17
    %s27 = scalar_select %p24, %s26, %s17
    %p28 = scmp.ge.s32.totalorder %s27, 4
    %s29 = scalar_select %p28, 0, %s27
    %s30 = ssub.s32 %s17, %s29
    %s31 = ssub.s32 %s18, %s25
    %s32 = sor.u32 %s30, %s31
    %p33 = scmp.eq.s32.totalorder %s32, 0
    %s35 = sadd.s32 %s34, 1
    %s36 = scalar_select %p33, %s34, %s35
    %p39 = pneg %p33
    %p40 = scmp.eq.s32.totalorder %s10, 3
    %p41 = por %p39, %p40
    %p42 = scmp.ne.s32.totalorder %s34, %s37
    %p43 = scmp.eq.s32.totalorder %s10, 0
    %p44 = por %p42, %p43
    %p45 = scmp.ne.s32.totalorder %s34, %s37
    %p46 = scmp.eq.s32.totalorder %s15, 3
    %p47 = por %p45, %p46
    %p48 = scmp.ne.s32.totalorder %s37, %s38
    %p49 = scmp.eq.s32.totalorder %s15, 0
    %p50 = por %p48, %p49
    %p51 = scmp.ne.s32.totalorder %s37, %s38
    %p52 = scmp.eq.s32.totalorder %s16, 3
    %p53 = por %p51, %p52
    %p55 = scmp.ne.s32.totalorder %s38, %s54
    %p56 = scmp.eq.s32.totalorder %s16, 0
    %p57 = por %p55, %p56
    %s59 = sadd.s32 %s58, 1
    %p62 = scmp.eq.s32.totalorder %s10, 3
    %p63 = scmp.ne.s32.totalorder %s58, %s60
    %p64 = scmp.eq.s32.totalorder %s10, 0
    %p65 = por %p63, %p64
    %p66 = scmp.ne.s32.totalorder %s58, %s60
    %p67 = scmp.eq.s32.totalorder %s15, 3
    %p68 = por %p66, %p67
    %p69 = scmp.ne.s32.totalorder %s60, %s61
    %p70 = scmp.eq.s32.totalorder %s15, 0
    %p71 = por %p69, %p70
    %p72 = scmp.ne.s32.totalorder %s60, %s61
    %p73 = scmp.eq.s32.totalorder %s16, 3
    %p74 = por %p72, %p73
    %p76 = scmp.ne.s32.totalorder %s61, %s75
    %p77 = scmp.eq.s32.totalorder %s16, 0
    %p78 = por %p76, %p77
    %s80 = sadd.s32 %s79, 1
    %p83 = scmp.eq.s32.totalorder %s10, 3
    %p84 = scmp.ne.s32.totalorder %s79, %s81
    %p85 = scmp.eq.s32.totalorder %s10, 0
    %p86 = por %p84, %p85
    %p87 = scmp.ne.s32.totalorder %s79, %s81
    %p88 = scmp.eq.s32.totalorder %s15, 3
    %p89 = por %p87, %p88
    %p90 = scmp.ne.s32.totalorder %s81, %s82
    %p91 = scmp.eq.s32.totalorder %s15, 0
    %p92 = por %p90, %p91
    %p93 = scmp.ne.s32.totalorder %s81, %s82
    %p94 = scmp.eq.s32.totalorder %s16, 3
    %p95 = por %p93, %p94
    %p97 = scmp.ne.s32.totalorder %s82, %s96
    %p98 = scmp.eq.s32.totalorder %s16, 0
    %p99 = por %p97, %p98
    %s101 = sadd.s32 %s100, 1
    %p104 = scmp.eq.s32.totalorder %s10, 3
    %p105 = scmp.ne.s32.totalorder %s100, %s102
    %p106 = scmp.eq.s32.totalorder %s10, 0
    %p107 = por %p105, %p106
    %p108 = scmp.ne.s32.totalorder %s100, %s102
    %p109 = scmp.eq.s32.totalorder %s15, 3
    %p110 = por %p108, %p109
    %p111 = scmp.ne.s32.totalorder %s102, %s103
    %p112 = scmp.eq.s32.totalorder %s15, 0
    %p113 = por %p111, %p112
    %p114 = scmp.ne.s32.totalorder %s102, %s103
    %p115 = scmp.eq.s32.totalorder %s16, 3
    %p116 = por %p114, %p115
    %p118 = scmp.ne.s32.totalorder %s103, %s117
    %p119 = scmp.eq.s32.totalorder %s16, 0
    %p120 = por %p118, %p119
    %s121 = ssub.s32 %s17, %s29
    %s122 = ssub.s32 %s18, %s25
    %s123 = sor.u32 %s121, %s122
    %p124 = scmp.eq.s32.totalorder %s123, 0
    %s126 = sadd.s32 %s125, 1
    %s127 = scalar_select %p124, %s125, %s126
    %p130 = pneg %p124
    %p131 = scmp.eq.s32.totalorder %s10, 3
    %p132 = por %p130, %p131
    %p133 = scmp.ne.s32.totalorder %s125, %s128
    %p134 = scmp.eq.s32.totalorder %s10, 0
    %p135 = por %p133, %p134
    %p136 = scmp.ne.s32.totalorder %s125, %s128
    %p137 = scmp.eq.s32.totalorder %s15, 3
    %p138 = por %p136, %p137
    %p139 = scmp.ne.s32.totalorder %s128, %s129
    %p140 = scmp.eq.s32.totalorder %s15, 0
    %p141 = por %p139, %p140
    %p142 = scmp.ne.s32.totalorder %s128, %s129
    %p143 = scmp.eq.s32.totalorder %s16, 3
    %p144 = por %p142, %p143
    %p146 = scmp.ne.s32.totalorder %s129, %s145
    %p147 = scmp.eq.s32.totalorder %s16, 0
    %p148 = por %p146, %p147
    %p149 = scmp.le.s32.totalorder 1, %s10
    %p150 = scmp.lt.s32.totalorder %s10, 5
    %p151 = pnand %p149, %p150
    %p152 = pneg %p151
    // Predicated region
    $region9: #{generator_forward.12} parent=5 // pred_check
      _
    $region10: #{generator_forward.12} parent=5 // pred_check_branch
      %154 = sbr.rel (%p151) target = $region12
    $region11: #{generator_forward.12} parent=5 // pred_region
      %s155 = ssub.s32 %s10, 1
      // Predicated region
      $region13: #{generator_forward.12} parent=11 // pred_check
        %p156 = pneg %p71
      $region14: #{generator_forward.12} parent=11 // pred_check_branch
        %158 = sbr.rel (%p156) target = $region16
      $region15: #{generator_forward.12} parent=11 // pred_region
        _
      $region16: #{generator_forward.12} parent=11 // pred_fallthru
        _
      // Predicated region
      $region17: #{generator_forward.12} parent=11 // pred_check
        %p159 = pneg %p92
      $region18: #{generator_forward.12} parent=11 // pred_check_branch
        %161 = sbr.rel (%p159) target = $region20
      $region19: #{generator_forward.12} parent=11 // pred_region
        _
      $region20: #{generator_forward.12} parent=11 // pred_fallthru
        _
      // Predicated region
      $region21: #{generator_forward.12} parent=11 // pred_check
        %p162 = pneg %p113
      $region22: #{generator_forward.12} parent=11 // pred_check_branch
        %164 = sbr.rel (%p162) target = $region24
      $region23: #{generator_forward.12} parent=11 // pred_region
        _
      $region24: #{generator_forward.12} parent=11 // pred_fallthru
        _
    $region12: #{generator_forward.12} parent=5 // pred_fallthru
      _
    %p165 = scmp.lt.s32.totalorder %s10, 4
    // Predicated region
    $region25: #{generator_forward.12} parent=5 // pred_check
      %p166 = pneg %p165
    $region26: #{generator_forward.12} parent=5 // pred_check_branch
      %168 = sbr.rel (%p166) target = $region28
    $region27: #{generator_forward.12} parent=5 // pred_region
      // Predicated region
      $region29: #{generator_forward.12} parent=27 // pred_check
        %p169 = pneg %p44
      $region30: #{generator_forward.12} parent=27 // pred_check_branch
        %171 = sbr.rel (%p169) target = $region32
      $region31: #{generator_forward.12} parent=27 // pred_region
        %s172 = smul.u32 4, %s18
        %p173 = scmp.lt.s32.totalorder %s17, 3
        %s174 = scalar_select %p173, %s17, 3
        %p175 = scmp.lt.s32.totalorder %s172, 3
        %s176 = scalar_select %p175, %s172, 3
        %s177 = smul.addr %s174, 4
        %s178 = sadd.s32 %s176, %s177
        %s179 = smul.addr %s178, 8
        %s180 = scalar_lea.vmem %s0, %s179
        %s181 = smul.u32 4, %s18
      $region32: #{generator_forward.12} parent=27 // pred_fallthru
        _
    $region28: #{generator_forward.12} parent=5 // pred_fallthru
      _
    %p182 = scmp.le.s32.totalorder 1, %s10
    %p183 = scmp.lt.s32.totalorder %s10, 5
    %p184 = pnand %p182, %p183
    %p185 = pneg %p184
    // Predicated region
    $region33: #{generator_forward.12} parent=5 // pred_check
      _
    $region34: #{generator_forward.12} parent=5 // pred_check_branch
      %187 = sbr.rel (%p184) target = $region36
    $region35: #{generator_forward.12} parent=5 // pred_region
      %s188 = ssub.s32 %s10, 1
      %s189 = smul.u32 4, %s20
      %p190 = scmp.lt.s32.totalorder %s19, 3
      %s191 = scalar_select %p190, %s19, 3
      %p192 = scmp.lt.s32.totalorder %s189, 3
      %s193 = scalar_select %p192, %s189, 3
      %s194 = smul.addr %s191, 4
      %s195 = sadd.s32 %s193, %s194
      %s196 = smul.addr %s195, 8
      %s197 = scalar_lea.vmem %s0, %s196
      %p198 = pneg %p50
      %p199 = pneg %p47
      %p200 = pneg %p71
      %p201 = pneg %p68
      %p202 = pneg %p92
      %p203 = pneg %p89
      %p204 = pneg %p113
      %p205 = pneg %p110
      %p206 = pneg %p141
      %p207 = pneg %p138
      %s208 = smul.u32 4, %s20
      %p209 = scmp.lt.s32.totalorder %s19, 3
      %s210 = scalar_select %p209, %s19, 3
      %p211 = scmp.lt.s32.totalorder %s208, 3
      %s212 = scalar_select %p211, %s208, 3
      %s213 = smul.addr %s210, 4
      %s214 = sadd.s32 %s212, %s213
      %s215 = smul.addr %s214, 4
      %s216 = scalar_lea.vmem %s4, %s215
      %s217 = smul.u32 4, %s20
      %p218 = scmp.lt.s32.totalorder %s19, 3
      %s219 = scalar_select %p218, %s19, 3
      %p220 = scmp.lt.s32.totalorder %s217, 3
      %s221 = scalar_select %p220, %s217, 3
      %s222 = smul.addr %s219, 4
      %s223 = sadd.s32 %s221, %s222
      %s224 = smul.addr %s223, 8
      %s225 = scalar_lea.vmem %s0, %s224
      %s226 = smul.u32 4, %s20
      %s227 = smul.u32 4, %s20
      %p228 = scmp.lt.s32.totalorder %s19, 3
      %s229 = scalar_select %p228, %s19, 3
      %p230 = scmp.lt.s32.totalorder %s227, 3
      %s231 = scalar_select %p230, %s227, 3
      %s232 = smul.addr %s229, 4
      %s233 = sadd.s32 %s231, %s232
      %s234 = smul.addr %s233, 4
      %s235 = scalar_lea.vmem %s4, %s234
      %s236 = smul.u32 4, %s20
      %v237 = vld [vmem:[%s1] sm:$0x3]
      %v238 = vmul.f32 %v237, 0.0078125
      %v239 = vmul.f32 %v238, %v238
      %v241 = vrot.slane %v239, 7
      %v243 = vsub.f32 %v238, %v241
      %v244 = vmax.f32 %v243, 0.0
      %v245 = vld [vmem:[%s2] sm:$0x1]
      %v246 = vadd.f32 %v244, 1e-05
      %v247 = vrsqrt.pop %v246
      %v250 = vunpack.c.l.s4 1966171168
      %v251 = vunpack.c.0.s8 %v250
      %v252 = vlaneseq
      %v253 = vshrl.u32 %v252, 7
      %v254 = vsub.s32 %v251, %v253
      %v255 = vrot.slane %v247, %v254
      %v256 = vcombine.high %v255, %v255
      %v258 = vunpack.c.l.s4 1966171168
      %v259 = vunpack.c.0.s8 %v258
      %v260 = vlaneseq
      %v261 = vshrl.u32 %v260, 7
      %v262 = vsub.s32 %v259, %v261
      %v263 = vrot.slane %v256, %v262
      %v265 = vmul.f32 %v245, %v263
      %v266 = vld [vmem:[%s3] sm:$0x1]
      %v267 = vmul.f32 %v238, %v265
      %v268 = vsub.f32 %v266, %v267
      %v269 = vld [vmem:[%s225] sm:$0xff]
      %v270 = vld [vmem:[%s225 + $0x8] sm:$0xff]
      %v271 = vld [vmem:[%s225 + $0x10] sm:$0xff]
      %v272 = vld [vmem:[%s225 + $0x18] sm:$0xff]
      %v274 = vlaneseq
      %v275 = vshrl.u32 %v274, 7
      %v276 = vsub.s32 0, %v275
      %v277 = vrot.slane %v265, %v276
      %v279 = vmul.f32 %v269, %v277
      %v280 = vmul.f32 %v270, %v277
      %v281 = vmul.f32 %v271, %v277
      %v282 = vmul.f32 %v272, %v277
      %v284 = vlaneseq
      %v285 = vshrl.u32 %v284, 7
      %v286 = vsub.s32 0, %v285
      %v287 = vrot.slane %v268, %v286
      %v289 = vadd.f32 %v279, %v287
      %v290 = vadd.f32 %v280, %v287
      %v291 = vadd.f32 %v281, %v287
      %v292 = vadd.f32 %v282, %v287
      %v293 = vmax.f32 %v289, 0.0
      %v294 = vmax.f32 %v290, 0.0
      %v295 = vmax.f32 %v291, 0.0
      %v296 = vmax.f32 %v292, 0.0
      %v297 = vpack.c.bf16 %v294, %v293
      %v298 = vpack.c.bf16 %v296, %v295
      %v301 = vunpack.c.l.b16 %v297
      %v302 = vunpack.c.h.b16 %v297
      %v303 = vunpack.c.l.b16 %v298
      %v304 = vunpack.c.h.b16 %v298
      %v305 = vpack.c.b16 %v301, %v301
      %v306 = vpack.c.b16 %v302, %v302
      %v307 = vpack.c.b16 %v303, %v303
      %v308 = vpack.c.b16 %v304, %v304
      %313 = vst [vmem:[%s235] sm:$0xf] %v305
      %314 = vst [vmem:[%s235 + $0x4] sm:$0xf] %v306
      %315 = vst [vmem:[%s235 + $0x8] sm:$0xf] %v307
      %316 = vst [vmem:[%s235 + $0xc] sm:$0xf] %v308
      %s317 = smul.u32 4, %s20
      %p318 = scmp.lt.s32.totalorder %s19, 3
      %s319 = scalar_select %p318, %s19, 3
      %p320 = scmp.lt.s32.totalorder %s317, 3
      %s321 = scalar_select %p320, %s317, 3
      %s322 = smul.addr %s319, 4
      %s323 = sadd.s32 %s321, %s322
      %s324 = smul.addr %s323, 4
      %s325 = scalar_lea.vmem %s4, %s324
      // Predicated region
      $region37: #{generator_forward.12} parent=35 // pred_check
        %p326 = pneg %p138
      $region38: #{generator_forward.12} parent=35 // pred_check_branch
        %328 = sbr.rel (%p326) target = $region40
      $region39: #{generator_forward.12} parent=35 // pred_region
        %s329 = smul.u32 4, %s20
      $region40: #{generator_forward.12} parent=35 // pred_fallthru
        _
    $region36: #{generator_forward.12} parent=5 // pred_fallthru
      _
    %p330 = scmp.le.s32.totalorder 2, %s10
    // Predicated region
    $region41: #{generator_forward.12} parent=5 // pred_check
      %p331 = pneg %p330
    $region42: #{generator_forward.12} parent=5 // pred_check_branch
      %333 = sbr.rel (%p331) target = $region44
    $region43: #{generator_forward.12} parent=5 // pred_region
      %s334 = ssub.s32 %s10, 2
      // Predicated region
      $region45: #{generator_forward.12} parent=43 // pred_check
        %p335 = pneg %p144
      $region46: #{generator_forward.12} parent=43 // pred_check_branch
        %337 = sbr.rel (%p335) target = $region48
      $region47: #{generator_forward.12} parent=43 // pred_region
        %s338 = smul.u32 4, %s22
        %p339 = scmp.lt.s32.totalorder %s21, 3
        %s340 = scalar_select %p339, %s21, 3
        %p341 = scmp.lt.s32.totalorder %s338, 3
        %s342 = scalar_select %p341, %s338, 3
        %s343 = smul.addr %s340, 4
        %s344 = sadd.s32 %s342, %s343
        %s345 = smul.addr %s344, 4
        %s346 = scalar_lea.vmem %s4, %s345
      $region48: #{generator_forward.12} parent=43 // pred_fallthru
        _
    $region44: #{generator_forward.12} parent=5 // pred_fallthru
      _
  $region6: #{generator_forward.12} parent=0 // loop_footer
    %s14 = sadd.s32 1, %s10
  $region7: #{generator_forward.12} parent=0 // loop_footer_branch
    %9 = sbr.rel target = $region3
  $region8: #{generator_forward.12} parent=0 // loop_exit
    _

// kernel: generator_forward.13
$region0: #{generator_forward.13}
  #allocation0 [shape = 'u32[]', space=smem, size = 0x4, offset = 0x4, fixed_abs, tag = 'smem constant byte address 0x4 - core index']
  #allocation1 [shape = 'u32[144,128]{1,0:T(1,128)}', space=vmem, size = 0x12000, scoped, tag = 'internal scratch']
  %s0 = inlined_call_operand.vmem [shape: bf16[4,128,32], index: 0, kind: input, shape index: {}]
  %s1 = inlined_call_operand.vmem [shape: bf16[4,32,128], index: 1, kind: input, shape index: {}]
  %s2 = inlined_call_operand.vmem [shape: f32[4,128,128], index: 2, kind: output, shape index: {0}]
  %s3 = inlined_call_operand.vmem [shape: f32[4,1,2,128], index: 3, kind: output, shape index: {1}]
  %4 = xla_tuple %s2, %s3
  %s5 = sld [smem:[#allocation0]]
  $region49: #{generator_forward.13} parent=0
    _
  %s7 = ssub.s32 1, %s5
  %s8 = scalar_select 0, %s7, %s5
  loop: start=0, step=1, limit=6
  $region2: #{generator_forward.13} parent=0 // loop_pre_header
    _
  $region3: #{generator_forward.13} parent=0 // loop_header
    %s10 = sphi 0, %s14
    %p11 = scmp.ge.s32.totalorder %s10, 6
    %s17 = sphi 0, %s29
    %s18 = sphi 0, %s25
    %s19 = sphi 0, %s17
    %s20 = sphi 0, %s18
    %s21 = sphi 0, %s19
    %s22 = sphi 0, %s20
    %s34 = sphi 0, %s36
    %s37 = sphi 0, %s34
    %s38 = sphi 0, %s37
    %s54 = sphi 0, %s38
    %s60 = sphi 0, %s62
    %s63 = sphi 0, %s60
    %s64 = sphi 0, %s63
    %s80 = sphi 0, %s64
    %s88 = sphi 0, %s90
    %s91 = sphi 0, %s88
    %s92 = sphi 0, %s91
    %s108 = sphi 0, %s92
    %s116 = sphi 0, %s118
    %s119 = sphi 0, %s116
    %s120 = sphi 0, %s119
    %s136 = sphi 0, %s120
  $region4: #{generator_forward.13} parent=0 // loop_header_branch
    %13 = sbr.rel (%p11) target = $region8
  $region5: #{generator_forward.13} parent=0 // loop_body
    %s15 = ssub.s32 %s10, 1
    %s16 = ssub.s32 %s10, 2
    %s23 = sadd.s32 1, %s18
    %p24 = scmp.ge.s32.totalorder %s23, 1
    %s25 = scalar_select %p24, 0, %s23
    %s26 = sadd.s32 1, %s17
    %s27 = scalar_select %p24, %s26, %s17
    %p28 = scmp.ge.s32.totalorder %s27, 4
    %s29 = scalar_select %p28, 0, %s27
    %s30 = ssub.s32 %s17, %s29
    %s31 = ssub.s32 %s18, %s25
    %s32 = sor.u32 %s30, %s31
    %p33 = scmp.eq.s32.totalorder %s32, 0
    %s35 = sadd.s32 %s34, 1
    %s36 = scalar_select %p33, %s34, %s35
    %p39 = pneg %p33
    %p40 = scmp.eq.s32.totalorder %s10, 3
    %p41 = por %p39, %p40
    %p42 = scmp.ne.s32.totalorder %s34, %s37
    %p43 = scmp.eq.s32.totalorder %s10, 0
    %p44 = por %p42, %p43
    %p45 = scmp.ne.s32.totalorder %s34, %s37
    %p46 = scmp.eq.s32.totalorder %s15, 3
    %p47 = por %p45, %p46
    %p48 = scmp.ne.s32.totalorder %s37, %s38
    %p49 = scmp.eq.s32.totalorder %s15, 0
    %p50 = por %p48, %p49
    %p51 = scmp.ne.s32.totalorder %s37, %s38
    %p52 = scmp.eq.s32.totalorder %s16, 3
    %p53 = por %p51, %p52
    %p55 = scmp.ne.s32.totalorder %s38, %s54
    %p56 = scmp.eq.s32.totalorder %s16, 0
    %p57 = por %p55, %p56
    %s58 = ssub.s32 %s17, %s29
    %p59 = scmp.eq.s32.totalorder %s58, 0
    %s61 = sadd.s32 %s60, 1
    %s62 = scalar_select %p59, %s60, %s61
    %p65 = pneg %p59
    %p66 = scmp.eq.s32.totalorder %s10, 3
    %p67 = por %p65, %p66
    %p68 = scmp.ne.s32.totalorder %s60, %s63
    %p69 = scmp.eq.s32.totalorder %s10, 0
    %p70 = por %p68, %p69
    %p71 = scmp.ne.s32.totalorder %s60, %s63
    %p72 = scmp.eq.s32.totalorder %s15, 3
    %p73 = por %p71, %p72
    %p74 = scmp.ne.s32.totalorder %s63, %s64
    %p75 = scmp.eq.s32.totalorder %s15, 0
    %p76 = por %p74, %p75
    %p77 = scmp.ne.s32.totalorder %s63, %s64
    %p78 = scmp.eq.s32.totalorder %s16, 3
    %p79 = por %p77, %p78
    %p81 = scmp.ne.s32.totalorder %s64, %s80
    %p82 = scmp.eq.s32.totalorder %s16, 0
    %p83 = por %p81, %p82
    %s84 = ssub.s32 %s17, %s29
    %s85 = ssub.s32 %s18, %s25
    %s86 = sor.u32 %s84, %s85
    %p87 = scmp.eq.s32.totalorder %s86, 0
    %s89 = sadd.s32 %s88, 1
    %s90 = scalar_select %p87, %s88, %s89
    %p93 = pneg %p87
    %p94 = scmp.eq.s32.totalorder %s10, 3
    %p95 = por %p93, %p94
    %p96 = scmp.ne.s32.totalorder %s88, %s91
    %p97 = scmp.eq.s32.totalorder %s10, 0
    %p98 = por %p96, %p97
    %p99 = scmp.ne.s32.totalorder %s88, %s91
    %p100 = scmp.eq.s32.totalorder %s15, 3
    %p101 = por %p99, %p100
    %p102 = scmp.ne.s32.totalorder %s91, %s92
    %p103 = scmp.eq.s32.totalorder %s15, 0
    %p104 = por %p102, %p103
    %p105 = scmp.ne.s32.totalorder %s91, %s92
    %p106 = scmp.eq.s32.totalorder %s16, 3
    %p107 = por %p105, %p106
    %p109 = scmp.ne.s32.totalorder %s92, %s108
    %p110 = scmp.eq.s32.totalorder %s16, 0
    %p111 = por %p109, %p110
    %s112 = ssub.s32 %s17, %s29
    %s113 = ssub.s32 %s18, %s25
    %s114 = sor.u32 %s112, %s113
    %p115 = scmp.eq.s32.totalorder %s114, 0
    %s117 = sadd.s32 %s116, 1
    %s118 = scalar_select %p115, %s116, %s117
    %p121 = pneg %p115
    %p122 = scmp.eq.s32.totalorder %s10, 3
    %p123 = por %p121, %p122
    %p124 = scmp.ne.s32.totalorder %s116, %s119
    %p125 = scmp.eq.s32.totalorder %s10, 0
    %p126 = por %p124, %p125
    %p127 = scmp.ne.s32.totalorder %s116, %s119
    %p128 = scmp.eq.s32.totalorder %s15, 3
    %p129 = por %p127, %p128
    %p130 = scmp.ne.s32.totalorder %s119, %s120
    %p131 = scmp.eq.s32.totalorder %s15, 0
    %p132 = por %p130, %p131
    %p133 = scmp.ne.s32.totalorder %s119, %s120
    %p134 = scmp.eq.s32.totalorder %s16, 3
    %p135 = por %p133, %p134
    %p137 = scmp.ne.s32.totalorder %s120, %s136
    %p138 = scmp.eq.s32.totalorder %s16, 0
    %p139 = por %p137, %p138
    %p140 = scmp.le.s32.totalorder 1, %s10
    %p141 = scmp.lt.s32.totalorder %s10, 5
    %p142 = pnand %p140, %p141
    %p143 = pneg %p142
    // Predicated region
    $region9: #{generator_forward.13} parent=5 // pred_check
      _
    $region10: #{generator_forward.13} parent=5 // pred_check_branch
      %145 = sbr.rel (%p142) target = $region12
    $region11: #{generator_forward.13} parent=5 // pred_region
      %s146 = ssub.s32 %s10, 1
    $region12: #{generator_forward.13} parent=5 // pred_fallthru
      _
    %p147 = scmp.lt.s32.totalorder %s10, 4
    // Predicated region
    $region13: #{generator_forward.13} parent=5 // pred_check
      %p148 = pneg %p147
    $region14: #{generator_forward.13} parent=5 // pred_check_branch
      %150 = sbr.rel (%p148) target = $region16
    $region15: #{generator_forward.13} parent=5 // pred_region
      // Predicated region
      $region17: #{generator_forward.13} parent=15 // pred_check
        %p151 = pneg %p44
      $region18: #{generator_forward.13} parent=15 // pred_check_branch
        %153 = sbr.rel (%p151) target = $region20
      $region19: #{generator_forward.13} parent=15 // pred_region
        %s154 = smul.u32 16, %s18
        %p155 = scmp.lt.s32.totalorder %s17, 3
        %s156 = scalar_select %p155, %s17, 3
        %p157 = scmp.lt.s32.totalorder %s154, 15
        %s158 = scalar_select %p157, %s154, 15
        %s159 = smul.addr %s156, 16
        %s160 = sadd.s32 %s158, %s159
        %s161 = smul.addr %s160, 4
        %s162 = scalar_lea.vmem %s0, %s161
        %s163 = smul.u32 16, %s18
      $region20: #{generator_forward.13} parent=15 // pred_fallthru
        _
      // Predicated region
      $region21: #{generator_forward.13} parent=15 // pred_check
        %p164 = pneg %p70
      $region22: #{generator_forward.13} parent=15 // pred_check_branch
        %166 = sbr.rel (%p164) target = $region24
      $region23: #{generator_forward.13} parent=15 // pred_region
        %p167 = scmp.lt.s32.totalorder %s17, 3
        %s168 = scalar_select %p167, %s17, 3
        %s169 = smul.addr %s168, 4
        %s170 = smul.addr %s169, 4
        %s171 = scalar_lea.vmem %s1, %s170
      $region24: #{generator_forward.13} parent=15 // pred_fallthru
        _
    $region16: #{generator_forward.13} parent=5 // pred_fallthru
      _
    %p172 = scmp.le.s32.totalorder 1, %s10
    %p173 = scmp.lt.s32.totalorder %s10, 5
    %p174 = pnand %p172, %p173
    %p175 = pneg %p174
    // Predicated region
    $region25: #{generator_forward.13} parent=5 // pred_check
      _
    $region26: #{generator_forward.13} parent=5 // pred_check_branch
      %177 = sbr.rel (%p174) target = $region28
    $region27: #{generator_forward.13} parent=5 // pred_region
      %s178 = ssub.s32 %s10, 1
      %s179 = smul.u32 16, %s20
      %p180 = scmp.lt.s32.totalorder %s19, 3
      %s181 = scalar_select %p180, %s19, 3
      %p182 = scmp.lt.s32.totalorder %s179, 15
      %s183 = scalar_select %p182, %s179, 15
      %s184 = smul.addr %s181, 16
      %s185 = sadd.s32 %s183, %s184
      %s186 = smul.addr %s185, 4
      %s187 = scalar_lea.vmem %s0, %s186
      %p188 = pneg %p50
      %p189 = pneg %p47
      %p190 = scmp.lt.s32.totalorder %s19, 3
      %s191 = scalar_select %p190, %s19, 3
      %s192 = smul.addr %s191, 4
      %s193 = smul.addr %s192, 4
      %s194 = scalar_lea.vmem %s1, %s193
      %p195 = pneg %p76
      %p196 = pneg %p73
      %p197 = pneg %p104
      %p198 = pneg %p101
      %s199 = smul.u32 16, %s20
      %p200 = scmp.lt.s32.totalorder %s19, 3
      %s201 = scalar_select %p200, %s19, 3
      %p202 = scmp.lt.s32.totalorder %s199, 15
      %s203 = scalar_select %p202, %s199, 15
      %s204 = smul.addr %s201, 16
      %s205 = sadd.s32 %s203, %s204
      %s206 = smul.addr %s205, 8
      %s207 = scalar_lea.vmem %s2, %s206
      %p208 = pneg %p132
      %p209 = pneg %p129
      %p210 = scmp.lt.s32.totalorder %s19, 3
      %s211 = scalar_select %p210, %s19, 3
      %p212 = scmp.lt.s32.totalorder %s20, 0
      %s213 = scalar_select %p212, %s20, 0
      %s214 = sadd.s32 %s213, %s211
      %s215 = smul.addr %s214, 2
      %s216 = scalar_lea.vmem %s3, %s215
      %s217 = smul.u32 16, %s20
      %p218 = scmp.lt.s32.totalorder %s19, 3
      %s219 = scalar_select %p218, %s19, 3
      %p220 = scmp.lt.s32.totalorder %s217, 15
      %s221 = scalar_select %p220, %s217, 15
      %s222 = smul.addr %s219, 16
      %s223 = sadd.s32 %s221, %s222
      %s224 = smul.addr %s223, 4
      %s225 = scalar_lea.vmem %s0, %s224
      %s226 = smul.u32 16, %s20
      %p227 = scmp.lt.s32.totalorder %s19, 3
      %s228 = scalar_select %p227, %s19, 3
      %s229 = smul.addr %s228, 4
      %s230 = smul.addr %s229, 4
      %s231 = scalar_lea.vmem %s1, %s230
      %s232 = smul.u32 16, %s20
      %p233 = scmp.lt.s32.totalorder %s19, 3
      %s234 = scalar_select %p233, %s19, 3
      %p235 = scmp.lt.s32.totalorder %s232, 15
      %s236 = scalar_select %p235, %s232, 15
      %s237 = smul.addr %s234, 16
      %s238 = sadd.s32 %s236, %s237
      %s239 = smul.addr %s238, 8
      %s240 = scalar_lea.vmem %s2, %s239
      %s241 = smul.u32 16, %s20
      %p242 = scmp.lt.s32.totalorder %s19, 3
      %s243 = scalar_select %p242, %s19, 3
      %p244 = scmp.lt.s32.totalorder %s20, 0
      %s245 = scalar_select %p244, %s20, 0
      %s246 = sadd.s32 %s245, %s243
      %s247 = smul.addr %s246, 2
      %s248 = scalar_lea.vmem %s3, %s247
      %v250 = vld [vmem:[%s225] sm:$0xf]
      %v251 = vld [vmem:[%s225 + $0x4] sm:$0xf]
      %v252 = vld [vmem:[%s225 + $0x8] sm:$0xf]
      %v253 = vld [vmem:[%s225 + $0xc] sm:$0xf]
      %v254 = vld [vmem:[%s225 + $0x10] sm:$0xf]
      %v255 = vld [vmem:[%s225 + $0x14] sm:$0xf]
      %v256 = vld [vmem:[%s225 + $0x18] sm:$0xf]
      %v257 = vld [vmem:[%s225 + $0x1c] sm:$0xf]
      %v258 = vld [vmem:[%s225 + $0x20] sm:$0xf]
      %v259 = vld [vmem:[%s225 + $0x24] sm:$0xf]
      %v260 = vld [vmem:[%s225 + $0x28] sm:$0xf]
      %v261 = vld [vmem:[%s225 + $0x2c] sm:$0xf]
      %v262 = vld [vmem:[%s225 + $0x30] sm:$0xf]
      %v263 = vld [vmem:[%s225 + $0x34] sm:$0xf]
      %v264 = vld [vmem:[%s225 + $0x38] sm:$0xf]
      %v265 = vld [vmem:[%s225 + $0x3c] sm:$0xf]
      %v266 = vld [vmem:[%s231] sm:$0xf]
      %v267 = vld [vmem:[%s231 + $0x4] sm:$0xf]
      %v268 = vld [vmem:[%s231 + $0x8] sm:$0xf]
      %v269 = vld [vmem:[%s231 + $0xc] sm:$0xf]
      %v286 = vunpack.c.l.b16 %v250
      %v287 = vunpack.c.l.b16 %v251
      %v288 = vunpack.c.l.b16 %v252
      %v289 = vunpack.c.l.b16 %v253
      %v290 = vunpack.c.l.b16 %v254
      %v291 = vunpack.c.l.b16 %v255
      %v292 = vunpack.c.l.b16 %v256
      %v293 = vunpack.c.l.b16 %v257
      %v294 = vunpack.c.l.b16 %v258
      %v295 = vunpack.c.l.b16 %v259
      %v296 = vunpack.c.l.b16 %v260
      %v297 = vunpack.c.l.b16 %v261
      %v298 = vunpack.c.l.b16 %v262
      %v299 = vunpack.c.l.b16 %v263
      %v300 = vunpack.c.l.b16 %v264
      %v301 = vunpack.c.l.b16 %v265
      %v302 = vpack.c.b16 %v287, %v286
      %v303 = vpack.c.b16 %v289, %v288
      %v304 = vpack.c.b16 %v291, %v290
      %v305 = vpack.c.b16 %v293, %v292
      %v306 = vpack.c.b16 %v295, %v294
      %v307 = vpack.c.b16 %v297, %v296
      %v308 = vpack.c.b16 %v299, %v298
      %v309 = vpack.c.b16 %v301, %v300
      %v314 = vunpack.c.l.b16 %v266
      %v315 = vunpack.c.l.b16 %v267
      %v316 = vunpack.c.l.b16 %v268
      %v317 = vunpack.c.l.b16 %v269
      %v318 = vpack.c.b16 %v315, %v314
      %v319 = vpack.c.b16 %v317, %v316
      %vm322 = vcmask 261120
      %v324 = vsel %vm322, %v302, 0
      %v327 = vsel %vm322, %v303, 0
      %v330 = vsel %vm322, %v304, 0
      %v333 = vsel %vm322, %v305, 0
      %v336 = vsel %vm322, %v306, 0
      %v339 = vsel %vm322, %v307, 0
      %v342 = vsel %vm322, %v308, 0
      %v345 = vsel %vm322, %v309, 0
      %347 = vmatprep.subr.bf16.mxu0 0
      %348 = vmatpush1.bf16.msra.mxu0 0
      %349 = vmatprep.subr.bf16.mxu0 0
      %350 = vmatpush1.bf16.msra.mxu0 0
      %351 = vmatprep.subr.bf16.mxu0 0
      %352 = vmatpush1.bf16.msra.mxu0 0
      %353 = vmatprep.subr.bf16.mxu0 0
      %354 = vmatpush1.bf16.msra.mxu0 0
      %355 = vmatprep.subr.bf16.mxu0 0
      %356 = vmatpush1.bf16.msra.mxu0 0
      %357 = vmatprep.subr.bf16.mxu0 0
      %358 = vmatpush1.bf16.msra.mxu0 0
      %359 = vmatprep.subr.bf16.mxu0 0
      %360 = vmatpush1.bf16.msra.mxu0 %v319
      %361 = vmatprep.subr.bf16.mxu0 0
      %362 = vmatpush1.bf16.msra.mxu0 %v318
      %363 = vmatprep.subr.bf16.mxu0 0
      %364 = vmatpush2.bf16.msra.mxu0 0
      %365 = vmatprep.subr.bf16.mxu0 0
      %366 = vmatpush2.bf16.msra.mxu0 0
      %367 = vmatprep.subr.bf16.mxu0 0
      %368 = vmatpush2.bf16.msra.mxu0 0
      %369 = vmatprep.subr.bf16.mxu0 0
      %370 = vmatpush2.bf16.msra.mxu0 0
      %371 = vmatprep.subr.bf16.mxu0 0
      %372 = vmatpush2.bf16.msra.mxu0 0
      %373 = vmatprep.subr.bf16.mxu0 0
      %374 = vmatpush2.bf16.msra.mxu0 0
      %375 = vmatprep.subr.bf16.mxu0 0
      %376 = vmatpush2.bf16.msra.mxu0 0
      %377 = vmatprep.subr.bf16.mxu0 0
      %378 = vmatpush2.bf16.msra.mxu0 0
      %379 = vmatprep.mubr.bf16.mxu0 0
      %380 = vmatmul.mubr.bf16.gmra.mxu0 %v324
      %v381 = vpop.f32.mrf.mxu0
      %v382 = vadd.f32 0.0, %v381
      %v383 = vpop.f32.mrf.mxu0
      %v384 = vpop.f32.mrf.mxu0
      %v385 = vadd.f32 0.0, %v384
      %v386 = vpop.f32.mrf.mxu0
      %387 = vmatprep.mubr.bf16.mxu0 0
      %388 = vmatmul.mubr.bf16.gmra.mxu0 %v327
      %v389 = vpop.f32.mrf.mxu0
      %v390 = vadd.f32 0.0, %v389
      %v391 = vpop.f32.mrf.mxu0
      %v392 = vpop.f32.mrf.mxu0
      %v393 = vadd.f32 0.0, %v392
      %v394 = vpop.f32.mrf.mxu0
      %395 = vmatprep.mubr.bf16.mxu0 0
      %396 = vmatmul.mubr.bf16.gmra.mxu0 %v330
      %v397 = vpop.f32.mrf.mxu0
      %v398 = vadd.f32 0.0, %v397
      %v399 = vpop.f32.mrf.mxu0
      %v400 = vpop.f32.mrf.mxu0
      %v401 = vadd.f32 0.0, %v400
      %v402 = vpop.f32.mrf.mxu0
      %403 = vmatprep.mubr.bf16.mxu0 0
      %404 = vmatmul.mubr.bf16.gmra.mxu0 %v333
      %v405 = vpop.f32.mrf.mxu0
      %v406 = vadd.f32 0.0, %v405
      %v407 = vpop.f32.mrf.mxu0
      %v408 = vpop.f32.mrf.mxu0
      %v409 = vadd.f32 0.0, %v408
      %v410 = vpop.f32.mrf.mxu0
      %411 = vmatprep.mubr.bf16.mxu0 0
      %412 = vmatmul.mubr.bf16.gmra.mxu0 %v336
      %v413 = vpop.f32.mrf.mxu0
      %v414 = vadd.f32 0.0, %v413
      %v415 = vpop.f32.mrf.mxu0
      %v416 = vpop.f32.mrf.mxu0
      %v417 = vadd.f32 0.0, %v416
      %v418 = vpop.f32.mrf.mxu0
      %419 = vmatprep.mubr.bf16.mxu0 0
      %420 = vmatmul.mubr.bf16.gmra.mxu0 %v339
      %v421 = vpop.f32.mrf.mxu0
      %v422 = vadd.f32 0.0, %v421
      %v423 = vpop.f32.mrf.mxu0
      %v424 = vpop.f32.mrf.mxu0
      %v425 = vadd.f32 0.0, %v424
      %v426 = vpop.f32.mrf.mxu0
      %427 = vmatprep.mubr.bf16.mxu0 0
      %428 = vmatmul.mubr.bf16.gmra.mxu0 %v342
      %v429 = vpop.f32.mrf.mxu0
      %v430 = vadd.f32 0.0, %v429
      %v431 = vpop.f32.mrf.mxu0
      %v432 = vpop.f32.mrf.mxu0
      %v433 = vadd.f32 0.0, %v432
      %v434 = vpop.f32.mrf.mxu0
      %435 = vmatprep.mubr.bf16.mxu0 0
      %436 = vmatmul.mubr.bf16.gmra.mxu0 %v345
      %v437 = vpop.f32.mrf.mxu0
      %v438 = vadd.f32 0.0, %v437
      %v439 = vpop.f32.mrf.mxu0
      %v440 = vpop.f32.mrf.mxu0
      %v441 = vadd.f32 0.0, %v440
      %v442 = vpop.f32.mrf.mxu0
      %443 = vdwg.mxu0
      %444 = vst [vmem:[%s240] sm:$0xff] %v382
      %445 = vst [vmem:[%s240 + $0x8] sm:$0xff] %v385
      %446 = vst [vmem:[%s240 + $0x10] sm:$0xff] %v390
      %447 = vst [vmem:[%s240 + $0x18] sm:$0xff] %v393
      %448 = vst [vmem:[%s240 + $0x20] sm:$0xff] %v398
      %449 = vst [vmem:[%s240 + $0x28] sm:$0xff] %v401
      %450 = vst [vmem:[%s240 + $0x30] sm:$0xff] %v406
      %451 = vst [vmem:[%s240 + $0x38] sm:$0xff] %v409
      %452 = vst [vmem:[%s240 + $0x40] sm:$0xff] %v414
      %453 = vst [vmem:[%s240 + $0x48] sm:$0xff] %v417
      %454 = vst [vmem:[%s240 + $0x50] sm:$0xff] %v422
      %455 = vst [vmem:[%s240 + $0x58] sm:$0xff] %v425
      %456 = vst [vmem:[%s240 + $0x60] sm:$0xff] %v430
      %457 = vst [vmem:[%s240 + $0x68] sm:$0xff] %v433
      %458 = vst [vmem:[%s240 + $0x70] sm:$0xff] %v438
      %459 = vst [vmem:[%s240 + $0x78] sm:$0xff] %v441
      %460 = vmatprep.subr.mxu0 0.0
      %461 = vmatpush1.msra.mxu0 %v441
      %462 = vmatprep.subr.mxu0 0.0
      %463 = vmatpush1.msra.mxu0 %v438
      %464 = vmatprep.subr.mxu0 0.0
      %465 = vmatpush1.msra.mxu0 %v433
      %466 = vmatprep.subr.mxu0 0.0
      %467 = vmatpush1.msra.mxu0 %v430
      %468 = vmatprep.subr.mxu0 0.0
      %469 = vmatpush1.msra.mxu0 %v425
      %470 = vmatprep.subr.mxu0 0.0
      %471 = vmatpush1.msra.mxu0 %v422
      %472 = vmatprep.subr.mxu0 0.0
      %473 = vmatpush1.msra.mxu0 %v417
      %474 = vmatprep.subr.mxu0 0.0
      %475 = vmatpush1.msra.mxu0 %v414
      %476 = vmatprep.subr.mxu0 0.0
      %477 = vmatpush1.msra.mxu0 %v409
      %478 = vmatprep.subr.mxu0 0.0
      %479 = vmatpush1.msra.mxu0 %v406
      %480 = vmatprep.subr.mxu0 0.0
      %481 = vmatpush1.msra.mxu0 %v401
      %482 = vmatprep.subr.mxu0 0.0
      %483 = vmatpush1.msra.mxu0 %v398
      %484 = vmatprep.subr.mxu0 0.0
      %485 = vmatpush1.msra.mxu0 %v393
      %486 = vmatprep.subr.mxu0 0.0
      %487 = vmatpush1.msra.mxu0 %v390
      %488 = vmatprep.subr.mxu0 0.0
      %489 = vmatpush1.msra.mxu0 %v385
      %490 = vmatprep.subr.mxu0 0.0
      %491 = vmatpush1.msra.mxu0 %v382
      %492 = vmatprep.subr.mxu0 0.0
      %493 = vmatpush2.msra.mxu0 0.0
      %494 = vmatprep.subr.mxu0 0.0
      %495 = vmatpush2.msra.mxu0 0.0
      %496 = vmatprep.subr.mxu0 0.0
      %497 = vmatpush2.msra.mxu0 0.0
      %498 = vmatprep.subr.mxu0 0.0
      %499 = vmatpush2.msra.mxu0 0.0
      %500 = vmatprep.subr.mxu0 0.0
      %501 = vmatpush2.msra.mxu0 0.0
      %502 = vmatprep.subr.mxu0 0.0
      %503 = vmatpush2.msra.mxu0 0.0
      %504 = vmatprep.subr.mxu0 0.0
      %505 = vmatpush2.msra.mxu0 0.0
      %506 = vmatprep.subr.mxu0 0.0
      %507 = vmatpush2.msra.mxu0 0.0
      %508 = vmatprep.subr.mxu0 0.0
      %509 = vmatpush2.msra.mxu0 0.0
      %510 = vmatprep.subr.mxu0 0.0
      %511 = vmatpush2.msra.mxu0 0.0
      %512 = vmatprep.subr.mxu0 0.0
      %513 = vmatpush2.msra.mxu0 0.0
      %514 = vmatprep.subr.mxu0 0.0
      %515 = vmatpush2.msra.mxu0 0.0
      %516 = vmatprep.subr.mxu0 0.0
      %517 = vmatpush2.msra.mxu0 0.0
      %518 = vmatprep.subr.mxu0 0.0
      %519 = vmatpush2.msra.mxu0 0.0
      %520 = vmatprep.subr.mxu0 0.0
      %521 = vmatpush2.msra.mxu0 0.0
      %522 = vmatprep.subr.mxu0 0.0
      %523 = vmatpush2.msra.mxu0 0.0
      %524 = vmatprep.mubr.f32.mxu0 0.0
      %525 = vmatmul.mubr.f32.gmra.mxu0 1.0
      %v526 = vpop.f32.mrf.mxu0
      %v527 = vadd.f32 0.0, %v526
      %v528 = vpop.f32.mrf.mxu0
      %529 = vdwg.mxu0
      %v530 = vmul.f32 %v382, %v382
      %v531 = vmul.f32 %v385, %v385
      %v532 = vmul.f32 %v390, %v390
      %v533 = vmul.f32 %v393, %v393
      %v534 = vmul.f32 %v398, %v398
      %v535 = vmul.f32 %v401, %v401
      %v536 = vmul.f32 %v406, %v406
      %v537 = vmul.f32 %v409, %v409
      %v538 = vmul.f32 %v414, %v414
      %v539 = vmul.f32 %v417, %v417
      %v540 = vmul.f32 %v422, %v422
      %v541 = vmul.f32 %v425, %v425
      %v542 = vmul.f32 %v430, %v430
      %v543 = vmul.f32 %v433, %v433
      %v544 = vmul.f32 %v438, %v438
      %v545 = vmul.f32 %v441, %v441
      %546 = vmatprep.subr.mxu0 0.0
      %547 = vmatpush1.msra.mxu0 %v545
      %548 = vmatprep.subr.mxu0 0.0
      %549 = vmatpush1.msra.mxu0 %v544
      %550 = vmatprep.subr.mxu0 0.0
      %551 = vmatpush1.msra.mxu0 %v543
      %552 = vmatprep.subr.mxu0 0.0
      %553 = vmatpush1.msra.mxu0 %v542
      %554 = vmatprep.subr.mxu0 0.0
      %555 = vmatpush1.msra.mxu0 %v541
      %556 = vmatprep.subr.mxu0 0.0
      %557 = vmatpush1.msra.mxu0 %v540
      %558 = vmatprep.subr.mxu0 0.0
      %559 = vmatpush1.msra.mxu0 %v539
      %560 = vmatprep.subr.mxu0 0.0
      %561 = vmatpush1.msra.mxu0 %v538
      %562 = vmatprep.subr.mxu0 0.0
      %563 = vmatpush1.msra.mxu0 %v537
      %564 = vmatprep.subr.mxu0 0.0
      %565 = vmatpush1.msra.mxu0 %v536
      %566 = vmatprep.subr.mxu0 0.0
      %567 = vmatpush1.msra.mxu0 %v535
      %568 = vmatprep.subr.mxu0 0.0
      %569 = vmatpush1.msra.mxu0 %v534
      %570 = vmatprep.subr.mxu0 0.0
      %571 = vmatpush1.msra.mxu0 %v533
      %572 = vmatprep.subr.mxu0 0.0
      %573 = vmatpush1.msra.mxu0 %v532
      %574 = vmatprep.subr.mxu0 0.0
      %575 = vmatpush1.msra.mxu0 %v531
      %576 = vmatprep.subr.mxu0 0.0
      %577 = vmatpush1.msra.mxu0 %v530
      %578 = vmatprep.subr.mxu0 0.0
      %579 = vmatpush2.msra.mxu0 0.0
      %580 = vmatprep.subr.mxu0 0.0
      %581 = vmatpush2.msra.mxu0 0.0
      %582 = vmatprep.subr.mxu0 0.0
      %583 = vmatpush2.msra.mxu0 0.0
      %584 = vmatprep.subr.mxu0 0.0
      %585 = vmatpush2.msra.mxu0 0.0
      %586 = vmatprep.subr.mxu0 0.0
      %587 = vmatpush2.msra.mxu0 0.0
      %588 = vmatprep.subr.mxu0 0.0
      %589 = vmatpush2.msra.mxu0 0.0
      %590 = vmatprep.subr.mxu0 0.0
      %591 = vmatpush2.msra.mxu0 0.0
      %592 = vmatprep.subr.mxu0 0.0
      %593 = vmatpush2.msra.mxu0 0.0
      %594 = vmatprep.subr.mxu0 0.0
      %595 = vmatpush2.msra.mxu0 0.0
      %596 = vmatprep.subr.mxu0 0.0
      %597 = vmatpush2.msra.mxu0 0.0
      %598 = vmatprep.subr.mxu0 0.0
      %599 = vmatpush2.msra.mxu0 0.0
      %600 = vmatprep.subr.mxu0 0.0
      %601 = vmatpush2.msra.mxu0 0.0
      %602 = vmatprep.subr.mxu0 0.0
      %603 = vmatpush2.msra.mxu0 0.0
      %604 = vmatprep.subr.mxu0 0.0
      %605 = vmatpush2.msra.mxu0 0.0
      %606 = vmatprep.subr.mxu0 0.0
      %607 = vmatpush2.msra.mxu0 0.0
      %608 = vmatprep.subr.mxu0 0.0
      %609 = vmatpush2.msra.mxu0 0.0
      %610 = vmatprep.mubr.f32.mxu0 0.0
      %611 = vmatmul.mubr.f32.gmra.mxu0 1.0
      %v612 = vpop.f32.mrf.mxu0
      %v613 = vadd.f32 0.0, %v612
      %v614 = vpop.f32.mrf.mxu0
      %615 = vdwg.mxu0
      %v617 = vrot.slane %v613, 7
      %vm619 = vcmask 1040384
      %v620 = vsel %vm619, %v527, %v617
      %621 = vst [vmem:[%s248] sm:$0x3] %v620
      %s622 = smul.u32 16, %s20
      %p623 = scmp.lt.s32.totalorder %s19, 3
      %s624 = scalar_select %p623, %s19, 3
      %p625 = scmp.lt.s32.totalorder %s622, 15
      %s626 = scalar_select %p625, %s622, 15
      %s627 = smul.addr %s624, 16
      %s628 = sadd.s32 %s626, %s627
      %s629 = smul.addr %s628, 8
      %s630 = scalar_lea.vmem %s2, %s629
      %p631 = scmp.lt.s32.totalorder %s19, 3
      %s632 = scalar_select %p631, %s19, 3
      %p633 = scmp.lt.s32.totalorder %s20, 0
      %s634 = scalar_select %p633, %s20, 0
      %s635 = sadd.s32 %s634, %s632
      %s636 = smul.addr %s635, 2
      %s637 = scalar_lea.vmem %s3, %s636
      // Predicated region
      $region29: #{generator_forward.13} parent=27 // pred_check
        %p638 = pneg %p101
      $region30: #{generator_forward.13} parent=27 // pred_check_branch
        %640 = sbr.rel (%p638) target = $region32
      $region31: #{generator_forward.13} parent=27 // pred_region
        %s641 = smul.u32 16, %s20
      $region32: #{generator_forward.13} parent=27 // pred_fallthru
        _
      // Predicated region
      $region33: #{generator_forward.13} parent=27 // pred_check
        %p642 = pneg %p129
      $region34: #{generator_forward.13} parent=27 // pred_check_branch
        %644 = sbr.rel (%p642) target = $region36
      $region35: #{generator_forward.13} parent=27 // pred_region
        _
      $region36: #{generator_forward.13} parent=27 // pred_fallthru
        _
    $region28: #{generator_forward.13} parent=5 // pred_fallthru
      _
    %p645 = scmp.le.s32.totalorder 2, %s10
    // Predicated region
    $region37: #{generator_forward.13} parent=5 // pred_check
      %p646 = pneg %p645
    $region38: #{generator_forward.13} parent=5 // pred_check_branch
      %648 = sbr.rel (%p646) target = $region40
    $region39: #{generator_forward.13} parent=5 // pred_region
      %s649 = ssub.s32 %s10, 2
      // Predicated region
      $region41: #{generator_forward.13} parent=39 // pred_check
        %p650 = pneg %p107
      $region42: #{generator_forward.13} parent=39 // pred_check_branch
        %652 = sbr.rel (%p650) target = $region44
      $region43: #{generator_forward.13} parent=39 // pred_region
        %s653 = smul.u32 16, %s22
        %p654 = scmp.lt.s32.totalorder %s21, 3
        %s655 = scalar_select %p654, %s21, 3
        %p656 = scmp.lt.s32.totalorder %s653, 15
        %s657 = scalar_select %p656, %s653, 15
        %s658 = smul.addr %s655, 16
        %s659 = sadd.s32 %s657, %s658
        %s660 = smul.addr %s659, 8
        %s661 = scalar_lea.vmem %s2, %s660
      $region44: #{generator_forward.13} parent=39 // pred_fallthru
        _
      // Predicated region
      $region45: #{generator_forward.13} parent=39 // pred_check
        %p662 = pneg %p135
      $region46: #{generator_forward.13} parent=39 // pred_check_branch
        %664 = sbr.rel (%p662) target = $region48
      $region47: #{generator_forward.13} parent=39 // pred_region
        %p665 = scmp.lt.s32.totalorder %s21, 3
        %s666 = scalar_select %p665, %s21, 3
        %p667 = scmp.lt.s32.totalorder %s22, 0
        %s668 = scalar_select %p667, %s22, 0
        %s669 = sadd.s32 %s668, %s666
        %s670 = smul.addr %s669, 2
        %s671 = scalar_lea.vmem %s3, %s670
      $region48: #{generator_forward.13} parent=39 // pred_fallthru
        _
    $region40: #{generator_forward.13} parent=5 // pred_fallthru
      _
  $region6: #{generator_forward.13} parent=0 // loop_footer
    %s14 = sadd.s32 1, %s10
  $region7: #{generator_forward.13} parent=0 // loop_footer_branch
    %9 = sbr.rel target = $region3
  $region8: #{generator_forward.13} parent=0 // loop_exit
    _

// kernel: generator_forward.14
$region0: #{generator_forward.14}
  #allocation0 [shape = 'u32[]', space=smem, size = 0x4, offset = 0x4, fixed_abs, tag = 'smem constant byte address 0x4 - core index']
  #allocation1 [shape = 'u32[144,128]{1,0:T(1,128)}', space=vmem, size = 0x12000, scoped, tag = 'internal scratch']
  %s0 = inlined_call_operand.vmem [shape: f32[4,128,128], index: 0, kind: input, shape index: {}]
  %s1 = inlined_call_operand.vmem [shape: f32[2,128], index: 1, kind: input, shape index: {}]
  %s2 = inlined_call_operand.vmem [shape: f32[1,128], index: 2, kind: input, shape index: {}]
  %s3 = inlined_call_operand.vmem [shape: f32[1,128], index: 3, kind: input, shape index: {}]
  %s4 = inlined_call_operand.vmem [shape: bf16[4,128,128], index: 4, kind: output, shape index: {}]
  %s5 = sld [smem:[#allocation0]]
  $region49: #{generator_forward.14} parent=0
    _
  %s7 = ssub.s32 1, %s5
  %s8 = scalar_select 0, %s7, %s5
  loop: start=0, step=1, limit=6
  $region2: #{generator_forward.14} parent=0 // loop_pre_header
    _
  $region3: #{generator_forward.14} parent=0 // loop_header
    %s10 = sphi 0, %s14
    %p11 = scmp.ge.s32.totalorder %s10, 6
    %s17 = sphi 0, %s29
    %s18 = sphi 0, %s25
    %s19 = sphi 0, %s17
    %s20 = sphi 0, %s18
    %s21 = sphi 0, %s19
    %s22 = sphi 0, %s20
    %s34 = sphi 0, %s36
    %s37 = sphi 0, %s34
    %s38 = sphi 0, %s37
    %s54 = sphi 0, %s38
    %s58 = sphi 0, %s58
    %s60 = sphi 0, %s58
    %s61 = sphi 0, %s60
    %s75 = sphi 0, %s61
    %s79 = sphi 0, %s79
    %s81 = sphi 0, %s79
    %s82 = sphi 0, %s81
    %s96 = sphi 0, %s82
    %s100 = sphi 0, %s100
    %s102 = sphi 0, %s100
    %s103 = sphi 0, %s102
    %s117 = sphi 0, %s103
    %s125 = sphi 0, %s127
    %s128 = sphi 0, %s125
    %s129 = sphi 0, %s128
    %s145 = sphi 0, %s129
  $region4: #{generator_forward.14} parent=0 // loop_header_branch
    %13 = sbr.rel (%p11) target = $region8
  $region5: #{generator_forward.14} parent=0 // loop_body
    %s15 = ssub.s32 %s10, 1
    %s16 = ssub.s32 %s10, 2
    %s23 = sadd.s32 1, %s18
    %p24 = scmp.ge.s32.totalorder %s23, 1
    %s25 = scalar_select %p24, 0, %s23
    %s26 = sadd.s32 1, %s17
    %s27 = scalar_select %p24, %s26, %s17
    %p28 = scmp.ge.s32.totalorder %s27, 4
    %s29 = scalar_select %p28, 0, %s27
    %s30 = ssub.s32 %s17, %s29
    %s31 = ssub.s32 %s18, %s25
    %s32 = sor.u32 %s30, %s31
    %p33 = scmp.eq.s32.totalorder %s32, 0
    %s35 = sadd.s32 %s34, 1
    %s36 = scalar_select %p33, %s34, %s35
    %p39 = pneg %p33
    %p40 = scmp.eq.s32.totalorder %s10, 3
    %p41 = por %p39, %p40
    %p42 = scmp.ne.s32.totalorder %s34, %s37
    %p43 = scmp.eq.s32.totalorder %s10, 0
    %p44 = por %p42, %p43
    %p45 = scmp.ne.s32.totalorder %s34, %s37
    %p46 = scmp.eq.s32.totalorder %s15, 3
    %p47 = por %p45, %p46
    %p48 = scmp.ne.s32.totalorder %s37, %s38
    %p49 = scmp.eq.s32.totalorder %s15, 0
    %p50 = por %p48, %p49
    %p51 = scmp.ne.s32.totalorder %s37, %s38
    %p52 = scmp.eq.s32.totalorder %s16, 3
    %p53 = por %p51, %p52
    %p55 = scmp.ne.s32.totalorder %s38, %s54
    %p56 = scmp.eq.s32.totalorder %s16, 0
    %p57 = por %p55, %p56
    %s59 = sadd.s32 %s58, 1
    %p62 = scmp.eq.s32.totalorder %s10, 3
    %p63 = scmp.ne.s32.totalorder %s58, %s60
    %p64 = scmp.eq.s32.totalorder %s10, 0
    %p65 = por %p63, %p64
    %p66 = scmp.ne.s32.totalorder %s58, %s60
    %p67 = scmp.eq.s32.totalorder %s15, 3
    %p68 = por %p66, %p67
    %p69 = scmp.ne.s32.totalorder %s60, %s61
    %p70 = scmp.eq.s32.totalorder %s15, 0
    %p71 = por %p69, %p70
    %p72 = scmp.ne.s32.totalorder %s60, %s61
    %p73 = scmp.eq.s32.totalorder %s16, 3
    %p74 = por %p72, %p73
    %p76 = scmp.ne.s32.totalorder %s61, %s75
    %p77 = scmp.eq.s32.totalorder %s16, 0
    %p78 = por %p76, %p77
    %s80 = sadd.s32 %s79, 1
    %p83 = scmp.eq.s32.totalorder %s10, 3
    %p84 = scmp.ne.s32.totalorder %s79, %s81
    %p85 = scmp.eq.s32.totalorder %s10, 0
    %p86 = por %p84, %p85
    %p87 = scmp.ne.s32.totalorder %s79, %s81
    %p88 = scmp.eq.s32.totalorder %s15, 3
    %p89 = por %p87, %p88
    %p90 = scmp.ne.s32.totalorder %s81, %s82
    %p91 = scmp.eq.s32.totalorder %s15, 0
    %p92 = por %p90, %p91
    %p93 = scmp.ne.s32.totalorder %s81, %s82
    %p94 = scmp.eq.s32.totalorder %s16, 3
    %p95 = por %p93, %p94
    %p97 = scmp.ne.s32.totalorder %s82, %s96
    %p98 = scmp.eq.s32.totalorder %s16, 0
    %p99 = por %p97, %p98
    %s101 = sadd.s32 %s100, 1
    %p104 = scmp.eq.s32.totalorder %s10, 3
    %p105 = scmp.ne.s32.totalorder %s100, %s102
    %p106 = scmp.eq.s32.totalorder %s10, 0
    %p107 = por %p105, %p106
    %p108 = scmp.ne.s32.totalorder %s100, %s102
    %p109 = scmp.eq.s32.totalorder %s15, 3
    %p110 = por %p108, %p109
    %p111 = scmp.ne.s32.totalorder %s102, %s103
    %p112 = scmp.eq.s32.totalorder %s15, 0
    %p113 = por %p111, %p112
    %p114 = scmp.ne.s32.totalorder %s102, %s103
    %p115 = scmp.eq.s32.totalorder %s16, 3
    %p116 = por %p114, %p115
    %p118 = scmp.ne.s32.totalorder %s103, %s117
    %p119 = scmp.eq.s32.totalorder %s16, 0
    %p120 = por %p118, %p119
    %s121 = ssub.s32 %s17, %s29
    %s122 = ssub.s32 %s18, %s25
    %s123 = sor.u32 %s121, %s122
    %p124 = scmp.eq.s32.totalorder %s123, 0
    %s126 = sadd.s32 %s125, 1
    %s127 = scalar_select %p124, %s125, %s126
    %p130 = pneg %p124
    %p131 = scmp.eq.s32.totalorder %s10, 3
    %p132 = por %p130, %p131
    %p133 = scmp.ne.s32.totalorder %s125, %s128
    %p134 = scmp.eq.s32.totalorder %s10, 0
    %p135 = por %p133, %p134
    %p136 = scmp.ne.s32.totalorder %s125, %s128
    %p137 = scmp.eq.s32.totalorder %s15, 3
    %p138 = por %p136, %p137
    %p139 = scmp.ne.s32.totalorder %s128, %s129
    %p140 = scmp.eq.s32.totalorder %s15, 0
    %p141 = por %p139, %p140
    %p142 = scmp.ne.s32.totalorder %s128, %s129
    %p143 = scmp.eq.s32.totalorder %s16, 3
    %p144 = por %p142, %p143
    %p146 = scmp.ne.s32.totalorder %s129, %s145
    %p147 = scmp.eq.s32.totalorder %s16, 0
    %p148 = por %p146, %p147
    %p149 = scmp.le.s32.totalorder 1, %s10
    %p150 = scmp.lt.s32.totalorder %s10, 5
    %p151 = pnand %p149, %p150
    %p152 = pneg %p151
    // Predicated region
    $region9: #{generator_forward.14} parent=5 // pred_check
      _
    $region10: #{generator_forward.14} parent=5 // pred_check_branch
      %154 = sbr.rel (%p151) target = $region12
    $region11: #{generator_forward.14} parent=5 // pred_region
      %s155 = ssub.s32 %s10, 1
      // Predicated region
      $region13: #{generator_forward.14} parent=11 // pred_check
        %p156 = pneg %p71
      $region14: #{generator_forward.14} parent=11 // pred_check_branch
        %158 = sbr.rel (%p156) target = $region16
      $region15: #{generator_forward.14} parent=11 // pred_region
        _
      $region16: #{generator_forward.14} parent=11 // pred_fallthru
        _
      // Predicated region
      $region17: #{generator_forward.14} parent=11 // pred_check
        %p159 = pneg %p92
      $region18: #{generator_forward.14} parent=11 // pred_check_branch
        %161 = sbr.rel (%p159) target = $region20
      $region19: #{generator_forward.14} parent=11 // pred_region
        _
      $region20: #{generator_forward.14} parent=11 // pred_fallthru
        _
      // Predicated region
      $region21: #{generator_forward.14} parent=11 // pred_check
        %p162 = pneg %p113
      $region22: #{generator_forward.14} parent=11 // pred_check_branch
        %164 = sbr.rel (%p162) target = $region24
      $region23: #{generator_forward.14} parent=11 // pred_region
        _
      $region24: #{generator_forward.14} parent=11 // pred_fallthru
        _
    $region12: #{generator_forward.14} parent=5 // pred_fallthru
      _
    %p165 = scmp.lt.s32.totalorder %s10, 4
    // Predicated region
    $region25: #{generator_forward.14} parent=5 // pred_check
      %p166 = pneg %p165
    $region26: #{generator_forward.14} parent=5 // pred_check_branch
      %168 = sbr.rel (%p166) target = $region28
    $region27: #{generator_forward.14} parent=5 // pred_region
      // Predicated region
      $region29: #{generator_forward.14} parent=27 // pred_check
        %p169 = pneg %p44
      $region30: #{generator_forward.14} parent=27 // pred_check_branch
        %171 = sbr.rel (%p169) target = $region32
      $region31: #{generator_forward.14} parent=27 // pred_region
        %s172 = smul.u32 16, %s18
        %p173 = scmp.lt.s32.totalorder %s17, 3
        %s174 = scalar_select %p173, %s17, 3
        %p175 = scmp.lt.s32.totalorder %s172, 15
        %s176 = scalar_select %p175, %s172, 15
        %s177 = smul.addr %s174, 16
        %s178 = sadd.s32 %s176, %s177
        %s179 = smul.addr %s178, 8
        %s180 = scalar_lea.vmem %s0, %s179
        %s181 = smul.u32 16, %s18
      $region32: #{generator_forward.14} parent=27 // pred_fallthru
        _
    $region28: #{generator_forward.14} parent=5 // pred_fallthru
      _
    %p182 = scmp.le.s32.totalorder 1, %s10
    %p183 = scmp.lt.s32.totalorder %s10, 5
    %p184 = pnand %p182, %p183
    %p185 = pneg %p184
    // Predicated region
    $region33: #{generator_forward.14} parent=5 // pred_check
      _
    $region34: #{generator_forward.14} parent=5 // pred_check_branch
      %187 = sbr.rel (%p184) target = $region36
    $region35: #{generator_forward.14} parent=5 // pred_region
      %s188 = ssub.s32 %s10, 1
      %s189 = smul.u32 16, %s20
      %p190 = scmp.lt.s32.totalorder %s19, 3
      %s191 = scalar_select %p190, %s19, 3
      %p192 = scmp.lt.s32.totalorder %s189, 15
      %s193 = scalar_select %p192, %s189, 15
      %s194 = smul.addr %s191, 16
      %s195 = sadd.s32 %s193, %s194
      %s196 = smul.addr %s195, 8
      %s197 = scalar_lea.vmem %s0, %s196
      %p198 = pneg %p50
      %p199 = pneg %p47
      %p200 = pneg %p71
      %p201 = pneg %p68
      %p202 = pneg %p92
      %p203 = pneg %p89
      %p204 = pneg %p113
      %p205 = pneg %p110
      %p206 = pneg %p141
      %p207 = pneg %p138
      %s208 = smul.u32 16, %s20
      %p209 = scmp.lt.s32.totalorder %s19, 3
      %s210 = scalar_select %p209, %s19, 3
      %p211 = scmp.lt.s32.totalorder %s208, 15
      %s212 = scalar_select %p211, %s208, 15
      %s213 = smul.addr %s210, 16
      %s214 = sadd.s32 %s212, %s213
      %s215 = smul.addr %s214, 4
      %s216 = scalar_lea.vmem %s4, %s215
      %s217 = smul.u32 16, %s20
      %p218 = scmp.lt.s32.totalorder %s19, 3
      %s219 = scalar_select %p218, %s19, 3
      %p220 = scmp.lt.s32.totalorder %s217, 15
      %s221 = scalar_select %p220, %s217, 15
      %s222 = smul.addr %s219, 16
      %s223 = sadd.s32 %s221, %s222
      %s224 = smul.addr %s223, 8
      %s225 = scalar_lea.vmem %s0, %s224
      %s226 = smul.u32 16, %s20
      %s227 = smul.u32 16, %s20
      %p228 = scmp.lt.s32.totalorder %s19, 3
      %s229 = scalar_select %p228, %s19, 3
      %p230 = scmp.lt.s32.totalorder %s227, 15
      %s231 = scalar_select %p230, %s227, 15
      %s232 = smul.addr %s229, 16
      %s233 = sadd.s32 %s231, %s232
      %s234 = smul.addr %s233, 4
      %s235 = scalar_lea.vmem %s4, %s234
      %s236 = smul.u32 16, %s20
      %v237 = vld [vmem:[%s1] sm:$0x3]
      %v238 = vmul.f32 %v237, 0.001953125
      %v239 = vmul.f32 %v238, %v238
      %v241 = vrot.slane %v239, 7
      %v243 = vsub.f32 %v238, %v241
      %v244 = vmax.f32 %v243, 0.0
      %v245 = vld [vmem:[%s2] sm:$0x1]
      %v246 = vadd.f32 %v244, 1e-05
      %v247 = vrsqrt.pop %v246
      %v250 = vunpack.c.l.s4 1966171168
      %v251 = vunpack.c.0.s8 %v250
      %v252 = vlaneseq
      %v253 = vshrl.u32 %v252, 7
      %v254 = vsub.s32 %v251, %v253
      %v255 = vrot.slane %v247, %v254
      %v256 = vcombine.high %v255, %v255
      %v258 = vunpack.c.l.s4 1966171168
      %v259 = vunpack.c.0.s8 %v258
      %v260 = vlaneseq
      %v261 = vshrl.u32 %v260, 7
      %v262 = vsub.s32 %v259, %v261
      %v263 = vrot.slane %v256, %v262
      %v265 = vmul.f32 %v245, %v263
      %v266 = vld [vmem:[%s3] sm:$0x1]
      %v267 = vmul.f32 %v238, %v265
      %v268 = vsub.f32 %v266, %v267
      %v269 = vld [vmem:[%s225] sm:$0xff]
      %v270 = vld [vmem:[%s225 + $0x8] sm:$0xff]
      %v271 = vld [vmem:[%s225 + $0x10] sm:$0xff]
      %v272 = vld [vmem:[%s225 + $0x18] sm:$0xff]
      %v273 = vld [vmem:[%s225 + $0x20] sm:$0xff]
      %v274 = vld [vmem:[%s225 + $0x28] sm:$0xff]
      %v275 = vld [vmem:[%s225 + $0x30] sm:$0xff]
      %v276 = vld [vmem:[%s225 + $0x38] sm:$0xff]
      %v277 = vld [vmem:[%s225 + $0x40] sm:$0xff]
      %v278 = vld [vmem:[%s225 + $0x48] sm:$0xff]
      %v279 = vld [vmem:[%s225 + $0x50] sm:$0xff]
      %v280 = vld [vmem:[%s225 + $0x58] sm:$0xff]
      %v281 = vld [vmem:[%s225 + $0x60] sm:$0xff]
      %v282 = vld [vmem:[%s225 + $0x68] sm:$0xff]
      %v283 = vld [vmem:[%s225 + $0x70] sm:$0xff]
      %v284 = vld [vmem:[%s225 + $0x78] sm:$0xff]
      %v286 = vlaneseq
      %v287 = vshrl.u32 %v286, 7
      %v288 = vsub.s32 0, %v287
      %v289 = vrot.slane %v265, %v288
      %v291 = vmul.f32 %v269, %v289
      %v292 = vmul.f32 %v270, %v289
      %v293 = vmul.f32 %v271, %v289
      %v294 = vmul.f32 %v272, %v289
      %v295 = vmul.f32 %v273, %v289
      %v296 = vmul.f32 %v274, %v289
      %v297 = vmul.f32 %v275, %v289
      %v298 = vmul.f32 %v276, %v289
      %v299 = vmul.f32 %v277, %v289
      %v300 = vmul.f32 %v278, %v289
      %v301 = vmul.f32 %v279, %v289
      %v302 = vmul.f32 %v280, %v289
      %v303 = vmul.f32 %v281, %v289
      %v304 = vmul.f32 %v282, %v289
      %v305 = vmul.f32 %v283, %v289
      %v306 = vmul.f32 %v284, %v289
      %v308 = vlaneseq
      %v309 = vshrl.u32 %v308, 7
      %v310 = vsub.s32 0, %v309
      %v311 = vrot.slane %v268, %v310
      %v313 = vadd.f32 %v291, %v311
      %v314 = vadd.f32 %v292, %v311
      %v315 = vadd.f32 %v293, %v311
      %v316 = vadd.f32 %v294, %v311
      %v317 = vadd.f32 %v295, %v311
      %v318 = vadd.f32 %v296, %v311
      %v319 = vadd.f32 %v297, %v311
      %v320 = vadd.f32 %v298, %v311
      %v321 = vadd.f32 %v299, %v311
      %v322 = vadd.f32 %v300, %v311
      %v323 = vadd.f32 %v301, %v311
      %v324 = vadd.f32 %v302, %v311
      %v325 = vadd.f32 %v303, %v311
      %v326 = vadd.f32 %v304, %v311
      %v327 = vadd.f32 %v305, %v311
      %v328 = vadd.f32 %v306, %v311
      %v329 = vmax.f32 %v313, 0.0
      %v330 = vmax.f32 %v314, 0.0
      %v331 = vmax.f32 %v315, 0.0
      %v332 = vmax.f32 %v316, 0.0
      %v333 = vmax.f32 %v317, 0.0
      %v334 = vmax.f32 %v318, 0.0
      %v335 = vmax.f32 %v319, 0.0
      %v336 = vmax.f32 %v320, 0.0
      %v337 = vmax.f32 %v321, 0.0
      %v338 = vmax.f32 %v322, 0.0
      %v339 = vmax.f32 %v323, 0.0
      %v340 = vmax.f32 %v324, 0.0
      %v341 = vmax.f32 %v325, 0.0
      %v342 = vmax.f32 %v326, 0.0
      %v343 = vmax.f32 %v327, 0.0
      %v344 = vmax.f32 %v328, 0.0
      %v345 = vpack.c.bf16 %v330, %v329
      %v346 = vpack.c.bf16 %v332, %v331
      %v347 = vpack.c.bf16 %v334, %v333
      %v348 = vpack.c.bf16 %v336, %v335
      %v349 = vpack.c.bf16 %v338, %v337
      %v350 = vpack.c.bf16 %v340, %v339
      %v351 = vpack.c.bf16 %v342, %v341
      %v352 = vpack.c.bf16 %v344, %v343
      %v361 = vunpack.c.l.b16 %v345
      %v362 = vunpack.c.h.b16 %v345
      %v363 = vunpack.c.l.b16 %v346
      %v364 = vunpack.c.h.b16 %v346
      %v365 = vunpack.c.l.b16 %v347
      %v366 = vunpack.c.h.b16 %v347
      %v367 = vunpack.c.l.b16 %v348
      %v368 = vunpack.c.h.b16 %v348
      %v369 = vunpack.c.l.b16 %v349
      %v370 = vunpack.c.h.b16 %v349
      %v371 = vunpack.c.l.b16 %v350
      %v372 = vunpack.c.h.b16 %v350
      %v373 = vunpack.c.l.b16 %v351
      %v374 = vunpack.c.h.b16 %v351
      %v375 = vunpack.c.l.b16 %v352
      %v376 = vunpack.c.h.b16 %v352
      %v377 = vpack.c.b16 %v361, %v361
      %v378 = vpack.c.b16 %v362, %v362
      %v379 = vpack.c.b16 %v363, %v363
      %v380 = vpack.c.b16 %v364, %v364
      %v381 = vpack.c.b16 %v365, %v365
      %v382 = vpack.c.b16 %v366, %v366
      %v383 = vpack.c.b16 %v367, %v367
      %v384 = vpack.c.b16 %v368, %v368
      %v385 = vpack.c.b16 %v369, %v369
      %v386 = vpack.c.b16 %v370, %v370
      %v387 = vpack.c.b16 %v371, %v371
      %v388 = vpack.c.b16 %v372, %v372
      %v389 = vpack.c.b16 %v373, %v373
      %v390 = vpack.c.b16 %v374, %v374
      %v391 = vpack.c.b16 %v375, %v375
      %v392 = vpack.c.b16 %v376, %v376
      %409 = vst [vmem:[%s235] sm:$0xf] %v377
      %410 = vst [vmem:[%s235 + $0x4] sm:$0xf] %v378
      %411 = vst [vmem:[%s235 + $0x8] sm:$0xf] %v379
      %412 = vst [vmem:[%s235 + $0xc] sm:$0xf] %v380
      %413 = vst [vmem:[%s235 + $0x10] sm:$0xf] %v381
      %414 = vst [vmem:[%s235 + $0x14] sm:$0xf] %v382
      %415 = vst [vmem:[%s235 + $0x18] sm:$0xf] %v383
      %416 = vst [vmem:[%s235 + $0x1c] sm:$0xf] %v384
      %417 = vst [vmem:[%s235 + $0x20] sm:$0xf] %v385
      %418 = vst [vmem:[%s235 + $0x24] sm:$0xf] %v386
      %419 = vst [vmem:[%s235 + $0x28] sm:$0xf] %v387
      %420 = vst [vmem:[%s235 + $0x2c] sm:$0xf] %v388
      %421 = vst [vmem:[%s235 + $0x30] sm:$0xf] %v389
      %422 = vst [vmem:[%s235 + $0x34] sm:$0xf] %v390
      %423 = vst [vmem:[%s235 + $0x38] sm:$0xf] %v391
      %424 = vst [vmem:[%s235 + $0x3c] sm:$0xf] %v392
      %s425 = smul.u32 16, %s20
      %p426 = scmp.lt.s32.totalorder %s19, 3
      %s427 = scalar_select %p426, %s19, 3
      %p428 = scmp.lt.s32.totalorder %s425, 15
      %s429 = scalar_select %p428, %s425, 15
      %s430 = smul.addr %s427, 16
      %s431 = sadd.s32 %s429, %s430
      %s432 = smul.addr %s431, 4
      %s433 = scalar_lea.vmem %s4, %s432
      // Predicated region
      $region37: #{generator_forward.14} parent=35 // pred_check
        %p434 = pneg %p138
      $region38: #{generator_forward.14} parent=35 // pred_check_branch
        %436 = sbr.rel (%p434) target = $region40
      $region39: #{generator_forward.14} parent=35 // pred_region
        %s437 = smul.u32 16, %s20
      $region40: #{generator_forward.14} parent=35 // pred_fallthru
        _
    $region36: #{generator_forward.14} parent=5 // pred_fallthru
      _
    %p438 = scmp.le.s32.totalorder 2, %s10
    // Predicated region
    $region41: #{generator_forward.14} parent=5 // pred_check
      %p439 = pneg %p438
    $region42: #{generator_forward.14} parent=5 // pred_check_branch
      %441 = sbr.rel (%p439) target = $region44
    $region43: #{generator_forward.14} parent=5 // pred_region
      %s442 = ssub.s32 %s10, 2
      // Predicated region
      $region45: #{generator_forward.14} parent=43 // pred_check
        %p443 = pneg %p144
      $region46: #{generator_forward.14} parent=43 // pred_check_branch
        %445 = sbr.rel (%p443) target = $region48
      $region47: #{generator_forward.14} parent=43 // pred_region
        %s446 = smul.u32 16, %s22
        %p447 = scmp.lt.s32.totalorder %s21, 3
        %s448 = scalar_select %p447, %s21, 3
        %p449 = scmp.lt.s32.totalorder %s446, 15
        %s450 = scalar_select %p449, %s446, 15
        %s451 = smul.addr %s448, 16
        %s452 = sadd.s32 %s450, %s451
        %s453 = smul.addr %s452, 4
        %s454 = scalar_lea.vmem %s4, %s453
      $region48: #{generator_forward.14} parent=43 // pred_fallthru
        _
    $region44: #{generator_forward.14} parent=5 // pred_fallthru
      _
  $region6: #{generator_forward.14} parent=0 // loop_footer
    %s14 = sadd.s32 1, %s10
  $region7: #{generator_forward.14} parent=0 // loop_footer_branch
    %9 = sbr.rel target = $region3
  $region8: #{generator_forward.14} parent=0 // loop_exit
    _

// kernel: generator_forward.15
$region0: #{generator_forward.15}
  #allocation0 [shape = 'u32[]', space=smem, size = 0x4, offset = 0x4, fixed_abs, tag = 'smem constant byte address 0x4 - core index']
  #allocation1 [shape = 'u32[144,128]{1,0:T(1,128)}', space=vmem, size = 0x12000, scoped, tag = 'internal scratch']
  %s0 = inlined_call_operand.vmem [shape: bf16[4,512,16], index: 0, kind: input, shape index: {}]
  %s1 = inlined_call_operand.vmem [shape: bf16[4,16,128], index: 1, kind: input, shape index: {}]
  %s2 = inlined_call_operand.vmem [shape: f32[1,128], index: 2, kind: input, shape index: {}]
  %s3 = inlined_call_operand.vmem [shape: f32[4,512,128], index: 3, kind: output, shape index: {}]
  %s4 = sld [smem:[#allocation0]]
  $region45: #{generator_forward.15} parent=0
    _
  %s6 = ssub.s32 1, %s4
  %s7 = scalar_select 0, %s6, %s4
  loop: start=0, step=1, limit=6
  $region2: #{generator_forward.15} parent=0 // loop_pre_header
    _
  $region3: #{generator_forward.15} parent=0 // loop_header
    %s9 = sphi 0, %s13
    %p10 = scmp.ge.s32.totalorder %s9, 6
    %s16 = sphi 0, %s28
    %s17 = sphi 0, %s24
    %s18 = sphi 0, %s16
    %s19 = sphi 0, %s17
    %s20 = sphi 0, %s18
    %s21 = sphi 0, %s19
    %s33 = sphi 0, %s35
    %s36 = sphi 0, %s33
    %s37 = sphi 0, %s36
    %s53 = sphi 0, %s37
    %s59 = sphi 0, %s61
    %s62 = sphi 0, %s59
    %s63 = sphi 0, %s62
    %s79 = sphi 0, %s63
    %s83 = sphi 0, %s83
    %s85 = sphi 0, %s83
    %s86 = sphi 0, %s85
    %s100 = sphi 0, %s86
    %s108 = sphi 0, %s110
    %s111 = sphi 0, %s108
    %s112 = sphi 0, %s111
    %s128 = sphi 0, %s112
  $region4: #{generator_forward.15} parent=0 // loop_header_branch
    %12 = sbr.rel (%p10) target = $region8
  $region5: #{generator_forward.15} parent=0 // loop_body
    %s14 = ssub.s32 %s9, 1
    %s15 = ssub.s32 %s9, 2
    %s22 = sadd.s32 1, %s17
    %p23 = scmp.ge.s32.totalorder %s22, 1
    %s24 = scalar_select %p23, 0, %s22
    %s25 = sadd.s32 1, %s16
    %s26 = scalar_select %p23, %s25, %s16
    %p27 = scmp.ge.s32.totalorder %s26, 4
    %s28 = scalar_select %p27, 0, %s26
    %s29 = ssub.s32 %s16, %s28
    %s30 = ssub.s32 %s17, %s24
    %s31 = sor.u32 %s29, %s30
    %p32 = scmp.eq.s32.totalorder %s31, 0
    %s34 = sadd.s32 %s33, 1
    %s35 = scalar_select %p32, %s33, %s34
    %p38 = pneg %p32
    %p39 = scmp.eq.s32.totalorder %s9, 3
    %p40 = por %p38, %p39
    %p41 = scmp.ne.s32.totalorder %s33, %s36
    %p42 = scmp.eq.s32.totalorder %s9, 0
    %p43 = por %p41, %p42
    %p44 = scmp.ne.s32.totalorder %s33, %s36
    %p45 = scmp.eq.s32.totalorder %s14, 3
    %p46 = por %p44, %p45
    %p47 = scmp.ne.s32.totalorder %s36, %s37
    %p48 = scmp.eq.s32.totalorder %s14, 0
    %p49 = por %p47, %p48
    %p50 = scmp.ne.s32.totalorder %s36, %s37
    %p51 = scmp.eq.s32.totalorder %s15, 3
    %p52 = por %p50, %p51
    %p54 = scmp.ne.s32.totalorder %s37, %s53
    %p55 = scmp.eq.s32.totalorder %s15, 0
    %p56 = por %p54, %p55
    %s57 = ssub.s32 %s16, %s28
    %p58 = scmp.eq.s32.totalorder %s57, 0
    %s60 = sadd.s32 %s59, 1
    %s61 = scalar_select %p58, %s59, %s60
    %p64 = pneg %p58
    %p65 = scmp.eq.s32.totalorder %s9, 3
    %p66 = por %p64, %p65
    %p67 = scmp.ne.s32.totalorder %s59, %s62
    %p68 = scmp.eq.s32.totalorder %s9, 0
    %p69 = por %p67, %p68
    %p70 = scmp.ne.s32.totalorder %s59, %s62
    %p71 = scmp.eq.s32.totalorder %s14, 3
    %p72 = por %p70, %p71
    %p73 = scmp.ne.s32.totalorder %s62, %s63
    %p74 = scmp.eq.s32.totalorder %s14, 0
    %p75 = por %p73, %p74
    %p76 = scmp.ne.s32.totalorder %s62, %s63
    %p77 = scmp.eq.s32.totalorder %s15, 3
    %p78 = por %p76, %p77
    %p80 = scmp.ne.s32.totalorder %s63, %s79
    %p81 = scmp.eq.s32.totalorder %s15, 0
    %p82 = por %p80, %p81
    %s84 = sadd.s32 %s83, 1
    %p87 = scmp.eq.s32.totalorder %s9, 3
    %p88 = scmp.ne.s32.totalorder %s83, %s85
    %p89 = scmp.eq.s32.totalorder %s9, 0
    %p90 = por %p88, %p89
    %p91 = scmp.ne.s32.totalorder %s83, %s85
    %p92 = scmp.eq.s32.totalorder %s14, 3
    %p93 = por %p91, %p92
    %p94 = scmp.ne.s32.totalorder %s85, %s86
    %p95 = scmp.eq.s32.totalorder %s14, 0
    %p96 = por %p94, %p95
    %p97 = scmp.ne.s32.totalorder %s85, %s86
    %p98 = scmp.eq.s32.totalorder %s15, 3
    %p99 = por %p97, %p98
    %p101 = scmp.ne.s32.totalorder %s86, %s100
    %p102 = scmp.eq.s32.totalorder %s15, 0
    %p103 = por %p101, %p102
    %s104 = ssub.s32 %s16, %s28
    %s105 = ssub.s32 %s17, %s24
    %s106 = sor.u32 %s104, %s105
    %p107 = scmp.eq.s32.totalorder %s106, 0
    %s109 = sadd.s32 %s108, 1
    %s110 = scalar_select %p107, %s108, %s109
    %p113 = pneg %p107
    %p114 = scmp.eq.s32.totalorder %s9, 3
    %p115 = por %p113, %p114
    %p116 = scmp.ne.s32.totalorder %s108, %s111
    %p117 = scmp.eq.s32.totalorder %s9, 0
    %p118 = por %p116, %p117
    %p119 = scmp.ne.s32.totalorder %s108, %s111
    %p120 = scmp.eq.s32.totalorder %s14, 3
    %p121 = por %p119, %p120
    %p122 = scmp.ne.s32.totalorder %s111, %s112
    %p123 = scmp.eq.s32.totalorder %s14, 0
    %p124 = por %p122, %p123
    %p125 = scmp.ne.s32.totalorder %s111, %s112
    %p126 = scmp.eq.s32.totalorder %s15, 3
    %p127 = por %p125, %p126
    %p129 = scmp.ne.s32.totalorder %s112, %s128
    %p130 = scmp.eq.s32.totalorder %s15, 0
    %p131 = por %p129, %p130
    %p132 = scmp.le.s32.totalorder 1, %s9
    %p133 = scmp.lt.s32.totalorder %s9, 5
    %p134 = pnand %p132, %p133
    %p135 = pneg %p134
    // Predicated region
    $region9: #{generator_forward.15} parent=5 // pred_check
      _
    $region10: #{generator_forward.15} parent=5 // pred_check_branch
      %137 = sbr.rel (%p134) target = $region12
    $region11: #{generator_forward.15} parent=5 // pred_region
      %s138 = ssub.s32 %s9, 1
      // Predicated region
      $region13: #{generator_forward.15} parent=11 // pred_check
        %p139 = pneg %p96
      $region14: #{generator_forward.15} parent=11 // pred_check_branch
        %141 = sbr.rel (%p139) target = $region16
      $region15: #{generator_forward.15} parent=11 // pred_region
        _
      $region16: #{generator_forward.15} parent=11 // pred_fallthru
        _
    $region12: #{generator_forward.15} parent=5 // pred_fallthru
      _
    %p142 = scmp.lt.s32.totalorder %s9, 4
    // Predicated region
    $region17: #{generator_forward.15} parent=5 // pred_check
      %p143 = pneg %p142
    $region18: #{generator_forward.15} parent=5 // pred_check_branch
      %145 = sbr.rel (%p143) target = $region20
    $region19: #{generator_forward.15} parent=5 // pred_region
      // Predicated region
      $region21: #{generator_forward.15} parent=19 // pred_check
        %p146 = pneg %p43
      $region22: #{generator_forward.15} parent=19 // pred_check_branch
        %148 = sbr.rel (%p146) target = $region24
      $region23: #{generator_forward.15} parent=19 // pred_region
        %s149 = smul.u32 64, %s17
        %p150 = scmp.lt.s32.totalorder %s16, 3
        %s151 = scalar_select %p150, %s16, 3
        %p152 = scmp.lt.s32.totalorder %s149, 63
        %s153 = scalar_select %p152, %s149, 63
        %s154 = smul.addr %s151, 64
        %s155 = sadd.s32 %s153, %s154
        %s156 = smul.addr %s155, 4
        %s157 = scalar_lea.vmem %s0, %s156
        %s158 = smul.u32 64, %s17
      $region24: #{generator_forward.15} parent=19 // pred_fallthru
        _
      // Predicated region
      $region25: #{generator_forward.15} parent=19 // pred_check
        %p159 = pneg %p69
      $region26: #{generator_forward.15} parent=19 // pred_check_branch
        %161 = sbr.rel (%p159) target = $region28
      $region27: #{generator_forward.15} parent=19 // pred_region
        %p162 = scmp.lt.s32.totalorder %s16, 3
        %s163 = scalar_select %p162, %s16, 3
        %s164 = smul.addr %s163, 2
        %s165 = smul.addr %s164, 4
        %s166 = scalar_lea.vmem %s1, %s165
      $region28: #{generator_forward.15} parent=19 // pred_fallthru
        _
    $region20: #{generator_forward.15} parent=5 // pred_fallthru
      _
    %p167 = scmp.le.s32.totalorder 1, %s9
    %p168 = scmp.lt.s32.totalorder %s9, 5
    %p169 = pnand %p167, %p168
    %p170 = pneg %p169
    // Predicated region
    $region29: #{generator_forward.15} parent=5 // pred_check
      _
    $region30: #{generator_forward.15} parent=5 // pred_check_branch
      %172 = sbr.rel (%p169) target = $region32
    $region31: #{generator_forward.15} parent=5 // pred_region
      %s173 = ssub.s32 %s9, 1
      %s174 = smul.u32 64, %s19
      %p175 = scmp.lt.s32.totalorder %s18, 3
      %s176 = scalar_select %p175, %s18, 3
      %p177 = scmp.lt.s32.totalorder %s174, 63
      %s178 = scalar_select %p177, %s174, 63
      %s179 = smul.addr %s176, 64
      %s180 = sadd.s32 %s178, %s179
      %s181 = smul.addr %s180, 4
      %s182 = scalar_lea.vmem %s0, %s181
      %p183 = pneg %p49
      %p184 = pneg %p46
      %p185 = scmp.lt.s32.totalorder %s18, 3
      %s186 = scalar_select %p185, %s18, 3
      %s187 = smul.addr %s186, 2
      %s188 = smul.addr %s187, 4
      %s189 = scalar_lea.vmem %s1, %s188
      %p190 = pneg %p75
      %p191 = pneg %p72
      %p192 = pneg %p96
      %p193 = pneg %p93
      %p194 = pneg %p124
      %p195 = pneg %p121
      %s196 = smul.u32 64, %s19
      %p197 = scmp.lt.s32.totalorder %s18, 3
      %s198 = scalar_select %p197, %s18, 3
      %p199 = scmp.lt.s32.totalorder %s196, 63
      %s200 = scalar_select %p199, %s196, 63
      %s201 = smul.addr %s198, 64
      %s202 = sadd.s32 %s200, %s201
      %s203 = smul.addr %s202, 8
      %s204 = scalar_lea.vmem %s3, %s203
      %s205 = smul.u32 64, %s19
      %p206 = scmp.lt.s32.totalorder %s18, 3
      %s207 = scalar_select %p206, %s18, 3
      %p208 = scmp.lt.s32.totalorder %s205, 63
      %s209 = scalar_select %p208, %s205, 63
      %s210 = smul.addr %s207, 64
      %s211 = sadd.s32 %s209, %s210
      %s212 = smul.addr %s211, 4
      %s213 = scalar_lea.vmem %s0, %s212
      %s214 = smul.u32 64, %s19
      %p215 = scmp.lt.s32.totalorder %s18, 3
      %s216 = scalar_select %p215, %s18, 3
      %s217 = smul.addr %s216, 2
      %s218 = smul.addr %s217, 4
      %s219 = scalar_lea.vmem %s1, %s218
      %s220 = smul.u32 64, %s19
      %p221 = scmp.lt.s32.totalorder %s18, 3
      %s222 = scalar_select %p221, %s18, 3
      %p223 = scmp.lt.s32.totalorder %s220, 63
      %s224 = scalar_select %p223, %s220, 63
      %s225 = smul.addr %s222, 64
      %s226 = sadd.s32 %s224, %s225
      %s227 = smul.addr %s226, 8
      %s228 = scalar_lea.vmem %s3, %s227
      %s229 = smul.u32 64, %s19
      %v231 = vld [vmem:[%s213] sm:$0xf]
      %v232 = vld [vmem:[%s213 + $0x4] sm:$0xf]
      %v233 = vld [vmem:[%s213 + $0x8] sm:$0xf]
      %v234 = vld [vmem:[%s213 + $0xc] sm:$0xf]
      %v235 = vld [vmem:[%s213 + $0x10] sm:$0xf]
      %v236 = vld [vmem:[%s213 + $0x14] sm:$0xf]
      %v237 = vld [vmem:[%s213 + $0x18] sm:$0xf]
      %v238 = vld [vmem:[%s213 + $0x1c] sm:$0xf]
      %v239 = vld [vmem:[%s213 + $0x20] sm:$0xf]
      %v240 = vld [vmem:[%s213 + $0x24] sm:$0xf]
      %v241 = vld [vmem:[%s213 + $0x28] sm:$0xf]
      %v242 = vld [vmem:[%s213 + $0x2c] sm:$0xf]
      %v243 = vld [vmem:[%s213 + $0x30] sm:$0xf]
      %v244 = vld [vmem:[%s213 + $0x34] sm:$0xf]
      %v245 = vld [vmem:[%s213 + $0x38] sm:$0xf]
      %v246 = vld [vmem:[%s213 + $0x3c] sm:$0xf]
      %v247 = vld [vmem:[%s213 + $0x40] sm:$0xf]
      %v248 = vld [vmem:[%s213 + $0x44] sm:$0xf]
      %v249 = vld [vmem:[%s213 + $0x48] sm:$0xf]
      %v250 = vld [vmem:[%s213 + $0x4c] sm:$0xf]
      %v251 = vld [vmem:[%s213 + $0x50] sm:$0xf]
      %v252 = vld [vmem:[%s213 + $0x54] sm:$0xf]
      %v253 = vld [vmem:[%s213 + $0x58] sm:$0xf]
      %v254 = vld [vmem:[%s213 + $0x5c] sm:$0xf]
      %v255 = vld [vmem:[%s213 + $0x60] sm:$0xf]
      %v256 = vld [vmem:[%s213 + $0x64] sm:$0xf]
      %v257 = vld [vmem:[%s213 + $0x68] sm:$0xf]
      %v258 = vld [vmem:[%s213 + $0x6c] sm:$0xf]
      %v259 = vld [vmem:[%s213 + $0x70] sm:$0xf]
      %v260 = vld [vmem:[%s213 + $0x74] sm:$0xf]
      %v261 = vld [vmem:[%s213 + $0x78] sm:$0xf]
      %v262 = vld [vmem:[%s213 + $0x7c] sm:$0xf]
      %v263 = vld [vmem:[%s213 + $0x80] sm:$0xf]
      %v264 = vld [vmem:[%s213 + $0x84] sm:$0xf]
      %v265 = vld [vmem:[%s213 + $0x88] sm:$0xf]
      %v266 = vld [vmem:[%s213 + $0x8c] sm:$0xf]
      %v267 = vld [vmem:[%s213 + $0x90] sm:$0xf]
      %v268 = vld [vmem:[%s213 + $0x94] sm:$0xf]
      %v269 = vld [vmem:[%s213 + $0x98] sm:$0xf]
      %v270 = vld [vmem:[%s213 + $0x9c] sm:$0xf]
      %v271 = vld [vmem:[%s213 + $0xa0] sm:$0xf]
      %v272 = vld [vmem:[%s213 + $0xa4] sm:$0xf]
      %v273 = vld [vmem:[%s213 + $0xa8] sm:$0xf]
      %v274 = vld [vmem:[%s213 + $0xac] sm:$0xf]
      %v275 = vld [vmem:[%s213 + $0xb0] sm:$0xf]
      %v276 = vld [vmem:[%s213 + $0xb4] sm:$0xf]
      %v277 = vld [vmem:[%s213 + $0xb8] sm:$0xf]
      %v278 = vld [vmem:[%s213 + $0xbc] sm:$0xf]
      %v279 = vld [vmem:[%s213 + $0xc0] sm:$0xf]
      %v280 = vld [vmem:[%s213 + $0xc4] sm:$0xf]
      %v281 = vld [vmem:[%s213 + $0xc8] sm:$0xf]
      %v282 = vld [vmem:[%s213 + $0xcc] sm:$0xf]
      %v283 = vld [vmem:[%s213 + $0xd0] sm:$0xf]
      %v284 = vld [vmem:[%s213 + $0xd4] sm:$0xf]
      %v285 = vld [vmem:[%s213 + $0xd8] sm:$0xf]
      %v286 = vld [vmem:[%s213 + $0xdc] sm:$0xf]
      %v287 = vld [vmem:[%s213 + $0xe0] sm:$0xf]
      %v288 = vld [vmem:[%s213 + $0xe4] sm:$0xf]
      %v289 = vld [vmem:[%s213 + $0xe8] sm:$0xf]
      %v290 = vld [vmem:[%s213 + $0xec] sm:$0xf]
      %v291 = vld [vmem:[%s213 + $0xf0] sm:$0xf]
      %v292 = vld [vmem:[%s213 + $0xf4] sm:$0xf]
      %v293 = vld [vmem:[%s213 + $0xf8] sm:$0xf]
      %v294 = vld [vmem:[%s213 + $0xfc] sm:$0xf]
      %v295 = vld [vmem:[%s219] sm:$0xf]
      %v296 = vld [vmem:[%s219 + $0x4] sm:$0xf]
      %v297 = vld [vmem:[%s2] sm:$0x1]
      %v299 = vlaneseq
      %v300 = vshrl.u32 %v299, 7
      %v301 = vsub.s32 0, %v300
      %v302 = vrot.slane %v297, %v301
      %v368 = vunpack.c.l.b16 %v231
      %v369 = vunpack.c.l.b16 %v232
      %v370 = vunpack.c.l.b16 %v233
      %v371 = vunpack.c.l.b16 %v234
      %v372 = vunpack.c.l.b16 %v235
      %v373 = vunpack.c.l.b16 %v236
      %v374 = vunpack.c.l.b16 %v237
      %v375 = vunpack.c.l.b16 %v238
      %v376 = vunpack.c.l.b16 %v239
      %v377 = vunpack.c.l.b16 %v240
      %v378 = vunpack.c.l.b16 %v241
      %v379 = vunpack.c.l.b16 %v242
      %v380 = vunpack.c.l.b16 %v243
      %v381 = vunpack.c.l.b16 %v244
      %v382 = vunpack.c.l.b16 %v245
      %v383 = vunpack.c.l.b16 %v246
      %v384 = vunpack.c.l.b16 %v247
      %v385 = vunpack.c.l.b16 %v248
      %v386 = vunpack.c.l.b16 %v249
      %v387 = vunpack.c.l.b16 %v250
      %v388 = vunpack.c.l.b16 %v251
      %v389 = vunpack.c.l.b16 %v252
      %v390 = vunpack.c.l.b16 %v253
      %v391 = vunpack.c.l.b16 %v254
      %v392 = vunpack.c.l.b16 %v255
      %v393 = vunpack.c.l.b16 %v256
      %v394 = vunpack.c.l.b16 %v257
      %v395 = vunpack.c.l.b16 %v258
      %v396 = vunpack.c.l.b16 %v259
      %v397 = vunpack.c.l.b16 %v260
      %v398 = vunpack.c.l.b16 %v261
      %v399 = vunpack.c.l.b16 %v262
      %v400 = vunpack.c.l.b16 %v263
      %v401 = vunpack.c.l.b16 %v264
      %v402 = vunpack.c.l.b16 %v265
      %v403 = vunpack.c.l.b16 %v266
      %v404 = vunpack.c.l.b16 %v267
      %v405 = vunpack.c.l.b16 %v268
      %v406 = vunpack.c.l.b16 %v269
      %v407 = vunpack.c.l.b16 %v270
      %v408 = vunpack.c.l.b16 %v271
      %v409 = vunpack.c.l.b16 %v272
      %v410 = vunpack.c.l.b16 %v273
      %v411 = vunpack.c.l.b16 %v274
      %v412 = vunpack.c.l.b16 %v275
      %v413 = vunpack.c.l.b16 %v276
      %v414 = vunpack.c.l.b16 %v277
      %v415 = vunpack.c.l.b16 %v278
      %v416 = vunpack.c.l.b16 %v279
      %v417 = vunpack.c.l.b16 %v280
      %v418 = vunpack.c.l.b16 %v281
      %v419 = vunpack.c.l.b16 %v282
      %v420 = vunpack.c.l.b16 %v283
      %v421 = vunpack.c.l.b16 %v284
      %v422 = vunpack.c.l.b16 %v285
      %v423 = vunpack.c.l.b16 %v286
      %v424 = vunpack.c.l.b16 %v287
      %v425 = vunpack.c.l.b16 %v288
      %v426 = vunpack.c.l.b16 %v289
      %v427 = vunpack.c.l.b16 %v290
      %v428 = vunpack.c.l.b16 %v291
      %v429 = vunpack.c.l.b16 %v292
      %v430 = vunpack.c.l.b16 %v293
      %v431 = vunpack.c.l.b16 %v294
      %v432 = vpack.c.b16 %v369, %v368
      %v433 = vpack.c.b16 %v371, %v370
      %v434 = vpack.c.b16 %v373, %v372
      %v435 = vpack.c.b16 %v375, %v374
      %v436 = vpack.c.b16 %v377, %v376
      %v437 = vpack.c.b16 %v379, %v378
      %v438 = vpack.c.b16 %v381, %v380
      %v439 = vpack.c.b16 %v383, %v382
      %v440 = vpack.c.b16 %v385, %v384
      %v441 = vpack.c.b16 %v387, %v386
      %v442 = vpack.c.b16 %v389, %v388
      %v443 = vpack.c.b16 %v391, %v390
      %v444 = vpack.c.b16 %v393, %v392
      %v445 = vpack.c.b16 %v395, %v394
      %v446 = vpack.c.b16 %v397, %v396
      %v447 = vpack.c.b16 %v399, %v398
      %v448 = vpack.c.b16 %v401, %v400
      %v449 = vpack.c.b16 %v403, %v402
      %v450 = vpack.c.b16 %v405, %v404
      %v451 = vpack.c.b16 %v407, %v406
      %v452 = vpack.c.b16 %v409, %v408
      %v453 = vpack.c.b16 %v411, %v410
      %v454 = vpack.c.b16 %v413, %v412
      %v455 = vpack.c.b16 %v415, %v414
      %v456 = vpack.c.b16 %v417, %v416
      %v457 = vpack.c.b16 %v419, %v418
      %v458 = vpack.c.b16 %v421, %v420
      %v459 = vpack.c.b16 %v423, %v422
      %v460 = vpack.c.b16 %v425, %v424
      %v461 = vpack.c.b16 %v427, %v426
      %v462 = vpack.c.b16 %v429, %v428
      %v463 = vpack.c.b16 %v431, %v430
      %v466 = vunpack.c.l.b16 %v295
      %v467 = vunpack.c.l.b16 %v296
      %v468 = vpack.c.b16 %v467, %v466
      %vm470 = vcmask 130048
      %v472 = vsel %vm470, %v432, 0
      %v475 = vsel %vm470, %v433, 0
      %v478 = vsel %vm470, %v434, 0
      %v481 = vsel %vm470, %v435, 0
      %v484 = vsel %vm470, %v436, 0
      %v487 = vsel %vm470, %v437, 0
      %v490 = vsel %vm470, %v438, 0
      %v493 = vsel %vm470, %v439, 0
      %v496 = vsel %vm470, %v440, 0
      %v499 = vsel %vm470, %v441, 0
      %v502 = vsel %vm470, %v442, 0
      %v505 = vsel %vm470, %v443, 0
      %v508 = vsel %vm470, %v444, 0
      %v511 = vsel %vm470, %v445, 0
      %v514 = vsel %vm470, %v446, 0
      %v517 = vsel %vm470, %v447, 0
      %v520 = vsel %vm470, %v448, 0
      %v523 = vsel %vm470, %v449, 0
      %v526 = vsel %vm470, %v450, 0
      %v529 = vsel %vm470, %v451, 0
      %v532 = vsel %vm470, %v452, 0
      %v535 = vsel %vm470, %v453, 0
      %v538 = vsel %vm470, %v454, 0
      %v541 = vsel %vm470, %v455, 0
      %v544 = vsel %vm470, %v456, 0
      %v547 = vsel %vm470, %v457, 0
      %v550 = vsel %vm470, %v458, 0
      %v553 = vsel %vm470, %v459, 0
      %v556 = vsel %vm470, %v460, 0
      %v559 = vsel %vm470, %v461, 0
      %v562 = vsel %vm470, %v462, 0
      %v565 = vsel %vm470, %v463, 0
      %567 = vmatprep.subr.bf16.mxu0 0
      %568 = vmatpush1.bf16.msra.mxu0 0
      %569 = vmatprep.subr.bf16.mxu0 0
      %570 = vmatpush1.bf16.msra.mxu0 0
      %571 = vmatprep.subr.bf16.mxu0 0
      %572 = vmatpush1.bf16.msra.mxu0 0
      %573 = vmatprep.subr.bf16.mxu0 0
      %574 = vmatpush1.bf16.msra.mxu0 0
      %575 = vmatprep.subr.bf16.mxu0 0
      %576 = vmatpush1.bf16.msra.mxu0 0
      %577 = vmatprep.subr.bf16.mxu0 0
      %578 = vmatpush1.bf16.msra.mxu0 0
      %579 = vmatprep.subr.bf16.mxu0 0
      %580 = vmatpush1.bf16.msra.mxu0 0
      %581 = vmatprep.subr.bf16.mxu0 0
      %582 = vmatpush1.bf16.msra.mxu0 %v468
      %583 = vmatprep.subr.bf16.mxu0 0
      %584 = vmatpush2.bf16.msra.mxu0 0
      %585 = vmatprep.subr.bf16.mxu0 0
      %586 = vmatpush2.bf16.msra.mxu0 0
      %587 = vmatprep.subr.bf16.mxu0 0
      %588 = vmatpush2.bf16.msra.mxu0 0
      %589 = vmatprep.subr.bf16.mxu0 0
      %590 = vmatpush2.bf16.msra.mxu0 0
      %591 = vmatprep.subr.bf16.mxu0 0
      %592 = vmatpush2.bf16.msra.mxu0 0
      %593 = vmatprep.subr.bf16.mxu0 0
      %594 = vmatpush2.bf16.msra.mxu0 0
      %595 = vmatprep.subr.bf16.mxu0 0
      %596 = vmatpush2.bf16.msra.mxu0 0
      %597 = vmatprep.subr.bf16.mxu0 0
      %598 = vmatpush2.bf16.msra.mxu0 0
      %599 = vmatprep.mubr.bf16.mxu0 0
      %600 = vmatmul.mubr.bf16.gmra.mxu0 %v472
      %v601 = vpop.f32.mrf.mxu0
      %v602 = vadd.f32 %v302, %v601
      %v603 = vpop.f32.mrf.mxu0
      %v604 = vpop.f32.mrf.mxu0
      %v605 = vadd.f32 %v302, %v604
      %v606 = vpop.f32.mrf.mxu0
      %607 = vmatprep.mubr.bf16.mxu0 0
      %608 = vmatmul.mubr.bf16.gmra.mxu0 %v475
      %v609 = vpop.f32.mrf.mxu0
      %v610 = vadd.f32 %v302, %v609
      %v611 = vpop.f32.mrf.mxu0
      %v612 = vpop.f32.mrf.mxu0
      %v613 = vadd.f32 %v302, %v612
      %v614 = vpop.f32.mrf.mxu0
      %615 = vmatprep.mubr.bf16.mxu0 0
      %616 = vmatmul.mubr.bf16.gmra.mxu0 %v478
      %v617 = vpop.f32.mrf.mxu0
      %v618 = vadd.f32 %v302, %v617
      %v619 = vpop.f32.mrf.mxu0
      %v620 = vpop.f32.mrf.mxu0
      %v621 = vadd.f32 %v302, %v620
      %v622 = vpop.f32.mrf.mxu0
      %623 = vmatprep.mubr.bf16.mxu0 0
      %624 = vmatmul.mubr.bf16.gmra.mxu0 %v481
      %v625 = vpop.f32.mrf.mxu0
      %v626 = vadd.f32 %v302, %v625
      %v627 = vpop.f32.mrf.mxu0
      %v628 = vpop.f32.mrf.mxu0
      %v629 = vadd.f32 %v302, %v628
      %v630 = vpop.f32.mrf.mxu0
      %631 = vmatprep.mubr.bf16.mxu0 0
      %632 = vmatmul.mubr.bf16.gmra.mxu0 %v484
      %v633 = vpop.f32.mrf.mxu0
      %v634 = vadd.f32 %v302, %v633
      %v635 = vpop.f32.mrf.mxu0
      %v636 = vpop.f32.mrf.mxu0
      %v637 = vadd.f32 %v302, %v636
      %v638 = vpop.f32.mrf.mxu0
      %639 = vmatprep.mubr.bf16.mxu0 0
      %640 = vmatmul.mubr.bf16.gmra.mxu0 %v487
      %v641 = vpop.f32.mrf.mxu0
      %v642 = vadd.f32 %v302, %v641
      %v643 = vpop.f32.mrf.mxu0
      %v644 = vpop.f32.mrf.mxu0
      %v645 = vadd.f32 %v302, %v644
      %v646 = vpop.f32.mrf.mxu0
      %647 = vmatprep.mubr.bf16.mxu0 0
      %648 = vmatmul.mubr.bf16.gmra.mxu0 %v490
      %v649 = vpop.f32.mrf.mxu0
      %v650 = vadd.f32 %v302, %v649
      %v651 = vpop.f32.mrf.mxu0
      %v652 = vpop.f32.mrf.mxu0
      %v653 = vadd.f32 %v302, %v652
      %v654 = vpop.f32.mrf.mxu0
      %655 = vmatprep.mubr.bf16.mxu0 0
      %656 = vmatmul.mubr.bf16.gmra.mxu0 %v493
      %v657 = vpop.f32.mrf.mxu0
      %v658 = vadd.f32 %v302, %v657
      %v659 = vpop.f32.mrf.mxu0
      %v660 = vpop.f32.mrf.mxu0
      %v661 = vadd.f32 %v302, %v660
      %v662 = vpop.f32.mrf.mxu0
      %663 = vmatprep.mubr.bf16.mxu0 0
      %664 = vmatmul.mubr.bf16.gmra.mxu0 %v496
      %v665 = vpop.f32.mrf.mxu0
      %v666 = vadd.f32 %v302, %v665
      %v667 = vpop.f32.mrf.mxu0
      %v668 = vpop.f32.mrf.mxu0
      %v669 = vadd.f32 %v302, %v668
      %v670 = vpop.f32.mrf.mxu0
      %671 = vmatprep.mubr.bf16.mxu0 0
      %672 = vmatmul.mubr.bf16.gmra.mxu0 %v499
      %v673 = vpop.f32.mrf.mxu0
      %v674 = vadd.f32 %v302, %v673
      %v675 = vpop.f32.mrf.mxu0
      %v676 = vpop.f32.mrf.mxu0
      %v677 = vadd.f32 %v302, %v676
      %v678 = vpop.f32.mrf.mxu0
      %679 = vmatprep.mubr.bf16.mxu0 0
      %680 = vmatmul.mubr.bf16.gmra.mxu0 %v502
      %v681 = vpop.f32.mrf.mxu0
      %v682 = vadd.f32 %v302, %v681
      %v683 = vpop.f32.mrf.mxu0
      %v684 = vpop.f32.mrf.mxu0
      %v685 = vadd.f32 %v302, %v684
      %v686 = vpop.f32.mrf.mxu0
      %687 = vmatprep.mubr.bf16.mxu0 0
      %688 = vmatmul.mubr.bf16.gmra.mxu0 %v505
      %v689 = vpop.f32.mrf.mxu0
      %v690 = vadd.f32 %v302, %v689
      %v691 = vpop.f32.mrf.mxu0
      %v692 = vpop.f32.mrf.mxu0
      %v693 = vadd.f32 %v302, %v692
      %v694 = vpop.f32.mrf.mxu0
      %695 = vmatprep.mubr.bf16.mxu0 0
      %696 = vmatmul.mubr.bf16.gmra.mxu0 %v508
      %v697 = vpop.f32.mrf.mxu0
      %v698 = vadd.f32 %v302, %v697
      %v699 = vpop.f32.mrf.mxu0
      %v700 = vpop.f32.mrf.mxu0
      %v701 = vadd.f32 %v302, %v700
      %v702 = vpop.f32.mrf.mxu0
      %703 = vmatprep.mubr.bf16.mxu0 0
      %704 = vmatmul.mubr.bf16.gmra.mxu0 %v511
      %v705 = vpop.f32.mrf.mxu0
      %v706 = vadd.f32 %v302, %v705
      %v707 = vpop.f32.mrf.mxu0
      %v708 = vpop.f32.mrf.mxu0
      %v709 = vadd.f32 %v302, %v708
      %v710 = vpop.f32.mrf.mxu0
      %711 = vmatprep.mubr.bf16.mxu0 0
      %712 = vmatmul.mubr.bf16.gmra.mxu0 %v514
      %v713 = vpop.f32.mrf.mxu0
      %v714 = vadd.f32 %v302, %v713
      %v715 = vpop.f32.mrf.mxu0
      %v716 = vpop.f32.mrf.mxu0
      %v717 = vadd.f32 %v302, %v716
      %v718 = vpop.f32.mrf.mxu0
      %719 = vmatprep.mubr.bf16.mxu0 0
      %720 = vmatmul.mubr.bf16.gmra.mxu0 %v517
      %v721 = vpop.f32.mrf.mxu0
      %v722 = vadd.f32 %v302, %v721
      %v723 = vpop.f32.mrf.mxu0
      %v724 = vpop.f32.mrf.mxu0
      %v725 = vadd.f32 %v302, %v724
      %v726 = vpop.f32.mrf.mxu0
      %727 = vmatprep.mubr.bf16.mxu0 0
      %728 = vmatmul.mubr.bf16.gmra.mxu0 %v520
      %v729 = vpop.f32.mrf.mxu0
      %v730 = vadd.f32 %v302, %v729
      %v731 = vpop.f32.mrf.mxu0
      %v732 = vpop.f32.mrf.mxu0
      %v733 = vadd.f32 %v302, %v732
      %v734 = vpop.f32.mrf.mxu0
      %735 = vmatprep.mubr.bf16.mxu0 0
      %736 = vmatmul.mubr.bf16.gmra.mxu0 %v523
      %v737 = vpop.f32.mrf.mxu0
      %v738 = vadd.f32 %v302, %v737
      %v739 = vpop.f32.mrf.mxu0
      %v740 = vpop.f32.mrf.mxu0
      %v741 = vadd.f32 %v302, %v740
      %v742 = vpop.f32.mrf.mxu0
      %743 = vmatprep.mubr.bf16.mxu0 0
      %744 = vmatmul.mubr.bf16.gmra.mxu0 %v526
      %v745 = vpop.f32.mrf.mxu0
      %v746 = vadd.f32 %v302, %v745
      %v747 = vpop.f32.mrf.mxu0
      %v748 = vpop.f32.mrf.mxu0
      %v749 = vadd.f32 %v302, %v748
      %v750 = vpop.f32.mrf.mxu0
      %751 = vmatprep.mubr.bf16.mxu0 0
      %752 = vmatmul.mubr.bf16.gmra.mxu0 %v529
      %v753 = vpop.f32.mrf.mxu0
      %v754 = vadd.f32 %v302, %v753
      %v755 = vpop.f32.mrf.mxu0
      %v756 = vpop.f32.mrf.mxu0
      %v757 = vadd.f32 %v302, %v756
      %v758 = vpop.f32.mrf.mxu0
      %759 = vmatprep.mubr.bf16.mxu0 0
      %760 = vmatmul.mubr.bf16.gmra.mxu0 %v532
      %v761 = vpop.f32.mrf.mxu0
      %v762 = vadd.f32 %v302, %v761
      %v763 = vpop.f32.mrf.mxu0
      %v764 = vpop.f32.mrf.mxu0
      %v765 = vadd.f32 %v302, %v764
      %v766 = vpop.f32.mrf.mxu0
      %767 = vmatprep.mubr.bf16.mxu0 0
      %768 = vmatmul.mubr.bf16.gmra.mxu0 %v535
      %v769 = vpop.f32.mrf.mxu0
      %v770 = vadd.f32 %v302, %v769
      %v771 = vpop.f32.mrf.mxu0
      %v772 = vpop.f32.mrf.mxu0
      %v773 = vadd.f32 %v302, %v772
      %v774 = vpop.f32.mrf.mxu0
      %775 = vmatprep.mubr.bf16.mxu0 0
      %776 = vmatmul.mubr.bf16.gmra.mxu0 %v538
      %v777 = vpop.f32.mrf.mxu0
      %v778 = vadd.f32 %v302, %v777
      %v779 = vpop.f32.mrf.mxu0
      %v780 = vpop.f32.mrf.mxu0
      %v781 = vadd.f32 %v302, %v780
      %v782 = vpop.f32.mrf.mxu0
      %783 = vmatprep.mubr.bf16.mxu0 0
      %784 = vmatmul.mubr.bf16.gmra.mxu0 %v541
      %v785 = vpop.f32.mrf.mxu0
      %v786 = vadd.f32 %v302, %v785
      %v787 = vpop.f32.mrf.mxu0
      %v788 = vpop.f32.mrf.mxu0
      %v789 = vadd.f32 %v302, %v788
      %v790 = vpop.f32.mrf.mxu0
      %791 = vmatprep.mubr.bf16.mxu0 0
      %792 = vmatmul.mubr.bf16.gmra.mxu0 %v544
      %v793 = vpop.f32.mrf.mxu0
      %v794 = vadd.f32 %v302, %v793
      %v795 = vpop.f32.mrf.mxu0
      %v796 = vpop.f32.mrf.mxu0
      %v797 = vadd.f32 %v302, %v796
      %v798 = vpop.f32.mrf.mxu0
      %799 = vmatprep.mubr.bf16.mxu0 0
      %800 = vmatmul.mubr.bf16.gmra.mxu0 %v547
      %v801 = vpop.f32.mrf.mxu0
      %v802 = vadd.f32 %v302, %v801
      %v803 = vpop.f32.mrf.mxu0
      %v804 = vpop.f32.mrf.mxu0
      %v805 = vadd.f32 %v302, %v804
      %v806 = vpop.f32.mrf.mxu0
      %807 = vmatprep.mubr.bf16.mxu0 0
      %808 = vmatmul.mubr.bf16.gmra.mxu0 %v550
      %v809 = vpop.f32.mrf.mxu0
      %v810 = vadd.f32 %v302, %v809
      %v811 = vpop.f32.mrf.mxu0
      %v812 = vpop.f32.mrf.mxu0
      %v813 = vadd.f32 %v302, %v812
      %v814 = vpop.f32.mrf.mxu0
      %815 = vmatprep.mubr.bf16.mxu0 0
      %816 = vmatmul.mubr.bf16.gmra.mxu0 %v553
      %v817 = vpop.f32.mrf.mxu0
      %v818 = vadd.f32 %v302, %v817
      %v819 = vpop.f32.mrf.mxu0
      %v820 = vpop.f32.mrf.mxu0
      %v821 = vadd.f32 %v302, %v820
      %v822 = vpop.f32.mrf.mxu0
      %823 = vmatprep.mubr.bf16.mxu0 0
      %824 = vmatmul.mubr.bf16.gmra.mxu0 %v556
      %v825 = vpop.f32.mrf.mxu0
      %v826 = vadd.f32 %v302, %v825
      %v827 = vpop.f32.mrf.mxu0
      %v828 = vpop.f32.mrf.mxu0
      %v829 = vadd.f32 %v302, %v828
      %v830 = vpop.f32.mrf.mxu0
      %831 = vmatprep.mubr.bf16.mxu0 0
      %832 = vmatmul.mubr.bf16.gmra.mxu0 %v559
      %v833 = vpop.f32.mrf.mxu0
      %v834 = vadd.f32 %v302, %v833
      %v835 = vpop.f32.mrf.mxu0
      %v836 = vpop.f32.mrf.mxu0
      %v837 = vadd.f32 %v302, %v836
      %v838 = vpop.f32.mrf.mxu0
      %839 = vmatprep.mubr.bf16.mxu0 0
      %840 = vmatmul.mubr.bf16.gmra.mxu0 %v562
      %v841 = vpop.f32.mrf.mxu0
      %v842 = vadd.f32 %v302, %v841
      %v843 = vpop.f32.mrf.mxu0
      %v844 = vpop.f32.mrf.mxu0
      %v845 = vadd.f32 %v302, %v844
      %v846 = vpop.f32.mrf.mxu0
      %847 = vmatprep.mubr.bf16.mxu0 0
      %848 = vmatmul.mubr.bf16.gmra.mxu0 %v565
      %v849 = vpop.f32.mrf.mxu0
      %v850 = vadd.f32 %v302, %v849
      %v851 = vpop.f32.mrf.mxu0
      %v852 = vpop.f32.mrf.mxu0
      %v853 = vadd.f32 %v302, %v852
      %v854 = vpop.f32.mrf.mxu0
      %855 = vdwg.mxu0
      %v856 = vtanh.pop %v602
      %v857 = vtanh.pop %v605
      %v858 = vtanh.pop %v610
      %v859 = vtanh.pop %v613
      %v860 = vtanh.pop %v618
      %v861 = vtanh.pop %v621
      %v862 = vtanh.pop %v626
      %v863 = vtanh.pop %v629
      %v864 = vtanh.pop %v634
      %v865 = vtanh.pop %v637
      %v866 = vtanh.pop %v642
      %v867 = vtanh.pop %v645
      %v868 = vtanh.pop %v650
      %v869 = vtanh.pop %v653
      %v870 = vtanh.pop %v658
      %v871 = vtanh.pop %v661
      %v872 = vtanh.pop %v666
      %v873 = vtanh.pop %v669
      %v874 = vtanh.pop %v674
      %v875 = vtanh.pop %v677
      %v876 = vtanh.pop %v682
      %v877 = vtanh.pop %v685
      %v878 = vtanh.pop %v690
      %v879 = vtanh.pop %v693
      %v880 = vtanh.pop %v698
      %v881 = vtanh.pop %v701
      %v882 = vtanh.pop %v706
      %v883 = vtanh.pop %v709
      %v884 = vtanh.pop %v714
      %v885 = vtanh.pop %v717
      %v886 = vtanh.pop %v722
      %v887 = vtanh.pop %v725
      %v888 = vtanh.pop %v730
      %v889 = vtanh.pop %v733
      %v890 = vtanh.pop %v738
      %v891 = vtanh.pop %v741
      %v892 = vtanh.pop %v746
      %v893 = vtanh.pop %v749
      %v894 = vtanh.pop %v754
      %v895 = vtanh.pop %v757
      %v896 = vtanh.pop %v762
      %v897 = vtanh.pop %v765
      %v898 = vtanh.pop %v770
      %v899 = vtanh.pop %v773
      %v900 = vtanh.pop %v778
      %v901 = vtanh.pop %v781
      %v902 = vtanh.pop %v786
      %v903 = vtanh.pop %v789
      %v904 = vtanh.pop %v794
      %v905 = vtanh.pop %v797
      %v906 = vtanh.pop %v802
      %v907 = vtanh.pop %v805
      %v908 = vtanh.pop %v810
      %v909 = vtanh.pop %v813
      %v910 = vtanh.pop %v818
      %v911 = vtanh.pop %v821
      %v912 = vtanh.pop %v826
      %v913 = vtanh.pop %v829
      %v914 = vtanh.pop %v834
      %v915 = vtanh.pop %v837
      %v916 = vtanh.pop %v842
      %v917 = vtanh.pop %v845
      %v918 = vtanh.pop %v850
      %v919 = vtanh.pop %v853
      %920 = vst [vmem:[%s228] sm:$0xff] %v856
      %921 = vst [vmem:[%s228 + $0x8] sm:$0xff] %v857
      %922 = vst [vmem:[%s228 + $0x10] sm:$0xff] %v858
      %923 = vst [vmem:[%s228 + $0x18] sm:$0xff] %v859
      %924 = vst [vmem:[%s228 + $0x20] sm:$0xff] %v860
      %925 = vst [vmem:[%s228 + $0x28] sm:$0xff] %v861
      %926 = vst [vmem:[%s228 + $0x30] sm:$0xff] %v862
      %927 = vst [vmem:[%s228 + $0x38] sm:$0xff] %v863
      %928 = vst [vmem:[%s228 + $0x40] sm:$0xff] %v864
      %929 = vst [vmem:[%s228 + $0x48] sm:$0xff] %v865
      %930 = vst [vmem:[%s228 + $0x50] sm:$0xff] %v866
      %931 = vst [vmem:[%s228 + $0x58] sm:$0xff] %v867
      %932 = vst [vmem:[%s228 + $0x60] sm:$0xff] %v868
      %933 = vst [vmem:[%s228 + $0x68] sm:$0xff] %v869
      %934 = vst [vmem:[%s228 + $0x70] sm:$0xff] %v870
      %935 = vst [vmem:[%s228 + $0x78] sm:$0xff] %v871
      %936 = vst [vmem:[%s228 + $0x80] sm:$0xff] %v872
      %937 = vst [vmem:[%s228 + $0x88] sm:$0xff] %v873
      %938 = vst [vmem:[%s228 + $0x90] sm:$0xff] %v874
      %939 = vst [vmem:[%s228 + $0x98] sm:$0xff] %v875
      %940 = vst [vmem:[%s228 + $0xa0] sm:$0xff] %v876
      %941 = vst [vmem:[%s228 + $0xa8] sm:$0xff] %v877
      %942 = vst [vmem:[%s228 + $0xb0] sm:$0xff] %v878
      %943 = vst [vmem:[%s228 + $0xb8] sm:$0xff] %v879
      %944 = vst [vmem:[%s228 + $0xc0] sm:$0xff] %v880
      %945 = vst [vmem:[%s228 + $0xc8] sm:$0xff] %v881
      %946 = vst [vmem:[%s228 + $0xd0] sm:$0xff] %v882
      %947 = vst [vmem:[%s228 + $0xd8] sm:$0xff] %v883
      %948 = vst [vmem:[%s228 + $0xe0] sm:$0xff] %v884
      %949 = vst [vmem:[%s228 + $0xe8] sm:$0xff] %v885
      %950 = vst [vmem:[%s228 + $0xf0] sm:$0xff] %v886
      %951 = vst [vmem:[%s228 + $0xf8] sm:$0xff] %v887
      %952 = vst [vmem:[%s228 + $0x100] sm:$0xff] %v888
      %953 = vst [vmem:[%s228 + $0x108] sm:$0xff] %v889
      %954 = vst [vmem:[%s228 + $0x110] sm:$0xff] %v890
      %955 = vst [vmem:[%s228 + $0x118] sm:$0xff] %v891
      %956 = vst [vmem:[%s228 + $0x120] sm:$0xff] %v892
      %957 = vst [vmem:[%s228 + $0x128] sm:$0xff] %v893
      %958 = vst [vmem:[%s228 + $0x130] sm:$0xff] %v894
      %959 = vst [vmem:[%s228 + $0x138] sm:$0xff] %v895
      %960 = vst [vmem:[%s228 + $0x140] sm:$0xff] %v896
      %961 = vst [vmem:[%s228 + $0x148] sm:$0xff] %v897
      %962 = vst [vmem:[%s228 + $0x150] sm:$0xff] %v898
      %963 = vst [vmem:[%s228 + $0x158] sm:$0xff] %v899
      %964 = vst [vmem:[%s228 + $0x160] sm:$0xff] %v900
      %965 = vst [vmem:[%s228 + $0x168] sm:$0xff] %v901
      %966 = vst [vmem:[%s228 + $0x170] sm:$0xff] %v902
      %967 = vst [vmem:[%s228 + $0x178] sm:$0xff] %v903
      %968 = vst [vmem:[%s228 + $0x180] sm:$0xff] %v904
      %969 = vst [vmem:[%s228 + $0x188] sm:$0xff] %v905
      %970 = vst [vmem:[%s228 + $0x190] sm:$0xff] %v906
      %971 = vst [vmem:[%s228 + $0x198] sm:$0xff] %v907
      %972 = vst [vmem:[%s228 + $0x1a0] sm:$0xff] %v908
      %973 = vst [vmem:[%s228 + $0x1a8] sm:$0xff] %v909
      %974 = vst [vmem:[%s228 + $0x1b0] sm:$0xff] %v910
      %975 = vst [vmem:[%s228 + $0x1b8] sm:$0xff] %v911
      %976 = vst [vmem:[%s228 + $0x1c0] sm:$0xff] %v912
      %977 = vst [vmem:[%s228 + $0x1c8] sm:$0xff] %v913
      %978 = vst [vmem:[%s228 + $0x1d0] sm:$0xff] %v914
      %979 = vst [vmem:[%s228 + $0x1d8] sm:$0xff] %v915
      %980 = vst [vmem:[%s228 + $0x1e0] sm:$0xff] %v916
      %981 = vst [vmem:[%s228 + $0x1e8] sm:$0xff] %v917
      %982 = vst [vmem:[%s228 + $0x1f0] sm:$0xff] %v918
      %983 = vst [vmem:[%s228 + $0x1f8] sm:$0xff] %v919
      %s984 = smul.u32 64, %s19
      %p985 = scmp.lt.s32.totalorder %s18, 3
      %s986 = scalar_select %p985, %s18, 3
      %p987 = scmp.lt.s32.totalorder %s984, 63
      %s988 = scalar_select %p987, %s984, 63
      %s989 = smul.addr %s986, 64
      %s990 = sadd.s32 %s988, %s989
      %s991 = smul.addr %s990, 8
      %s992 = scalar_lea.vmem %s3, %s991
      // Predicated region
      $region33: #{generator_forward.15} parent=31 // pred_check
        %p993 = pneg %p121
      $region34: #{generator_forward.15} parent=31 // pred_check_branch
        %995 = sbr.rel (%p993) target = $region36
      $region35: #{generator_forward.15} parent=31 // pred_region
        %s996 = smul.u32 64, %s19
      $region36: #{generator_forward.15} parent=31 // pred_fallthru
        _
    $region32: #{generator_forward.15} parent=5 // pred_fallthru
      _
    %p997 = scmp.le.s32.totalorder 2, %s9
    // Predicated region
    $region37: #{generator_forward.15} parent=5 // pred_check
      %p998 = pneg %p997
    $region38: #{generator_forward.15} parent=5 // pred_check_branch
      %1000 = sbr.rel (%p998) target = $region40
    $region39: #{generator_forward.15} parent=5 // pred_region
      %s1001 = ssub.s32 %s9, 2
      // Predicated region
      $region41: #{generator_forward.15} parent=39 // pred_check
        %p1002 = pneg %p127
      $region42: #{generator_forward.15} parent=39 // pred_check_branch
        %1004 = sbr.rel (%p1002) target = $region44
      $region43: #{generator_forward.15} parent=39 // pred_region
        %s1005 = smul.u32 64, %s21
        %p1006 = scmp.lt.s32.totalorder %s20, 3
        %s1007 = scalar_select %p1006, %s20, 3
        %p1008 = scmp.lt.s32.totalorder %s1005, 63
        %s1009 = scalar_select %p1008, %s1005, 63
        %s1010 = smul.addr %s1007, 64
        %s1011 = sadd.s32 %s1009, %s1010
        %s1012 = smul.addr %s1011, 8
        %s1013 = scalar_lea.vmem %s3, %s1012
      $region44: #{generator_forward.15} parent=39 // pred_fallthru
        _
    $region40: #{generator_forward.15} parent=5 // pred_fallthru
      _
  $region6: #{generator_forward.15} parent=0 // loop_footer
    %s13 = sadd.s32 1, %s9
  $region7: #{generator_forward.15} parent=0 // loop_footer_branch
    %8 = sbr.rel target = $region3
  $region8: #{generator_forward.15} parent=0 // loop_exit
    _

</llo_original>
